<compile_context>
chip_gen: v6e
topology: v6e:2x2x1
jax: 0.10.0
libtpu: 0.0.40
codegen_flags: <defaults>
</compile_context>

<pallas_src>
import jax
import jax.numpy as jnp
from jax import lax
from jax.experimental import pallas as pl
from jax.experimental.pallas import tpu as pltpu

# ---- hyperparameters mirroring the argparse `opt.*` (picked small) ----
N_CLASSES = 4
LATENT_DIM = 8
IMG_SHAPE = (2,)              # img_shape = (2,)
IMG_DIM = 2                   # int(np.prod(img_shape))
BN_EPS = 0.8                  # nn.BatchNorm1d(out_feat, 0.8) -> eps = 0.8
LEAKY_SLOPE = 0.2
HIDDEN = (128, 256, 512, 1024)


def _leaky_relu(x):
    return jnp.where(x > 0, x, LEAKY_SLOPE * x)


def _bn_leaky(h, gamma, beta):
    # PyTorch BatchNorm1d in training mode (biased batch stats), fused to one FMA:
    #   scale = gamma * rsqrt(var + eps);  shift = beta - mean * scale
    mean = jnp.mean(h, axis=0, keepdims=True)
    var = jnp.mean((h - mean) ** 2, axis=0, keepdims=True)
    scale = gamma * lax.rsqrt(var + BN_EPS)
    shift = beta - mean * scale
    return _leaky_relu(h * scale + shift)


def generator_kernel(labels_ref, z_ref, emb_ref, w1e_ref, w1z_ref, b1_ref,
                     w2_ref, gb2_ref,
                     w3_ref, gb3_ref,
                     w4_ref, gb4_ref,
                     w5_ref, b5_ref,
                     o_ref):
    f32 = jnp.float32
    bf16 = jnp.bfloat16
    B = labels_ref.shape[0]

    # Embedding lookup folded in: one_hot(labels) @ emb is an exact row select; the
    # concat([enc, z]) @ W1 becomes two partial matmuls (enc @ W1_emb + z @ W1_z).
    one_hot = (labels_ref[...] ==
               lax.broadcasted_iota(jnp.int32, (B, N_CLASSES), 1)).astype(f32)
    enc = jnp.dot(one_hot, emb_ref[...], preferred_element_type=f32)

    # block 1: Linear(n_classes + latent_dim, 128) -> LeakyReLU   (normalize=False)
    h = (jnp.dot(enc.astype(bf16), w1e_ref[...], preferred_element_type=f32)
         + jnp.dot(z_ref[...].astype(bf16), w1z_ref[...], preferred_element_type=f32)
         + b1_ref[...])
    h = _leaky_relu(h)

    # blocks 2-4: Linear (bias dropped; cancelled by BN mean) -> BatchNorm1d -> LeakyReLU
    h = jnp.dot(h.astype(bf16), w2_ref[...], preferred_element_type=f32)
    h = _bn_leaky(h, gb2_ref[0:1, :], gb2_ref[1:2, :])
    h = jnp.dot(h.astype(bf16), w3_ref[...], preferred_element_type=f32)
    h = _bn_leaky(h, gb3_ref[0:1, :], gb3_ref[1:2, :])
    h = jnp.dot(h.astype(bf16), w4_ref[...], preferred_element_type=f32)
    h = _bn_leaky(h, gb4_ref[0:1, :], gb4_ref[1:2, :])

    # head: Linear(1024, img_dim) -> Tanh
    out = jnp.dot(h.astype(bf16), w5_ref[...], preferred_element_type=f32) + b5_ref[...]
    o_ref[...] = jnp.tanh(out)


def init_params(key):
    dims = [N_CLASSES + LATENT_DIM] + list(HIDDEN) + [IMG_DIM]
    keys = jax.random.split(key, 6)
    params = {"emb": jax.random.normal(keys[0], (N_CLASSES, N_CLASSES), jnp.float32)}

    def linear_w(k, fan_in, fan_out):
        w = jax.random.normal(k, (fan_in, fan_out), jnp.float32)
        return w / jnp.sqrt(jnp.float32(fan_in))

    # Linear #1 split into the embedding-facing and z-facing halves (same math as one
    # Linear applied to cat([emb(labels), z], -1)).
    w1 = linear_w(keys[1], dims[0], dims[1])
    params["w1e"] = w1[:N_CLASSES].astype(jnp.bfloat16)
    params["w1z"] = w1[N_CLASSES:].astype(jnp.bfloat16)
    params["b1"] = jnp.zeros((1, dims[1]), jnp.float32)

    for i in (2, 3, 4):
        params[f"w{i}"] = linear_w(keys[i], dims[i - 1], dims[i]).astype(jnp.bfloat16)
        # BN gamma (row 0) / beta (row 1) packed into one array.  Linear biases
        # b2/b3/b4 intentionally dropped: exactly cancelled by training-mode BN.
        params[f"gb{i}"] = jnp.zeros((2, dims[i]), jnp.float32).at[0].set(1.0)

    params["w5"] = linear_w(keys[5], dims[4], dims[5]).astype(jnp.bfloat16)
    params["b5"] = jnp.zeros((1, dims[5]), jnp.float32)
    return params


@jax.jit
def generator_forward(z, labels, params):
    # TODO(synk): the `p_dest is not None` branch (0.5*emb[labels] + 0.5*emb[labels[p_dest]])
    # is not implemented; this reproduces the default p_dest=None path.
    B = z.shape[0]
    L = labels.shape[0]
    assert B % L == 0, "z batch must be an exact multiple of labels length"
    labels = jnp.repeat(labels, B // L).astype(jnp.int32).reshape(B, 1)  # repeat_interleave

    args = (labels, z, params["emb"], params["w1e"], params["w1z"], params["b1"],
            params["w2"], params["gb2"],
            params["w3"], params["gb3"],
            params["w4"], params["gb4"],
            params["w5"], params["b5"])

    vmem = pl.BlockSpec(memory_space=pltpu.MemorySpace.VMEM)
    flops = 2 * B * (N_CLASSES * N_CLASSES + N_CLASSES * 128 + LATENT_DIM * 128
                     + 128 * 256 + 256 * 512 + 512 * 1024 + 1024 * IMG_DIM)
    bytes_accessed = sum(int(a.size) * a.dtype.itemsize for a in args) + B * IMG_DIM * 4
    transcendentals = B * IMG_DIM + sum(HIDDEN[1:])  # tanh + BN rsqrt per feature

    out = pl.pallas_call(
        generator_kernel,
        out_shape=jax.ShapeDtypeStruct((B, IMG_DIM), jnp.float32),
        in_specs=[vmem] * len(args),
        out_specs=vmem,
        compiler_params=pltpu.CompilerParams(vmem_limit_bytes=32 * 1024 * 1024),
        cost_estimate=pl.CostEstimate(flops=flops,
                                      transcendentals=transcendentals,
                                      bytes_accessed=bytes_accessed),
    )(*args)
    return out.reshape(B, *IMG_SHAPE)                        # img.view(B, *img_shape)


if __name__ == "__main__":
    key = jax.random.PRNGKey(0)
    pkey, zkey, lkey = jax.random.split(key, 3)
    params = init_params(pkey)

    B = 8
    z = jax.random.normal(zkey, (B, LATENT_DIM), jnp.float32)
    labels = jax.random.randint(lkey, (4,), 0, N_CLASSES)    # repeated to B inside forward

    img = generator_forward(z, labels, params)
    jax.block_until_ready(img)
    assert img.shape == (B,) + IMG_SHAPE and img.dtype == jnp.float32
    print("KERNEL_OK")
</pallas_src>

<mosaic_0001>
module attributes {stable_mosaic.version = 11 : i64} {
  func.func @generator_kernel(%arg0: memref<8x1xi32, #tpu.memory_space<vmem>>, %arg1: memref<8x8xf32, #tpu.memory_space<vmem>>, %arg2: memref<4x4xf32, #tpu.memory_space<vmem>>, %arg3: memref<4x128xbf16, #tpu.memory_space<vmem>>, %arg4: memref<8x128xbf16, #tpu.memory_space<vmem>>, %arg5: memref<1x128xf32, #tpu.memory_space<vmem>>, %arg6: memref<128x256xbf16, #tpu.memory_space<vmem>>, %arg7: memref<2x256xf32, #tpu.memory_space<vmem>>, %arg8: memref<256x512xbf16, #tpu.memory_space<vmem>>, %arg9: memref<2x512xf32, #tpu.memory_space<vmem>>, %arg10: memref<512x1024xbf16, #tpu.memory_space<vmem>>, %arg11: memref<2x1024xf32, #tpu.memory_space<vmem>>, %arg12: memref<1024x2xbf16, #tpu.memory_space<vmem>>, %arg13: memref<1x2xf32, #tpu.memory_space<vmem>>, %arg14: memref<8x2xf32, #tpu.memory_space<vmem>>) attributes {dimension_semantics = [], scalar_prefetch = 0 : i64, scratch_operands = 0 : i64, tpu.core_type = #tpu.core_type<tc>} {
    %c0 = arith.constant 0 : index
    %c0_0 = arith.constant 0 : index
    %0 = vector.load %arg0[%c0, %c0_0] : memref<8x1xi32, #tpu.memory_space<vmem>>, vector<8x1xi32>
    %1 = tpu.iota {dimensions = array<i32: 1>} : vector<8x4xi32>
    %2 = vector.broadcast %0 : vector<8x1xi32> to vector<8x4xi32>
    %3 = arith.cmpi eq, %2, %1 : vector<8x4xi32>
    %4 = arith.extui %3 : vector<8x4xi1> to vector<8x4xi32>
    %5 = arith.sitofp %4 : vector<8x4xi32> to vector<8x4xf32>
    %c0_1 = arith.constant 0 : index
    %c0_2 = arith.constant 0 : index
    %6 = vector.load %arg2[%c0_1, %c0_2] : memref<4x4xf32, #tpu.memory_space<vmem>>, vector<4x4xf32>
    %cst = arith.constant dense<0.000000e+00> : vector<8x4xf32>
    %7 = tpu.matmul %5, %6, %cst {dimension_numbers = #tpu.dot_dimension_numbers<[1], [0], [0], [1], [0, 0, 1, 1], [], []>} : vector<8x4xf32>, vector<4x4xf32>, vector<8x4xf32> -> vector<8x4xf32>
    %8 = arith.truncf %7 : vector<8x4xf32> to vector<8x4xbf16>
    %c0_3 = arith.constant 0 : index
    %c0_4 = arith.constant 0 : index
    %9 = vector.load %arg3[%c0_3, %c0_4] : memref<4x128xbf16, #tpu.memory_space<vmem>>, vector<4x128xbf16>
    %cst_5 = arith.constant dense<0.000000e+00> : vector<8x128xf32>
    %10 = tpu.matmul %8, %9, %cst_5 {dimension_numbers = #tpu.dot_dimension_numbers<[1], [0], [0], [1], [0, 0, 1, 1], [], []>} : vector<8x4xbf16>, vector<4x128xbf16>, vector<8x128xf32> -> vector<8x128xf32>
    %c0_6 = arith.constant 0 : index
    %c0_7 = arith.constant 0 : index
    %11 = vector.load %arg1[%c0_6, %c0_7] : memref<8x8xf32, #tpu.memory_space<vmem>>, vector<8x8xf32>
    %12 = arith.truncf %11 : vector<8x8xf32> to vector<8x8xbf16>
    %c0_8 = arith.constant 0 : index
    %c0_9 = arith.constant 0 : index
    %13 = vector.load %arg4[%c0_8, %c0_9] : memref<8x128xbf16, #tpu.memory_space<vmem>>, vector<8x128xbf16>
    %cst_10 = arith.constant dense<0.000000e+00> : vector<8x128xf32>
    %14 = tpu.matmul %12, %13, %cst_10 {dimension_numbers = #tpu.dot_dimension_numbers<[1], [0], [0], [1], [0, 0, 1, 1], [], []>} : vector<8x8xbf16>, vector<8x128xbf16>, vector<8x128xf32> -> vector<8x128xf32>
    %15 = arith.addf %10, %14 : vector<8x128xf32>
    %c0_11 = arith.constant 0 : index
    %c0_12 = arith.constant 0 : index
    %16 = vector.load %arg5[%c0_11, %c0_12] : memref<1x128xf32, #tpu.memory_space<vmem>>, vector<1x128xf32>
    %17 = vector.broadcast %16 : vector<1x128xf32> to vector<8x128xf32>
    %18 = arith.addf %15, %17 : vector<8x128xf32>
    %cst_13 = arith.constant 0.000000e+00 : f32
    %19 = vector.broadcast %cst_13 : f32 to vector<8x128xf32>
    %20 = arith.cmpf ogt, %18, %19 : vector<8x128xf32>
    %cst_14 = arith.constant 2.000000e-01 : f32
    %21 = vector.broadcast %cst_14 : f32 to vector<8x128xf32>
    %22 = arith.mulf %21, %18 : vector<8x128xf32>
    %23 = arith.select %20, %18, %22 : vector<8x128xi1>, vector<8x128xf32>
    %24 = arith.truncf %23 : vector<8x128xf32> to vector<8x128xbf16>
    %c0_15 = arith.constant 0 : index
    %c0_16 = arith.constant 0 : index
    %25 = vector.load %arg6[%c0_15, %c0_16] : memref<128x256xbf16, #tpu.memory_space<vmem>>, vector<128x256xbf16>
    %cst_17 = arith.constant dense<0.000000e+00> : vector<8x256xf32>
    %26 = tpu.matmul %24, %25, %cst_17 {dimension_numbers = #tpu.dot_dimension_numbers<[1], [0], [0], [1], [0, 0, 1, 1], [], []>} : vector<8x128xbf16>, vector<128x256xbf16>, vector<8x256xf32> -> vector<8x256xf32>
    %c0_18 = arith.constant 0 : index
    %c0_19 = arith.constant 0 : index
    %27 = vector.load %arg7[%c0_18, %c0_19] : memref<2x256xf32, #tpu.memory_space<vmem>>, vector<1x256xf32>
    %c1 = arith.constant 1 : index
    %c0_20 = arith.constant 0 : index
    %28 = vector.load %arg7[%c1, %c0_20] : memref<2x256xf32, #tpu.memory_space<vmem>>, vector<1x256xf32>
    %cst_21 = arith.constant dense<0.000000e+00> : vector<256xf32>
    %29 = vector.multi_reduction <add>, %26, %cst_21 [0] : vector<8x256xf32> to vector<256xf32>
    %30 = vector.shape_cast %29 : vector<256xf32> to vector<1x256xf32>
    %cst_22 = arith.constant 8.000000e+00 : f32
    %31 = vector.broadcast %cst_22 : f32 to vector<1x256xf32>
    %32 = arith.divf %30, %31 : vector<1x256xf32>
    %33 = vector.broadcast %32 : vector<1x256xf32> to vector<8x256xf32>
    %34 = arith.subf %26, %33 : vector<8x256xf32>
    %35 = arith.mulf %34, %34 : vector<8x256xf32>
    %cst_23 = arith.constant dense<0.000000e+00> : vector<256xf32>
    %36 = vector.multi_reduction <add>, %35, %cst_23 [0] : vector<8x256xf32> to vector<256xf32>
    %37 = vector.shape_cast %36 : vector<256xf32> to vector<1x256xf32>
    %cst_24 = arith.constant 8.000000e+00 : f32
    %38 = vector.broadcast %cst_24 : f32 to vector<1x256xf32>
    %39 = arith.divf %37, %38 : vector<1x256xf32>
    %cst_25 = arith.constant 8.000000e-01 : f32
    %40 = vector.broadcast %cst_25 : f32 to vector<1x256xf32>
    %41 = arith.addf %39, %40 : vector<1x256xf32>
    %42 = math.rsqrt %41 : vector<1x256xf32>
    %43 = arith.mulf %27, %42 : vector<1x256xf32>
    %44 = arith.mulf %32, %43 : vector<1x256xf32>
    %45 = arith.subf %28, %44 : vector<1x256xf32>
    %46 = vector.broadcast %43 : vector<1x256xf32> to vector<8x256xf32>
    %47 = arith.mulf %26, %46 : vector<8x256xf32>
    %48 = vector.broadcast %45 : vector<1x256xf32> to vector<8x256xf32>
    %49 = arith.addf %47, %48 : vector<8x256xf32>
    %cst_26 = arith.constant 0.000000e+00 : f32
    %50 = vector.broadcast %cst_26 : f32 to vector<8x256xf32>
    %51 = arith.cmpf ogt, %49, %50 : vector<8x256xf32>
    %cst_27 = arith.constant 2.000000e-01 : f32
    %52 = vector.broadcast %cst_27 : f32 to vector<8x256xf32>
    %53 = arith.mulf %52, %49 : vector<8x256xf32>
    %54 = arith.select %51, %49, %53 : vector<8x256xi1>, vector<8x256xf32>
    %55 = arith.truncf %54 : vector<8x256xf32> to vector<8x256xbf16>
    %c0_28 = arith.constant 0 : index
    %c0_29 = arith.constant 0 : index
    %56 = vector.load %arg8[%c0_28, %c0_29] : memref<256x512xbf16, #tpu.memory_space<vmem>>, vector<256x512xbf16>
    %cst_30 = arith.constant dense<0.000000e+00> : vector<8x512xf32>
    %57 = tpu.matmul %55, %56, %cst_30 {dimension_numbers = #tpu.dot_dimension_numbers<[1], [0], [0], [1], [0, 0, 1, 1], [], []>} : vector<8x256xbf16>, vector<256x512xbf16>, vector<8x512xf32> -> vector<8x512xf32>
    %c0_31 = arith.constant 0 : index
    %c0_32 = arith.constant 0 : index
    %58 = vector.load %arg9[%c0_31, %c0_32] : memref<2x512xf32, #tpu.memory_space<vmem>>, vector<1x512xf32>
    %c1_33 = arith.constant 1 : index
    %c0_34 = arith.constant 0 : index
    %59 = vector.load %arg9[%c1_33, %c0_34] : memref<2x512xf32, #tpu.memory_space<vmem>>, vector<1x512xf32>
    %cst_35 = arith.constant dense<0.000000e+00> : vector<512xf32>
    %60 = vector.multi_reduction <add>, %57, %cst_35 [0] : vector<8x512xf32> to vector<512xf32>
    %61 = vector.shape_cast %60 : vector<512xf32> to vector<1x512xf32>
    %cst_36 = arith.constant 8.000000e+00 : f32
    %62 = vector.broadcast %cst_36 : f32 to vector<1x512xf32>
    %63 = arith.divf %61, %62 : vector<1x512xf32>
    %64 = vector.broadcast %63 : vector<1x512xf32> to vector<8x512xf32>
    %65 = arith.subf %57, %64 : vector<8x512xf32>
    %66 = arith.mulf %65, %65 : vector<8x512xf32>
    %cst_37 = arith.constant dense<0.000000e+00> : vector<512xf32>
    %67 = vector.multi_reduction <add>, %66, %cst_37 [0] : vector<8x512xf32> to vector<512xf32>
    %68 = vector.shape_cast %67 : vector<512xf32> to vector<1x512xf32>
    %cst_38 = arith.constant 8.000000e+00 : f32
    %69 = vector.broadcast %cst_38 : f32 to vector<1x512xf32>
    %70 = arith.divf %68, %69 : vector<1x512xf32>
    %cst_39 = arith.constant 8.000000e-01 : f32
    %71 = vector.broadcast %cst_39 : f32 to vector<1x512xf32>
    %72 = arith.addf %70, %71 : vector<1x512xf32>
    %73 = math.rsqrt %72 : vector<1x512xf32>
    %74 = arith.mulf %58, %73 : vector<1x512xf32>
    %75 = arith.mulf %63, %74 : vector<1x512xf32>
    %76 = arith.subf %59, %75 : vector<1x512xf32>
    %77 = vector.broadcast %74 : vector<1x512xf32> to vector<8x512xf32>
    %78 = arith.mulf %57, %77 : vector<8x512xf32>
    %79 = vector.broadcast %76 : vector<1x512xf32> to vector<8x512xf32>
    %80 = arith.addf %78, %79 : vector<8x512xf32>
    %cst_40 = arith.constant 0.000000e+00 : f32
    %81 = vector.broadcast %cst_40 : f32 to vector<8x512xf32>
    %82 = arith.cmpf ogt, %80, %81 : vector<8x512xf32>
    %cst_41 = arith.constant 2.000000e-01 : f32
    %83 = vector.broadcast %cst_41 : f32 to vector<8x512xf32>
    %84 = arith.mulf %83, %80 : vector<8x512xf32>
    %85 = arith.select %82, %80, %84 : vector<8x512xi1>, vector<8x512xf32>
    %86 = arith.truncf %85 : vector<8x512xf32> to vector<8x512xbf16>
    %c0_42 = arith.constant 0 : index
    %c0_43 = arith.constant 0 : index
    %87 = vector.load %arg10[%c0_42, %c0_43] : memref<512x1024xbf16, #tpu.memory_space<vmem>>, vector<512x1024xbf16>
    %cst_44 = arith.constant dense<0.000000e+00> : vector<8x1024xf32>
    %88 = tpu.matmul %86, %87, %cst_44 {dimension_numbers = #tpu.dot_dimension_numbers<[1], [0], [0], [1], [0, 0, 1, 1], [], []>} : vector<8x512xbf16>, vector<512x1024xbf16>, vector<8x1024xf32> -> vector<8x1024xf32>
    %c0_45 = arith.constant 0 : index
    %c0_46 = arith.constant 0 : index
    %89 = vector.load %arg11[%c0_45, %c0_46] : memref<2x1024xf32, #tpu.memory_space<vmem>>, vector<1x1024xf32>
    %c1_47 = arith.constant 1 : index
    %c0_48 = arith.constant 0 : index
    %90 = vector.load %arg11[%c1_47, %c0_48] : memref<2x1024xf32, #tpu.memory_space<vmem>>, vector<1x1024xf32>
    %cst_49 = arith.constant dense<0.000000e+00> : vector<1024xf32>
    %91 = vector.multi_reduction <add>, %88, %cst_49 [0] : vector<8x1024xf32> to vector<1024xf32>
    %92 = vector.shape_cast %91 : vector<1024xf32> to vector<1x1024xf32>
    %cst_50 = arith.constant 8.000000e+00 : f32
    %93 = vector.broadcast %cst_50 : f32 to vector<1x1024xf32>
    %94 = arith.divf %92, %93 : vector<1x1024xf32>
    %95 = vector.broadcast %94 : vector<1x1024xf32> to vector<8x1024xf32>
    %96 = arith.subf %88, %95 : vector<8x1024xf32>
    %97 = arith.mulf %96, %96 : vector<8x1024xf32>
    %cst_51 = arith.constant dense<0.000000e+00> : vector<1024xf32>
    %98 = vector.multi_reduction <add>, %97, %cst_51 [0] : vector<8x1024xf32> to vector<1024xf32>
    %99 = vector.shape_cast %98 : vector<1024xf32> to vector<1x1024xf32>
    %cst_52 = arith.constant 8.000000e+00 : f32
    %100 = vector.broadcast %cst_52 : f32 to vector<1x1024xf32>
    %101 = arith.divf %99, %100 : vector<1x1024xf32>
    %cst_53 = arith.constant 8.000000e-01 : f32
    %102 = vector.broadcast %cst_53 : f32 to vector<1x1024xf32>
    %103 = arith.addf %101, %102 : vector<1x1024xf32>
    %104 = math.rsqrt %103 : vector<1x1024xf32>
    %105 = arith.mulf %89, %104 : vector<1x1024xf32>
    %106 = arith.mulf %94, %105 : vector<1x1024xf32>
    %107 = arith.subf %90, %106 : vector<1x1024xf32>
    %108 = vector.broadcast %105 : vector<1x1024xf32> to vector<8x1024xf32>
    %109 = arith.mulf %88, %108 : vector<8x1024xf32>
    %110 = vector.broadcast %107 : vector<1x1024xf32> to vector<8x1024xf32>
    %111 = arith.addf %109, %110 : vector<8x1024xf32>
    %cst_54 = arith.constant 0.000000e+00 : f32
    %112 = vector.broadcast %cst_54 : f32 to vector<8x1024xf32>
    %113 = arith.cmpf ogt, %111, %112 : vector<8x1024xf32>
    %cst_55 = arith.constant 2.000000e-01 : f32
    %114 = vector.broadcast %cst_55 : f32 to vector<8x1024xf32>
    %115 = arith.mulf %114, %111 : vector<8x1024xf32>
    %116 = arith.select %113, %111, %115 : vector<8x1024xi1>, vector<8x1024xf32>
    %117 = arith.truncf %116 : vector<8x1024xf32> to vector<8x1024xbf16>
    %c0_56 = arith.constant 0 : index
    %c0_57 = arith.constant 0 : index
    %118 = vector.load %arg12[%c0_56, %c0_57] : memref<1024x2xbf16, #tpu.memory_space<vmem>>, vector<1024x2xbf16>
    %cst_58 = arith.constant dense<0.000000e+00> : vector<8x2xf32>
    %119 = tpu.matmul %117, %118, %cst_58 {dimension_numbers = #tpu.dot_dimension_numbers<[1], [0], [0], [1], [0, 0, 1, 1], [], []>} : vector<8x1024xbf16>, vector<1024x2xbf16>, vector<8x2xf32> -> vector<8x2xf32>
    %c0_59 = arith.constant 0 : index
    %c0_60 = arith.constant 0 : index
    %120 = vector.load %arg13[%c0_59, %c0_60] : memref<1x2xf32, #tpu.memory_space<vmem>>, vector<1x2xf32>
    %121 = vector.broadcast %120 : vector<1x2xf32> to vector<8x2xf32>
    %122 = arith.addf %119, %121 : vector<8x2xf32>
    %123 = math.tanh %122 : vector<8x2xf32>
    %c0_61 = arith.constant 0 : index
    %c0_62 = arith.constant 0 : index
    %124 = vector.load %arg14[%c0_61, %c0_62] : memref<8x2xf32, #tpu.memory_space<vmem>>, vector<8x2xf32>
    tpu.vector_store %arg14[%c0_61, %c0_62], %123 {strides = array<i32>} : memref<8x2xf32, #tpu.memory_space<vmem>>, vector<8x2xf32>,
    return
  }
}

</mosaic_0001>

<llo_original>
// kernel: generator_forward.1
$region0: #{generator_forward.1}
  #allocation0 [shape = 'u32[]', space=smem, size = 0x4, offset = 0x4, fixed_abs, tag = 'smem constant byte address 0x4 - core index']
  #allocation1 [shape = 'u32[144,128]{1,0:T(1,128)}', space=vmem, size = 0x12000, scoped, tag = 'internal scratch']
  %s0 = inlined_call_operand.vmem [shape: s32[8,1], index: 0, kind: input, shape index: {}]
  %s1 = inlined_call_operand.vmem [shape: f32[8,8], index: 1, kind: input, shape index: {}]
  %s2 = inlined_call_operand.vmem [shape: f32[4,4], index: 2, kind: input, shape index: {}]
  %s3 = inlined_call_operand.vmem [shape: bf16[4,128], index: 3, kind: input, shape index: {}]
  %s4 = inlined_call_operand.hbm [shape: bf16[8,128], index: 4, kind: input, shape index: {}]
  %s5 = inlined_call_operand.hbm [shape: f32[1,128], index: 5, kind: input, shape index: {}]
  %s6 = inlined_call_operand.hbm [shape: bf16[128,256], index: 6, kind: input, shape index: {}]
  %s7 = inlined_call_operand.hbm [shape: f32[2,256], index: 7, kind: input, shape index: {}]
  %s8 = inlined_call_operand.vmem [shape: bf16[256,512], index: 8, kind: input, shape index: {}]
  %s9 = inlined_call_operand.vmem [shape: f32[2,512], index: 9, kind: input, shape index: {}]
  %s10 = inlined_call_operand.hbm [shape: bf16[512,1024], index: 10, kind: input, shape index: {}]
  %s11 = inlined_call_operand.vmem [shape: f32[2,1024], index: 11, kind: input, shape index: {}]
  %s12 = inlined_call_operand.vmem [shape: bf16[1024,2], index: 12, kind: input, shape index: {}]
  %s13 = inlined_call_operand.hbm [shape: f32[1,2], index: 13, kind: input, shape index: {}]
  %s14 = inlined_call_operand.vmem [shape: f32[8,2], index: 14, kind: output, shape index: {}]
  %s15 = sld [smem:[#allocation0]]
  $region90: #{generator_forward.1} parent=0
    _
  %s17 = ssub.s32 1, %s15
  %s18 = scalar_select 0, %s17, %s15
  $region1: #{generator_forward.1} parent=0
    #allocation2 [shape = 'u8[2048]{0}', space=vmem, size = 0x800, scoped, tag = 'input window, operand 4, single buffered']
    #allocation3 [shape = 's32[1]{0}', space=sflag, size = 0x4, scoped, tag = 'scoped memory for generator_forward.1']
    #allocation4 [shape = 'u8[512]{0}', space=vmem, size = 0x400, scoped, tag = 'input window, operand 5, single buffered']
    #allocation5 [shape = 's32[1]{0}', space=sflag, size = 0x4, scoped, tag = 'scoped memory for generator_forward.1']
    #allocation6 [shape = 'u8[65536]{0}', space=vmem, size = 0x10000, scoped, tag = 'input window, operand 6, single buffered']
    #allocation7 [shape = 'u8[2048]{0}', space=vmem, size = 0x800, scoped, tag = 'input window, operand 7, single buffered']
    #allocation8 [shape = 's32[1]{0}', space=sflag, size = 0x4, scoped, tag = 'scoped memory for generator_forward.1']
    #allocation9 [shape = 'u8[1048576]{0}', space=vmem, size = 0x100000, scoped, tag = 'input window, operand 10, single buffered']
    #allocation10 [shape = 'u8[512]{0}', space=vmem, size = 0x400, scoped, tag = 'input window, operand 13, single buffered']
    #allocation11 [shape = 's32[1]{0}', space=sflag, size = 0x4, scoped, tag = 'scoped memory for generator_forward.1']
    %19 = vsyncpa [#allocation3], 0
    %20 = vsyncpa [#allocation5], 0
    %21 = vsyncpa [#allocation8], 0
    %22 = vsyncpa [#allocation11], 0
    // Predicated region
    $region2: #{generator_forward.1} parent=1 // pred_check
      _
    $region3: #{generator_forward.1} parent=1 // pred_check_branch
      %24 = sbr.rel (0) target = $region5
    $region4: #{generator_forward.1} parent=1 // pred_region
      _
    $region5: #{generator_forward.1} parent=1 // pred_fallthru
      _
    // Predicated region
    $region6: #{generator_forward.1} parent=1 // pred_check
      _
    $region7: #{generator_forward.1} parent=1 // pred_check_branch
      %26 = sbr.rel (0) target = $region9
    $region8: #{generator_forward.1} parent=1 // pred_region
      _
    $region9: #{generator_forward.1} parent=1 // pred_fallthru
      _
    // Predicated region
    $region10: #{generator_forward.1} parent=1 // pred_check
      _
    $region11: #{generator_forward.1} parent=1 // pred_check_branch
      %28 = sbr.rel (0) target = $region13
    $region12: #{generator_forward.1} parent=1 // pred_region
      _
    $region13: #{generator_forward.1} parent=1 // pred_fallthru
      _
    // Predicated region
    $region14: #{generator_forward.1} parent=1 // pred_check
      _
    $region15: #{generator_forward.1} parent=1 // pred_check_branch
      %30 = sbr.rel (0) target = $region17
    $region16: #{generator_forward.1} parent=1 // pred_region
      _
    $region17: #{generator_forward.1} parent=1 // pred_fallthru
      _
    // Predicated region
    $region18: #{generator_forward.1} parent=1 // pred_check
      _
    $region19: #{generator_forward.1} parent=1 // pred_check_branch
      %32 = sbr.rel (0) target = $region21
    $region20: #{generator_forward.1} parent=1 // pred_region
      %s34 = ssub.s32 64, 64
      %35 = vsyncadd [#allocation3], %s34
      %s37 = sshll.u32 [#allocation2], 4
      %s38 = int_to_ptr.vmem [resolvable:$true] %s37
      %40 = dma.hbm_to_vmem [thread:$0]  %s4, 64, %s38, [#allocation3]
    $region21: #{generator_forward.1} parent=1 // pred_fallthru
      _
    // Predicated region
    $region22: #{generator_forward.1} parent=1 // pred_check
      _
    $region23: #{generator_forward.1} parent=1 // pred_check_branch
      %42 = sbr.rel (0) target = $region25
    $region24: #{generator_forward.1} parent=1 // pred_region
      %s44 = ssub.s32 16, 16
      %45 = vsyncadd [#allocation5], %s44
      %s47 = sshll.u32 [#allocation4], 4
      %s48 = int_to_ptr.vmem [resolvable:$true] %s47
      %50 = dma.hbm_to_vmem [thread:$0]  %s5, 16, %s48, [#allocation5]
    $region25: #{generator_forward.1} parent=1 // pred_fallthru
      _
    // Predicated region
    $region26: #{generator_forward.1} parent=1 // pred_check
      _
    $region27: #{generator_forward.1} parent=1 // pred_check_branch
      %52 = sbr.rel (0) target = $region29
    $region28: #{generator_forward.1} parent=1 // pred_region
      %s54 = ssub.s32 2048, 2048
      %55 = vsyncadd [#allocation5], %s54
      %s56 = sshll.u32 [#allocation6], 4
      %s57 = int_to_ptr.vmem [resolvable:$true] %s56
      %62 = dma.hbm_to_vmem [thread:$0]  %s6, 2048, %s57, [#allocation5], 128, 128, 8
    $region29: #{generator_forward.1} parent=1 // pred_fallthru
      _
    // Predicated region
    $region30: #{generator_forward.1} parent=1 // pred_check
      _
    $region31: #{generator_forward.1} parent=1 // pred_check_branch
      %64 = sbr.rel (0) target = $region33
    $region32: #{generator_forward.1} parent=1 // pred_region
      %s66 = ssub.s32 64, 64
      %67 = vsyncadd [#allocation8], %s66
      %s69 = sshll.u32 [#allocation7], 4
      %s70 = int_to_ptr.vmem [resolvable:$true] %s69
      %72 = dma.hbm_to_vmem [thread:$0]  %s7, 64, %s70, [#allocation8]
    $region33: #{generator_forward.1} parent=1 // pred_fallthru
      _
    // Predicated region
    $region34: #{generator_forward.1} parent=1 // pred_check
      _
    $region35: #{generator_forward.1} parent=1 // pred_check_branch
      %74 = sbr.rel (0) target = $region37
    $region36: #{generator_forward.1} parent=1 // pred_region
      _
    $region37: #{generator_forward.1} parent=1 // pred_fallthru
      _
    // Predicated region
    $region38: #{generator_forward.1} parent=1 // pred_check
      _
    $region39: #{generator_forward.1} parent=1 // pred_check_branch
      %76 = sbr.rel (0) target = $region41
    $region40: #{generator_forward.1} parent=1 // pred_region
      _
    $region41: #{generator_forward.1} parent=1 // pred_fallthru
      _
    // Predicated region
    $region42: #{generator_forward.1} parent=1 // pred_check
      _
    $region43: #{generator_forward.1} parent=1 // pred_check_branch
      %78 = sbr.rel (0) target = $region45
    $region44: #{generator_forward.1} parent=1 // pred_region
      %s80 = ssub.s32 32768, 32768
      %81 = vsyncadd [#allocation8], %s80
      %s82 = sshll.u32 [#allocation9], 4
      %s83 = int_to_ptr.vmem [resolvable:$true] %s82
      %88 = dma.hbm_to_vmem [thread:$0]  %s10, 32768, %s83, [#allocation8], 512, 512, 32
    $region45: #{generator_forward.1} parent=1 // pred_fallthru
      _
    // Predicated region
    $region46: #{generator_forward.1} parent=1 // pred_check
      _
    $region47: #{generator_forward.1} parent=1 // pred_check_branch
      %90 = sbr.rel (0) target = $region49
    $region48: #{generator_forward.1} parent=1 // pred_region
      _
    $region49: #{generator_forward.1} parent=1 // pred_fallthru
      _
    // Predicated region
    $region50: #{generator_forward.1} parent=1 // pred_check
      _
    $region51: #{generator_forward.1} parent=1 // pred_check_branch
      %92 = sbr.rel (0) target = $region53
    $region52: #{generator_forward.1} parent=1 // pred_region
      _
    $region53: #{generator_forward.1} parent=1 // pred_fallthru
      _
    // Predicated region
    $region54: #{generator_forward.1} parent=1 // pred_check
      _
    $region55: #{generator_forward.1} parent=1 // pred_check_branch
      %94 = sbr.rel (0) target = $region57
    $region56: #{generator_forward.1} parent=1 // pred_region
      %s96 = ssub.s32 16, 16
      %97 = vsyncadd [#allocation11], %s96
      %s99 = sshll.u32 [#allocation10], 4
      %s100 = int_to_ptr.vmem [resolvable:$true] %s99
      %102 = dma.hbm_to_vmem [thread:$0]  %s13, 16, %s100, [#allocation11]
    $region57: #{generator_forward.1} parent=1 // pred_fallthru
      _
    // Predicated region
    $region58: #{generator_forward.1} parent=1 // pred_check
      _
    $region59: #{generator_forward.1} parent=1 // pred_check_branch
      %104 = sbr.rel (0) target = $region61
    $region60: #{generator_forward.1} parent=1 // pred_region
      %105 = dma.done [#allocation3], 64
    $region61: #{generator_forward.1} parent=1 // pred_fallthru
      _
    // Predicated region
    $region62: #{generator_forward.1} parent=1 // pred_check
      _
    $region63: #{generator_forward.1} parent=1 // pred_check_branch
      %107 = sbr.rel (0) target = $region65
    $region64: #{generator_forward.1} parent=1 // pred_region
      %108 = dma.done [#allocation5], 16
    $region65: #{generator_forward.1} parent=1 // pred_fallthru
      _
    // Predicated region
    $region66: #{generator_forward.1} parent=1 // pred_check
      _
    $region67: #{generator_forward.1} parent=1 // pred_check_branch
      %110 = sbr.rel (0) target = $region69
    $region68: #{generator_forward.1} parent=1 // pred_region
      %111 = dma.done [#allocation5], 2048
    $region69: #{generator_forward.1} parent=1 // pred_fallthru
      _
    // Predicated region
    $region70: #{generator_forward.1} parent=1 // pred_check
      _
    $region71: #{generator_forward.1} parent=1 // pred_check_branch
      %113 = sbr.rel (0) target = $region73
    $region72: #{generator_forward.1} parent=1 // pred_region
      %114 = dma.done [#allocation8], 64
    $region73: #{generator_forward.1} parent=1 // pred_fallthru
      _
    // Predicated region
    $region74: #{generator_forward.1} parent=1 // pred_check
      _
    $region75: #{generator_forward.1} parent=1 // pred_check_branch
      %116 = sbr.rel (0) target = $region77
    $region76: #{generator_forward.1} parent=1 // pred_region
      %117 = dma.done [#allocation8], 32768
    $region77: #{generator_forward.1} parent=1 // pred_fallthru
      _
    // Predicated region
    $region78: #{generator_forward.1} parent=1 // pred_check
      _
    $region79: #{generator_forward.1} parent=1 // pred_check_branch
      %119 = sbr.rel (0) target = $region81
    $region80: #{generator_forward.1} parent=1 // pred_region
      %120 = dma.done [#allocation11], 16
    $region81: #{generator_forward.1} parent=1 // pred_fallthru
      _
    %v122 = vld [vmem:[%s0] sm:$0xff]
    %v123 = vlaneseq
    %v124 = vand.u32 %v123, 127
    %125 = vset.pattern.permute.xlu0 0
    %126 = vperm.xlu0 %125, %v122
    %v127 = vpop.permute.xlu0 %126
    %vm128 = vcmp.eq.s32.totalorder %v127, %v124
    %v129 = vsel %vm128, 1, 0
    %v130 = vcvt.s32.f32 %v129
    %v131 = vld [vmem:[%s2] sm:$0xf]
    %vm132 = vcmask 31744
    %v134 = vsel %vm132, %v130, 0
    %vm136 = vcmask 1043456
    %v138 = vsel %vm136, %v131, 0
    %140 = vmatprep.subr.mxu0 0.0
    %141 = vmatpush1.msra.mxu0 0.0
    %142 = vmatprep.subr.mxu0 0.0
    %143 = vmatpush1.msra.mxu0 0.0
    %144 = vmatprep.subr.mxu0 0.0
    %145 = vmatpush1.msra.mxu0 0.0
    %146 = vmatprep.subr.mxu0 0.0
    %147 = vmatpush1.msra.mxu0 0.0
    %148 = vmatprep.subr.mxu0 0.0
    %149 = vmatpush1.msra.mxu0 0.0
    %150 = vmatprep.subr.mxu0 0.0
    %151 = vmatpush1.msra.mxu0 0.0
    %152 = vmatprep.subr.mxu0 0.0
    %153 = vmatpush1.msra.mxu0 0.0
    %154 = vmatprep.subr.mxu0 0.0
    %155 = vmatpush1.msra.mxu0 0.0
    %156 = vmatprep.subr.mxu0 0.0
    %157 = vmatpush1.msra.mxu0 0.0
    %158 = vmatprep.subr.mxu0 0.0
    %159 = vmatpush1.msra.mxu0 0.0
    %160 = vmatprep.subr.mxu0 0.0
    %161 = vmatpush1.msra.mxu0 0.0
    %162 = vmatprep.subr.mxu0 0.0
    %163 = vmatpush1.msra.mxu0 0.0
    %164 = vmatprep.subr.mxu0 0.0
    %165 = vmatpush1.msra.mxu0 0.0
    %166 = vmatprep.subr.mxu0 0.0
    %167 = vmatpush1.msra.mxu0 0.0
    %168 = vmatprep.subr.mxu0 0.0
    %169 = vmatpush1.msra.mxu0 0.0
    %170 = vmatprep.subr.mxu0 0.0
    %171 = vmatpush1.msra.mxu0 %v138
    %172 = vmatprep.subr.mxu0 0.0
    %173 = vmatpush2.msra.mxu0 0.0
    %174 = vmatprep.subr.mxu0 0.0
    %175 = vmatpush2.msra.mxu0 0.0
    %176 = vmatprep.subr.mxu0 0.0
    %177 = vmatpush2.msra.mxu0 0.0
    %178 = vmatprep.subr.mxu0 0.0
    %179 = vmatpush2.msra.mxu0 0.0
    %180 = vmatprep.subr.mxu0 0.0
    %181 = vmatpush2.msra.mxu0 0.0
    %182 = vmatprep.subr.mxu0 0.0
    %183 = vmatpush2.msra.mxu0 0.0
    %184 = vmatprep.subr.mxu0 0.0
    %185 = vmatpush2.msra.mxu0 0.0
    %186 = vmatprep.subr.mxu0 0.0
    %187 = vmatpush2.msra.mxu0 0.0
    %188 = vmatprep.subr.mxu0 0.0
    %189 = vmatpush2.msra.mxu0 0.0
    %190 = vmatprep.subr.mxu0 0.0
    %191 = vmatpush2.msra.mxu0 0.0
    %192 = vmatprep.subr.mxu0 0.0
    %193 = vmatpush2.msra.mxu0 0.0
    %194 = vmatprep.subr.mxu0 0.0
    %195 = vmatpush2.msra.mxu0 0.0
    %196 = vmatprep.subr.mxu0 0.0
    %197 = vmatpush2.msra.mxu0 0.0
    %198 = vmatprep.subr.mxu0 0.0
    %199 = vmatpush2.msra.mxu0 0.0
    %200 = vmatprep.subr.mxu0 0.0
    %201 = vmatpush2.msra.mxu0 0.0
    %202 = vmatprep.subr.mxu0 0.0
    %203 = vmatpush2.msra.mxu0 0.0
    %204 = vmatprep.mubr.f32.mxu0 0.0
    %205 = vmatmul.mubr.f32.gmra.mxu0 %v134
    %v206 = vpop.f32.mrf.mxu0
    %v207 = vadd.f32 0.0, %v206
    %v208 = vpop.f32.mrf.mxu0
    %209 = vdwg.mxu0
    %v210 = vpack.c.bf16 %v207, %v207
    %v211 = vld [vmem:[%s3] sm:$0x3]
    %v212 = vld [vmem:[%s1] sm:$0xff]
    %v213 = vpack.c.bf16 %v212, %v212
    %v214 = vld [vmem:[#allocation2] sm:$0xf]
    %vm215 = vcmask 64512
    %v217 = vsel %vm215, %v213, 0
    %v220 = vsel %vm136, %v214, 0
    %222 = vmatprep.subr.bf16.mxu0 0
    %223 = vmatpush1.bf16.msra.mxu0 0
    %224 = vmatprep.subr.bf16.mxu0 0
    %225 = vmatpush1.bf16.msra.mxu0 0
    %226 = vmatprep.subr.bf16.mxu0 0
    %227 = vmatpush1.bf16.msra.mxu0 0
    %228 = vmatprep.subr.bf16.mxu0 0
    %229 = vmatpush1.bf16.msra.mxu0 0
    %230 = vmatprep.subr.bf16.mxu0 0
    %231 = vmatpush1.bf16.msra.mxu0 0
    %232 = vmatprep.subr.bf16.mxu0 0
    %233 = vmatpush1.bf16.msra.mxu0 0
    %234 = vmatprep.subr.bf16.mxu0 0
    %235 = vmatpush1.bf16.msra.mxu0 0
    %236 = vmatprep.subr.bf16.mxu0 0
    %237 = vmatpush1.bf16.msra.mxu0 %v220
    %238 = vmatprep.subr.bf16.mxu0 0
    %239 = vmatpush2.bf16.msra.mxu0 0
    %240 = vmatprep.subr.bf16.mxu0 0
    %241 = vmatpush2.bf16.msra.mxu0 0
    %242 = vmatprep.subr.bf16.mxu0 0
    %243 = vmatpush2.bf16.msra.mxu0 0
    %244 = vmatprep.subr.bf16.mxu0 0
    %245 = vmatpush2.bf16.msra.mxu0 0
    %246 = vmatprep.subr.bf16.mxu0 0
    %247 = vmatpush2.bf16.msra.mxu0 0
    %248 = vmatprep.subr.bf16.mxu0 0
    %249 = vmatpush2.bf16.msra.mxu0 0
    %250 = vmatprep.subr.bf16.mxu0 0
    %251 = vmatpush2.bf16.msra.mxu0 0
    %252 = vmatprep.subr.bf16.mxu0 0
    %253 = vmatpush2.bf16.msra.mxu0 0
    %254 = vmatprep.mubr.bf16.mxu0 0
    %255 = vmatmul.mubr.bf16.gmra.mxu0 %v217
    %v256 = vpop.f32.mrf.mxu0
    %v257 = vadd.f32 0.0, %v256
    %v258 = vpop.f32.mrf.mxu0
    %v259 = vpop.f32.mrf.mxu0
    %v260 = vpop.f32.mrf.mxu0
    %261 = vdwg.mxu0
    %v263 = vsel %vm132, %v210, 0
    %vm265 = vcmask 1041408
    %v267 = vsel %vm265, %v211, 0
    %269 = vmatprep.subr.bf16.mxu0 0
    %270 = vmatpush1.bf16.msra.mxu0 0
    %271 = vmatprep.subr.bf16.mxu0 0
    %272 = vmatpush1.bf16.msra.mxu0 0
    %273 = vmatprep.subr.bf16.mxu0 0
    %274 = vmatpush1.bf16.msra.mxu0 0
    %275 = vmatprep.subr.bf16.mxu0 0
    %276 = vmatpush1.bf16.msra.mxu0 0
    %277 = vmatprep.subr.bf16.mxu0 0
    %278 = vmatpush1.bf16.msra.mxu0 0
    %279 = vmatprep.subr.bf16.mxu0 0
    %280 = vmatpush1.bf16.msra.mxu0 0
    %281 = vmatprep.subr.bf16.mxu0 0
    %282 = vmatpush1.bf16.msra.mxu0 0
    %283 = vmatprep.subr.bf16.mxu0 0
    %284 = vmatpush1.bf16.msra.mxu0 %v267
    %285 = vmatprep.subr.bf16.mxu0 0
    %286 = vmatpush2.bf16.msra.mxu0 0
    %287 = vmatprep.subr.bf16.mxu0 0
    %288 = vmatpush2.bf16.msra.mxu0 0
    %289 = vmatprep.subr.bf16.mxu0 0
    %290 = vmatpush2.bf16.msra.mxu0 0
    %291 = vmatprep.subr.bf16.mxu0 0
    %292 = vmatpush2.bf16.msra.mxu0 0
    %293 = vmatprep.subr.bf16.mxu0 0
    %294 = vmatpush2.bf16.msra.mxu0 0
    %295 = vmatprep.subr.bf16.mxu0 0
    %296 = vmatpush2.bf16.msra.mxu0 0
    %297 = vmatprep.subr.bf16.mxu0 0
    %298 = vmatpush2.bf16.msra.mxu0 0
    %299 = vmatprep.subr.bf16.mxu0 0
    %300 = vmatpush2.bf16.msra.mxu0 0
    %301 = vmatprep.mubr.bf16.mxu0 0
    %302 = vmatmul.mubr.bf16.gmra.mxu0 %v263
    %v303 = vpop.f32.mrf.mxu0
    %v304 = vadd.f32 %v257, %v303
    %v305 = vpop.f32.mrf.mxu0
    %v306 = vpop.f32.mrf.mxu0
    %v307 = vpop.f32.mrf.mxu0
    %308 = vdwg.mxu0
    %v309 = vld [vmem:[#allocation4] sm:$0x1]
    %v311 = vlaneseq
    %v312 = vshrl.u32 %v311, 7
    %v313 = vsub.s32 0, %v312
    %v314 = vrot.slane %v309, %v313
    %v316 = vadd.f32 %v304, %v314
    %vm317 = vcmp.gt.f32.partialorder %v316, 0.0
    %v318 = vmul.f32 %v316, 0.2
    %v319 = vsel %vm317, %v316, %v318
    %v320 = vpack.c.bf16 %v319, %v319
    %v321 = vld [vmem:[#allocation6] sm:$0xff]
    %v322 = vld [vmem:[#allocation6 + $0x8] sm:$0xff]
    %v323 = vld [vmem:[#allocation6 + $0x10] sm:$0xff]
    %v324 = vld [vmem:[#allocation6 + $0x18] sm:$0xff]
    %v325 = vld [vmem:[#allocation6 + $0x20] sm:$0xff]
    %v326 = vld [vmem:[#allocation6 + $0x28] sm:$0xff]
    %v327 = vld [vmem:[#allocation6 + $0x30] sm:$0xff]
    %v328 = vld [vmem:[#allocation6 + $0x38] sm:$0xff]
    %v329 = vld [vmem:[#allocation6 + $0x40] sm:$0xff]
    %v330 = vld [vmem:[#allocation6 + $0x48] sm:$0xff]
    %v331 = vld [vmem:[#allocation6 + $0x50] sm:$0xff]
    %v332 = vld [vmem:[#allocation6 + $0x58] sm:$0xff]
    %v333 = vld [vmem:[#allocation6 + $0x60] sm:$0xff]
    %v334 = vld [vmem:[#allocation6 + $0x68] sm:$0xff]
    %v335 = vld [vmem:[#allocation6 + $0x70] sm:$0xff]
    %v336 = vld [vmem:[#allocation6 + $0x78] sm:$0xff]
    %v353 = vunpack.c.l.b16 %v321
    %v354 = vunpack.c.h.b16 %v321
    %v355 = vunpack.c.l.b16 %v322
    %v356 = vunpack.c.h.b16 %v322
    %v357 = vunpack.c.l.b16 %v323
    %v358 = vunpack.c.h.b16 %v323
    %v359 = vunpack.c.l.b16 %v324
    %v360 = vunpack.c.h.b16 %v324
    %v361 = vunpack.c.l.b16 %v325
    %v362 = vunpack.c.h.b16 %v325
    %v363 = vunpack.c.l.b16 %v326
    %v364 = vunpack.c.h.b16 %v326
    %v365 = vunpack.c.l.b16 %v327
    %v366 = vunpack.c.h.b16 %v327
    %v367 = vunpack.c.l.b16 %v328
    %v368 = vunpack.c.h.b16 %v328
    %v369 = vunpack.c.l.b16 %v329
    %v370 = vunpack.c.h.b16 %v329
    %v371 = vunpack.c.l.b16 %v330
    %v372 = vunpack.c.h.b16 %v330
    %v373 = vunpack.c.l.b16 %v331
    %v374 = vunpack.c.h.b16 %v331
    %v375 = vunpack.c.l.b16 %v332
    %v376 = vunpack.c.h.b16 %v332
    %v377 = vunpack.c.l.b16 %v333
    %v378 = vunpack.c.h.b16 %v333
    %v379 = vunpack.c.l.b16 %v334
    %v380 = vunpack.c.h.b16 %v334
    %v381 = vunpack.c.l.b16 %v335
    %v382 = vunpack.c.h.b16 %v335
    %v383 = vunpack.c.l.b16 %v336
    %v384 = vunpack.c.h.b16 %v336
    %v385 = vpack.c.b16 %v355, %v353
    %v386 = vpack.c.b16 %v356, %v354
    %v387 = vpack.c.b16 %v359, %v357
    %v388 = vpack.c.b16 %v360, %v358
    %v389 = vpack.c.b16 %v363, %v361
    %v390 = vpack.c.b16 %v364, %v362
    %v391 = vpack.c.b16 %v367, %v365
    %v392 = vpack.c.b16 %v368, %v366
    %v393 = vpack.c.b16 %v371, %v369
    %v394 = vpack.c.b16 %v372, %v370
    %v395 = vpack.c.b16 %v375, %v373
    %v396 = vpack.c.b16 %v376, %v374
    %v397 = vpack.c.b16 %v379, %v377
    %v398 = vpack.c.b16 %v380, %v378
    %v399 = vpack.c.b16 %v383, %v381
    %v400 = vpack.c.b16 %v384, %v382
    %417 = vmatprep.subr.bf16.mxu0 %v400
    %418 = vmatpush1.bf16.msra.mxu0 %v399
    %419 = vmatprep.subr.bf16.mxu0 %v398
    %420 = vmatpush1.bf16.msra.mxu0 %v397
    %421 = vmatprep.subr.bf16.mxu0 %v396
    %422 = vmatpush1.bf16.msra.mxu0 %v395
    %423 = vmatprep.subr.bf16.mxu0 %v394
    %424 = vmatpush1.bf16.msra.mxu0 %v393
    %425 = vmatprep.subr.bf16.mxu0 %v392
    %426 = vmatpush1.bf16.msra.mxu0 %v391
    %427 = vmatprep.subr.bf16.mxu0 %v390
    %428 = vmatpush1.bf16.msra.mxu0 %v389
    %429 = vmatprep.subr.bf16.mxu0 %v388
    %430 = vmatpush1.bf16.msra.mxu0 %v387
    %431 = vmatprep.subr.bf16.mxu0 %v386
    %432 = vmatpush1.bf16.msra.mxu0 %v385
    %433 = vmatprep.subr.bf16.mxu0 0
    %434 = vmatpush2.bf16.msra.mxu0 0
    %435 = vmatprep.subr.bf16.mxu0 0
    %436 = vmatpush2.bf16.msra.mxu0 0
    %437 = vmatprep.subr.bf16.mxu0 0
    %438 = vmatpush2.bf16.msra.mxu0 0
    %439 = vmatprep.subr.bf16.mxu0 0
    %440 = vmatpush2.bf16.msra.mxu0 0
    %441 = vmatprep.subr.bf16.mxu0 0
    %442 = vmatpush2.bf16.msra.mxu0 0
    %443 = vmatprep.subr.bf16.mxu0 0
    %444 = vmatpush2.bf16.msra.mxu0 0
    %445 = vmatprep.subr.bf16.mxu0 0
    %446 = vmatpush2.bf16.msra.mxu0 0
    %447 = vmatprep.subr.bf16.mxu0 0
    %448 = vmatpush2.bf16.msra.mxu0 0
    %449 = vmatprep.mubr.bf16.mxu0 0
    %450 = vmatmul.mubr.bf16.gmra.mxu0 %v320
    %v451 = vpop.f32.mrf.mxu0
    %v452 = vadd.f32 0.0, %v451
    %v453 = vpop.f32.mrf.mxu0
    %v454 = vadd.f32 0.0, %v453
    %v455 = vpop.f32.mrf.mxu0
    %v456 = vpop.f32.mrf.mxu0
    %457 = vdwg.mxu0
    %v458 = vld [vmem:[#allocation7] ss:$2 sm:$0x3]
    %s459 = scalar_lea.vmem [#allocation7], 1
    %v460 = vld [vmem:[%s459] ss:$2 sm:$0x3]
    %v461 = vrot.slane %v452, 4
    %v462 = vadd.f32 %v452, %v461
    %v463 = vrot.slane %v462, 2
    %v464 = vadd.f32 %v462, %v463
    %v465 = vrot.slane %v464, 1
    %v466 = vadd.f32 %v464, %v465
    %v467 = vrot.slane %v454, 4
    %v468 = vadd.f32 %v454, %v467
    %v469 = vrot.slane %v468, 2
    %v470 = vadd.f32 %v468, %v469
    %v471 = vrot.slane %v470, 1
    %v472 = vadd.f32 %v470, %v471
    %v473 = vrcp.pop 8.0
    %v474 = vmul.f32 %v466, %v473
    %v475 = vmul.f32 %v472, %v473
    %v476 = vsub.f32 %v452, %v474
    %v477 = vsub.f32 %v454, %v475
    %v478 = vmul.f32 %v476, %v476
    %v479 = vmul.f32 %v477, %v477
    %v480 = vrot.slane %v478, 4
    %v481 = vadd.f32 %v478, %v480
    %v482 = vrot.slane %v481, 2
    %v483 = vadd.f32 %v481, %v482
    %v484 = vrot.slane %v483, 1
    %v485 = vadd.f32 %v483, %v484
    %v486 = vrot.slane %v479, 4
    %v487 = vadd.f32 %v479, %v486
    %v488 = vrot.slane %v487, 2
    %v489 = vadd.f32 %v487, %v488
    %v490 = vrot.slane %v489, 1
    %v491 = vadd.f32 %v489, %v490
    %v492 = vmul.f32 %v485, %v473
    %v493 = vmul.f32 %v491, %v473
    %v494 = vadd.f32 %v492, 0.8
    %v495 = vadd.f32 %v493, 0.8
    %v496 = vrsqrt.pop %v494
    %v497 = vrsqrt.pop %v495
    %v500 = vcombine.low %v496, %v497
    %v502 = vunpack.c.l.s4 1966171168
    %v503 = vunpack.c.0.s8 %v502
    %v504 = vlaneseq
    %v505 = vshrl.u32 %v504, 7
    %v506 = vsub.s32 %v503, %v505
    %v507 = vrot.slane %v500, %v506
    %v509 = vunpack.c.l.s4 1966171168
    %v510 = vunpack.c.0.s8 %v509
    %v511 = vlaneseq
    %v512 = vshrl.u32 %v511, 7
    %v513 = vsub.s32 %v510, %v512
    %v514 = vrot.slane %v507, %v513
    %v516 = vmul.f32 %v458, %v514
    %v518 = vlaneseq
    %v519 = vshrl.u32 %v518, 7
    %v520 = vsub.s32 0, %v519
    %v521 = vrot.slane %v516, %v520
    %v522 = vlaneseq
    %v523 = vshrl.u32 %v522, 7
    %v524 = vsub.s32 1, %v523
    %v525 = vrot.slane %v516, %v524
    %v528 = vmul.f32 %v474, %v521
    %v529 = vmul.f32 %v475, %v525
    %v532 = vcombine.low %v528, %v529
    %v534 = vunpack.c.l.s4 1966171168
    %v535 = vunpack.c.0.s8 %v534
    %v536 = vlaneseq
    %v537 = vshrl.u32 %v536, 7
    %v538 = vsub.s32 %v535, %v537
    %v539 = vrot.slane %v532, %v538
    %v541 = vunpack.c.l.s4 1966171168
    %v542 = vunpack.c.0.s8 %v541
    %v543 = vlaneseq
    %v544 = vshrl.u32 %v543, 7
    %v545 = vsub.s32 %v542, %v544
    %v546 = vrot.slane %v539, %v545
    %v548 = vsub.f32 %v460, %v546
    %v549 = vmul.f32 %v452, %v521
    %v550 = vmul.f32 %v454, %v525
    %v552 = vlaneseq
    %v553 = vshrl.u32 %v552, 7
    %v554 = vsub.s32 0, %v553
    %v555 = vrot.slane %v548, %v554
    %v556 = vlaneseq
    %v557 = vshrl.u32 %v556, 7
    %v558 = vsub.s32 1, %v557
    %v559 = vrot.slane %v548, %v558
    %v562 = vadd.f32 %v549, %v555
    %v563 = vadd.f32 %v550, %v559
    %vm564 = vcmp.gt.f32.partialorder %v562, 0.0
    %vm565 = vcmp.gt.f32.partialorder %v563, 0.0
    %v566 = vmul.f32 %v562, 0.2
    %v567 = vmul.f32 %v563, 0.2
    %v568 = vsel %vm564, %v562, %v566
    %v569 = vsel %vm565, %v563, %v567
    %v570 = vpack.c.bf16 %v568, %v568
    %v571 = vpack.c.bf16 %v569, %v569
    %v572 = vld [vmem:[%s8] sm:$0xff]
    %v573 = vld [vmem:[%s8 + $0x8] sm:$0xff]
    %v574 = vld [vmem:[%s8 + $0x10] sm:$0xff]
    %v575 = vld [vmem:[%s8 + $0x18] sm:$0xff]
    %v576 = vld [vmem:[%s8 + $0x20] sm:$0xff]
    %v577 = vld [vmem:[%s8 + $0x28] sm:$0xff]
    %v578 = vld [vmem:[%s8 + $0x30] sm:$0xff]
    %v579 = vld [vmem:[%s8 + $0x38] sm:$0xff]
    %v580 = vld [vmem:[%s8 + $0x40] sm:$0xff]
    %v581 = vld [vmem:[%s8 + $0x48] sm:$0xff]
    %v582 = vld [vmem:[%s8 + $0x50] sm:$0xff]
    %v583 = vld [vmem:[%s8 + $0x58] sm:$0xff]
    %v584 = vld [vmem:[%s8 + $0x60] sm:$0xff]
    %v585 = vld [vmem:[%s8 + $0x68] sm:$0xff]
    %v586 = vld [vmem:[%s8 + $0x70] sm:$0xff]
    %v587 = vld [vmem:[%s8 + $0x78] sm:$0xff]
    %v588 = vld [vmem:[%s8 + $0x80] sm:$0xff]
    %v589 = vld [vmem:[%s8 + $0x88] sm:$0xff]
    %v590 = vld [vmem:[%s8 + $0x90] sm:$0xff]
    %v591 = vld [vmem:[%s8 + $0x98] sm:$0xff]
    %v592 = vld [vmem:[%s8 + $0xa0] sm:$0xff]
    %v593 = vld [vmem:[%s8 + $0xa8] sm:$0xff]
    %v594 = vld [vmem:[%s8 + $0xb0] sm:$0xff]
    %v595 = vld [vmem:[%s8 + $0xb8] sm:$0xff]
    %v596 = vld [vmem:[%s8 + $0xc0] sm:$0xff]
    %v597 = vld [vmem:[%s8 + $0xc8] sm:$0xff]
    %v598 = vld [vmem:[%s8 + $0xd0] sm:$0xff]
    %v599 = vld [vmem:[%s8 + $0xd8] sm:$0xff]
    %v600 = vld [vmem:[%s8 + $0xe0] sm:$0xff]
    %v601 = vld [vmem:[%s8 + $0xe8] sm:$0xff]
    %v602 = vld [vmem:[%s8 + $0xf0] sm:$0xff]
    %v603 = vld [vmem:[%s8 + $0xf8] sm:$0xff]
    %v604 = vld [vmem:[%s8 + $0x100] sm:$0xff]
    %v605 = vld [vmem:[%s8 + $0x108] sm:$0xff]
    %v606 = vld [vmem:[%s8 + $0x110] sm:$0xff]
    %v607 = vld [vmem:[%s8 + $0x118] sm:$0xff]
    %v608 = vld [vmem:[%s8 + $0x120] sm:$0xff]
    %v609 = vld [vmem:[%s8 + $0x128] sm:$0xff]
    %v610 = vld [vmem:[%s8 + $0x130] sm:$0xff]
    %v611 = vld [vmem:[%s8 + $0x138] sm:$0xff]
    %v612 = vld [vmem:[%s8 + $0x140] sm:$0xff]
    %v613 = vld [vmem:[%s8 + $0x148] sm:$0xff]
    %v614 = vld [vmem:[%s8 + $0x150] sm:$0xff]
    %v615 = vld [vmem:[%s8 + $0x158] sm:$0xff]
    %v616 = vld [vmem:[%s8 + $0x160] sm:$0xff]
    %v617 = vld [vmem:[%s8 + $0x168] sm:$0xff]
    %v618 = vld [vmem:[%s8 + $0x170] sm:$0xff]
    %v619 = vld [vmem:[%s8 + $0x178] sm:$0xff]
    %v620 = vld [vmem:[%s8 + $0x180] sm:$0xff]
    %v621 = vld [vmem:[%s8 + $0x188] sm:$0xff]
    %v622 = vld [vmem:[%s8 + $0x190] sm:$0xff]
    %v623 = vld [vmem:[%s8 + $0x198] sm:$0xff]
    %v624 = vld [vmem:[%s8 + $0x1a0] sm:$0xff]
    %v625 = vld [vmem:[%s8 + $0x1a8] sm:$0xff]
    %v626 = vld [vmem:[%s8 + $0x1b0] sm:$0xff]
    %v627 = vld [vmem:[%s8 + $0x1b8] sm:$0xff]
    %v628 = vld [vmem:[%s8 + $0x1c0] sm:$0xff]
    %v629 = vld [vmem:[%s8 + $0x1c8] sm:$0xff]
    %v630 = vld [vmem:[%s8 + $0x1d0] sm:$0xff]
    %v631 = vld [vmem:[%s8 + $0x1d8] sm:$0xff]
    %v632 = vld [vmem:[%s8 + $0x1e0] sm:$0xff]
    %v633 = vld [vmem:[%s8 + $0x1e8] sm:$0xff]
    %v634 = vld [vmem:[%s8 + $0x1f0] sm:$0xff]
    %v635 = vld [vmem:[%s8 + $0x1f8] sm:$0xff]
    %v700 = vunpack.c.l.b16 %v572
    %v701 = vunpack.c.h.b16 %v572
    %v702 = vunpack.c.l.b16 %v573
    %v703 = vunpack.c.h.b16 %v573
    %v704 = vunpack.c.l.b16 %v574
    %v705 = vunpack.c.h.b16 %v574
    %v706 = vunpack.c.l.b16 %v575
    %v707 = vunpack.c.h.b16 %v575
    %v708 = vunpack.c.l.b16 %v576
    %v709 = vunpack.c.h.b16 %v576
    %v710 = vunpack.c.l.b16 %v577
    %v711 = vunpack.c.h.b16 %v577
    %v712 = vunpack.c.l.b16 %v578
    %v713 = vunpack.c.h.b16 %v578
    %v714 = vunpack.c.l.b16 %v579
    %v715 = vunpack.c.h.b16 %v579
    %v716 = vunpack.c.l.b16 %v580
    %v717 = vunpack.c.h.b16 %v580
    %v718 = vunpack.c.l.b16 %v581
    %v719 = vunpack.c.h.b16 %v581
    %v720 = vunpack.c.l.b16 %v582
    %v721 = vunpack.c.h.b16 %v582
    %v722 = vunpack.c.l.b16 %v583
    %v723 = vunpack.c.h.b16 %v583
    %v724 = vunpack.c.l.b16 %v584
    %v725 = vunpack.c.h.b16 %v584
    %v726 = vunpack.c.l.b16 %v585
    %v727 = vunpack.c.h.b16 %v585
    %v728 = vunpack.c.l.b16 %v586
    %v729 = vunpack.c.h.b16 %v586
    %v730 = vunpack.c.l.b16 %v587
    %v731 = vunpack.c.h.b16 %v587
    %v732 = vunpack.c.l.b16 %v588
    %v733 = vunpack.c.h.b16 %v588
    %v734 = vunpack.c.l.b16 %v589
    %v735 = vunpack.c.h.b16 %v589
    %v736 = vunpack.c.l.b16 %v590
    %v737 = vunpack.c.h.b16 %v590
    %v738 = vunpack.c.l.b16 %v591
    %v739 = vunpack.c.h.b16 %v591
    %v740 = vunpack.c.l.b16 %v592
    %v741 = vunpack.c.h.b16 %v592
    %v742 = vunpack.c.l.b16 %v593
    %v743 = vunpack.c.h.b16 %v593
    %v744 = vunpack.c.l.b16 %v594
    %v745 = vunpack.c.h.b16 %v594
    %v746 = vunpack.c.l.b16 %v595
    %v747 = vunpack.c.h.b16 %v595
    %v748 = vunpack.c.l.b16 %v596
    %v749 = vunpack.c.h.b16 %v596
    %v750 = vunpack.c.l.b16 %v597
    %v751 = vunpack.c.h.b16 %v597
    %v752 = vunpack.c.l.b16 %v598
    %v753 = vunpack.c.h.b16 %v598
    %v754 = vunpack.c.l.b16 %v599
    %v755 = vunpack.c.h.b16 %v599
    %v756 = vunpack.c.l.b16 %v600
    %v757 = vunpack.c.h.b16 %v600
    %v758 = vunpack.c.l.b16 %v601
    %v759 = vunpack.c.h.b16 %v601
    %v760 = vunpack.c.l.b16 %v602
    %v761 = vunpack.c.h.b16 %v602
    %v762 = vunpack.c.l.b16 %v603
    %v763 = vunpack.c.h.b16 %v603
    %v764 = vunpack.c.l.b16 %v604
    %v765 = vunpack.c.h.b16 %v604
    %v766 = vunpack.c.l.b16 %v605
    %v767 = vunpack.c.h.b16 %v605
    %v768 = vunpack.c.l.b16 %v606
    %v769 = vunpack.c.h.b16 %v606
    %v770 = vunpack.c.l.b16 %v607
    %v771 = vunpack.c.h.b16 %v607
    %v772 = vunpack.c.l.b16 %v608
    %v773 = vunpack.c.h.b16 %v608
    %v774 = vunpack.c.l.b16 %v609
    %v775 = vunpack.c.h.b16 %v609
    %v776 = vunpack.c.l.b16 %v610
    %v777 = vunpack.c.h.b16 %v610
    %v778 = vunpack.c.l.b16 %v611
    %v779 = vunpack.c.h.b16 %v611
    %v780 = vunpack.c.l.b16 %v612
    %v781 = vunpack.c.h.b16 %v612
    %v782 = vunpack.c.l.b16 %v613
    %v783 = vunpack.c.h.b16 %v613
    %v784 = vunpack.c.l.b16 %v614
    %v785 = vunpack.c.h.b16 %v614
    %v786 = vunpack.c.l.b16 %v615
    %v787 = vunpack.c.h.b16 %v615
    %v788 = vunpack.c.l.b16 %v616
    %v789 = vunpack.c.h.b16 %v616
    %v790 = vunpack.c.l.b16 %v617
    %v791 = vunpack.c.h.b16 %v617
    %v792 = vunpack.c.l.b16 %v618
    %v793 = vunpack.c.h.b16 %v618
    %v794 = vunpack.c.l.b16 %v619
    %v795 = vunpack.c.h.b16 %v619
    %v796 = vunpack.c.l.b16 %v620
    %v797 = vunpack.c.h.b16 %v620
    %v798 = vunpack.c.l.b16 %v621
    %v799 = vunpack.c.h.b16 %v621
    %v800 = vunpack.c.l.b16 %v622
    %v801 = vunpack.c.h.b16 %v622
    %v802 = vunpack.c.l.b16 %v623
    %v803 = vunpack.c.h.b16 %v623
    %v804 = vunpack.c.l.b16 %v624
    %v805 = vunpack.c.h.b16 %v624
    %v806 = vunpack.c.l.b16 %v625
    %v807 = vunpack.c.h.b16 %v625
    %v808 = vunpack.c.l.b16 %v626
    %v809 = vunpack.c.h.b16 %v626
    %v810 = vunpack.c.l.b16 %v627
    %v811 = vunpack.c.h.b16 %v627
    %v812 = vunpack.c.l.b16 %v628
    %v813 = vunpack.c.h.b16 %v628
    %v814 = vunpack.c.l.b16 %v629
    %v815 = vunpack.c.h.b16 %v629
    %v816 = vunpack.c.l.b16 %v630
    %v817 = vunpack.c.h.b16 %v630
    %v818 = vunpack.c.l.b16 %v631
    %v819 = vunpack.c.h.b16 %v631
    %v820 = vunpack.c.l.b16 %v632
    %v821 = vunpack.c.h.b16 %v632
    %v822 = vunpack.c.l.b16 %v633
    %v823 = vunpack.c.h.b16 %v633
    %v824 = vunpack.c.l.b16 %v634
    %v825 = vunpack.c.h.b16 %v634
    %v826 = vunpack.c.l.b16 %v635
    %v827 = vunpack.c.h.b16 %v635
    %v828 = vpack.c.b16 %v704, %v700
    %v829 = vpack.c.b16 %v705, %v701
    %v830 = vpack.c.b16 %v706, %v702
    %v831 = vpack.c.b16 %v707, %v703
    %v832 = vpack.c.b16 %v712, %v708
    %v833 = vpack.c.b16 %v713, %v709
    %v834 = vpack.c.b16 %v714, %v710
    %v835 = vpack.c.b16 %v715, %v711
    %v836 = vpack.c.b16 %v720, %v716
    %v837 = vpack.c.b16 %v721, %v717
    %v838 = vpack.c.b16 %v722, %v718
    %v839 = vpack.c.b16 %v723, %v719
    %v840 = vpack.c.b16 %v728, %v724
    %v841 = vpack.c.b16 %v729, %v725
    %v842 = vpack.c.b16 %v730, %v726
    %v843 = vpack.c.b16 %v731, %v727
    %v844 = vpack.c.b16 %v736, %v732
    %v845 = vpack.c.b16 %v737, %v733
    %v846 = vpack.c.b16 %v738, %v734
    %v847 = vpack.c.b16 %v739, %v735
    %v848 = vpack.c.b16 %v744, %v740
    %v849 = vpack.c.b16 %v745, %v741
    %v850 = vpack.c.b16 %v746, %v742
    %v851 = vpack.c.b16 %v747, %v743
    %v852 = vpack.c.b16 %v752, %v748
    %v853 = vpack.c.b16 %v753, %v749
    %v854 = vpack.c.b16 %v754, %v750
    %v855 = vpack.c.b16 %v755, %v751
    %v856 = vpack.c.b16 %v760, %v756
    %v857 = vpack.c.b16 %v761, %v757
    %v858 = vpack.c.b16 %v762, %v758
    %v859 = vpack.c.b16 %v763, %v759
    %v860 = vpack.c.b16 %v768, %v764
    %v861 = vpack.c.b16 %v769, %v765
    %v862 = vpack.c.b16 %v770, %v766
    %v863 = vpack.c.b16 %v771, %v767
    %v864 = vpack.c.b16 %v776, %v772
    %v865 = vpack.c.b16 %v777, %v773
    %v866 = vpack.c.b16 %v778, %v774
    %v867 = vpack.c.b16 %v779, %v775
    %v868 = vpack.c.b16 %v784, %v780
    %v869 = vpack.c.b16 %v785, %v781
    %v870 = vpack.c.b16 %v786, %v782
    %v871 = vpack.c.b16 %v787, %v783
    %v872 = vpack.c.b16 %v792, %v788
    %v873 = vpack.c.b16 %v793, %v789
    %v874 = vpack.c.b16 %v794, %v790
    %v875 = vpack.c.b16 %v795, %v791
    %v876 = vpack.c.b16 %v800, %v796
    %v877 = vpack.c.b16 %v801, %v797
    %v878 = vpack.c.b16 %v802, %v798
    %v879 = vpack.c.b16 %v803, %v799
    %v880 = vpack.c.b16 %v808, %v804
    %v881 = vpack.c.b16 %v809, %v805
    %v882 = vpack.c.b16 %v810, %v806
    %v883 = vpack.c.b16 %v811, %v807
    %v884 = vpack.c.b16 %v816, %v812
    %v885 = vpack.c.b16 %v817, %v813
    %v886 = vpack.c.b16 %v818, %v814
    %v887 = vpack.c.b16 %v819, %v815
    %v888 = vpack.c.b16 %v824, %v820
    %v889 = vpack.c.b16 %v825, %v821
    %v890 = vpack.c.b16 %v826, %v822
    %v891 = vpack.c.b16 %v827, %v823
    %956 = vmatprep.subr.bf16.mxu0 %v857
    %957 = vmatpush1.bf16.msra.mxu0 %v856
    %958 = vmatprep.subr.bf16.mxu0 %v853
    %959 = vmatpush1.bf16.msra.mxu0 %v852
    %960 = vmatprep.subr.bf16.mxu0 %v849
    %961 = vmatpush1.bf16.msra.mxu0 %v848
    %962 = vmatprep.subr.bf16.mxu0 %v845
    %963 = vmatpush1.bf16.msra.mxu0 %v844
    %964 = vmatprep.subr.bf16.mxu0 %v841
    %965 = vmatpush1.bf16.msra.mxu0 %v840
    %966 = vmatprep.subr.bf16.mxu0 %v837
    %967 = vmatpush1.bf16.msra.mxu0 %v836
    %968 = vmatprep.subr.bf16.mxu0 %v833
    %969 = vmatpush1.bf16.msra.mxu0 %v832
    %970 = vmatprep.subr.bf16.mxu0 %v829
    %971 = vmatpush1.bf16.msra.mxu0 %v828
    %972 = vmatprep.subr.bf16.mxu0 %v889
    %973 = vmatpush2.bf16.msra.mxu0 %v888
    %974 = vmatprep.subr.bf16.mxu0 %v885
    %975 = vmatpush2.bf16.msra.mxu0 %v884
    %976 = vmatprep.subr.bf16.mxu0 %v881
    %977 = vmatpush2.bf16.msra.mxu0 %v880
    %978 = vmatprep.subr.bf16.mxu0 %v877
    %979 = vmatpush2.bf16.msra.mxu0 %v876
    %980 = vmatprep.subr.bf16.mxu0 %v873
    %981 = vmatpush2.bf16.msra.mxu0 %v872
    %982 = vmatprep.subr.bf16.mxu0 %v869
    %983 = vmatpush2.bf16.msra.mxu0 %v868
    %984 = vmatprep.subr.bf16.mxu0 %v865
    %985 = vmatpush2.bf16.msra.mxu0 %v864
    %986 = vmatprep.subr.bf16.mxu0 %v861
    %987 = vmatpush2.bf16.msra.mxu0 %v860
    %988 = vmatprep.mubr.bf16.mxu0 %v571
    %989 = vmatmul.mubr.bf16.gmra.mxu0 %v570
    %v990 = vpop.f32.mrf.mxu0
    %v991 = vadd.f32 0.0, %v990
    %v992 = vpop.f32.mrf.mxu0
    %v993 = vadd.f32 0.0, %v992
    %v994 = vpop.f32.mrf.mxu0
    %v995 = vpop.f32.mrf.mxu0
    %996 = vdwg.mxu0
    %997 = vmatprep.subr.bf16.mxu0 %v859
    %998 = vmatpush1.bf16.msra.mxu0 %v858
    %999 = vmatprep.subr.bf16.mxu0 %v855
    %1000 = vmatpush1.bf16.msra.mxu0 %v854
    %1001 = vmatprep.subr.bf16.mxu0 %v851
    %1002 = vmatpush1.bf16.msra.mxu0 %v850
    %1003 = vmatprep.subr.bf16.mxu0 %v847
    %1004 = vmatpush1.bf16.msra.mxu0 %v846
    %1005 = vmatprep.subr.bf16.mxu0 %v843
    %1006 = vmatpush1.bf16.msra.mxu0 %v842
    %1007 = vmatprep.subr.bf16.mxu0 %v839
    %1008 = vmatpush1.bf16.msra.mxu0 %v838
    %1009 = vmatprep.subr.bf16.mxu0 %v835
    %1010 = vmatpush1.bf16.msra.mxu0 %v834
    %1011 = vmatprep.subr.bf16.mxu0 %v831
    %1012 = vmatpush1.bf16.msra.mxu0 %v830
    %1013 = vmatprep.subr.bf16.mxu0 %v891
    %1014 = vmatpush2.bf16.msra.mxu0 %v890
    %1015 = vmatprep.subr.bf16.mxu0 %v887
    %1016 = vmatpush2.bf16.msra.mxu0 %v886
    %1017 = vmatprep.subr.bf16.mxu0 %v883
    %1018 = vmatpush2.bf16.msra.mxu0 %v882
    %1019 = vmatprep.subr.bf16.mxu0 %v879
    %1020 = vmatpush2.bf16.msra.mxu0 %v878
    %1021 = vmatprep.subr.bf16.mxu0 %v875
    %1022 = vmatpush2.bf16.msra.mxu0 %v874
    %1023 = vmatprep.subr.bf16.mxu0 %v871
    %1024 = vmatpush2.bf16.msra.mxu0 %v870
    %1025 = vmatprep.subr.bf16.mxu0 %v867
    %1026 = vmatpush2.bf16.msra.mxu0 %v866
    %1027 = vmatprep.subr.bf16.mxu0 %v863
    %1028 = vmatpush2.bf16.msra.mxu0 %v862
    %1029 = vmatprep.mubr.bf16.mxu0 %v571
    %1030 = vmatmul.mubr.bf16.gmra.mxu0 %v570
    %v1031 = vpop.f32.mrf.mxu0
    %v1032 = vadd.f32 0.0, %v1031
    %v1033 = vpop.f32.mrf.mxu0
    %v1034 = vadd.f32 0.0, %v1033
    %v1035 = vpop.f32.mrf.mxu0
    %v1036 = vpop.f32.mrf.mxu0
    %1037 = vdwg.mxu0
    %v1038 = vld [vmem:[%s9] ss:$2 sm:$0xf]
    %s1039 = scalar_lea.vmem %s9, 1
    %v1040 = vld [vmem:[%s1039] ss:$2 sm:$0xf]
    %v1041 = vrot.slane %v991, 4
    %v1042 = vadd.f32 %v991, %v1041
    %v1043 = vrot.slane %v1042, 2
    %v1044 = vadd.f32 %v1042, %v1043
    %v1045 = vrot.slane %v1044, 1
    %v1046 = vadd.f32 %v1044, %v1045
    %v1047 = vrot.slane %v993, 4
    %v1048 = vadd.f32 %v993, %v1047
    %v1049 = vrot.slane %v1048, 2
    %v1050 = vadd.f32 %v1048, %v1049
    %v1051 = vrot.slane %v1050, 1
    %v1052 = vadd.f32 %v1050, %v1051
    %v1053 = vrot.slane %v1032, 4
    %v1054 = vadd.f32 %v1032, %v1053
    %v1055 = vrot.slane %v1054, 2
    %v1056 = vadd.f32 %v1054, %v1055
    %v1057 = vrot.slane %v1056, 1
    %v1058 = vadd.f32 %v1056, %v1057
    %v1059 = vrot.slane %v1034, 4
    %v1060 = vadd.f32 %v1034, %v1059
    %v1061 = vrot.slane %v1060, 2
    %v1062 = vadd.f32 %v1060, %v1061
    %v1063 = vrot.slane %v1062, 1
    %v1064 = vadd.f32 %v1062, %v1063
    %v1065 = vmul.f32 %v1046, %v473
    %v1066 = vmul.f32 %v1052, %v473
    %v1067 = vmul.f32 %v1058, %v473
    %v1068 = vmul.f32 %v1064, %v473
    %v1069 = vsub.f32 %v991, %v1065
    %v1070 = vsub.f32 %v993, %v1066
    %v1071 = vsub.f32 %v1032, %v1067
    %v1072 = vsub.f32 %v1034, %v1068
    %v1073 = vmul.f32 %v1069, %v1069
    %v1074 = vmul.f32 %v1070, %v1070
    %v1075 = vmul.f32 %v1071, %v1071
    %v1076 = vmul.f32 %v1072, %v1072
    %v1077 = vrot.slane %v1073, 4
    %v1078 = vadd.f32 %v1073, %v1077
    %v1079 = vrot.slane %v1078, 2
    %v1080 = vadd.f32 %v1078, %v1079
    %v1081 = vrot.slane %v1080, 1
    %v1082 = vadd.f32 %v1080, %v1081
    %v1083 = vrot.slane %v1074, 4
    %v1084 = vadd.f32 %v1074, %v1083
    %v1085 = vrot.slane %v1084, 2
    %v1086 = vadd.f32 %v1084, %v1085
    %v1087 = vrot.slane %v1086, 1
    %v1088 = vadd.f32 %v1086, %v1087
    %v1089 = vrot.slane %v1075, 4
    %v1090 = vadd.f32 %v1075, %v1089
    %v1091 = vrot.slane %v1090, 2
    %v1092 = vadd.f32 %v1090, %v1091
    %v1093 = vrot.slane %v1092, 1
    %v1094 = vadd.f32 %v1092, %v1093
    %v1095 = vrot.slane %v1076, 4
    %v1096 = vadd.f32 %v1076, %v1095
    %v1097 = vrot.slane %v1096, 2
    %v1098 = vadd.f32 %v1096, %v1097
    %v1099 = vrot.slane %v1098, 1
    %v1100 = vadd.f32 %v1098, %v1099
    %v1101 = vmul.f32 %v1082, %v473
    %v1102 = vmul.f32 %v1088, %v473
    %v1103 = vmul.f32 %v1094, %v473
    %v1104 = vmul.f32 %v1100, %v473
    %v1105 = vadd.f32 %v1101, 0.8
    %v1106 = vadd.f32 %v1102, 0.8
    %v1107 = vadd.f32 %v1103, 0.8
    %v1108 = vadd.f32 %v1104, 0.8
    %v1109 = vrsqrt.pop %v1105
    %v1110 = vrsqrt.pop %v1106
    %v1111 = vrsqrt.pop %v1107
    %v1112 = vrsqrt.pop %v1108
    %v1117 = vcombine.low %v1109, %v1110
    %v1118 = vcombine.low %v1111, %v1112
    %v1120 = vunpack.c.l.s4 1966171168
    %v1121 = vunpack.c.0.s8 %v1120
    %v1122 = vlaneseq
    %v1123 = vshrl.u32 %v1122, 7
    %v1124 = vsub.s32 %v1121, %v1123
    %v1125 = vrot.slane %v1117, %v1124
    %v1127 = vunpack.c.l.s4 1966171168
    %v1128 = vunpack.c.0.s8 %v1127
    %v1129 = vlaneseq
    %v1130 = vshrl.u32 %v1129, 7
    %v1131 = vsub.s32 %v1128, %v1130
    %v1132 = vrot.slane %v1118, %v1131
    %v1133 = vcombine.low %v1125, %v1132
    %v1135 = vunpack.c.l.s4 1966171168
    %v1136 = vunpack.c.0.s8 %v1135
    %v1137 = vlaneseq
    %v1138 = vshrl.u32 %v1137, 7
    %v1139 = vsub.s32 %v1136, %v1138
    %v1140 = vrot.slane %v1133, %v1139
    %v1142 = vmul.f32 %v1038, %v1140
    %v1144 = vlaneseq
    %v1145 = vshrl.u32 %v1144, 7
    %v1146 = vsub.s32 0, %v1145
    %v1147 = vrot.slane %v1142, %v1146
    %v1148 = vlaneseq
    %v1149 = vshrl.u32 %v1148, 7
    %v1150 = vsub.s32 1, %v1149
    %v1151 = vrot.slane %v1142, %v1150
    %v1152 = vlaneseq
    %v1153 = vshrl.u32 %v1152, 7
    %v1154 = vsub.s32 2, %v1153
    %v1155 = vrot.slane %v1142, %v1154
    %v1156 = vlaneseq
    %v1157 = vshrl.u32 %v1156, 7
    %v1158 = vsub.s32 3, %v1157
    %v1159 = vrot.slane %v1142, %v1158
    %v1164 = vmul.f32 %v1065, %v1147
    %v1165 = vmul.f32 %v1066, %v1151
    %v1166 = vmul.f32 %v1067, %v1155
    %v1167 = vmul.f32 %v1068, %v1159
    %v1172 = vcombine.low %v1164, %v1165
    %v1173 = vcombine.low %v1166, %v1167
    %v1175 = vunpack.c.l.s4 1966171168
    %v1176 = vunpack.c.0.s8 %v1175
    %v1177 = vlaneseq
    %v1178 = vshrl.u32 %v1177, 7
    %v1179 = vsub.s32 %v1176, %v1178
    %v1180 = vrot.slane %v1172, %v1179
    %v1182 = vunpack.c.l.s4 1966171168
    %v1183 = vunpack.c.0.s8 %v1182
    %v1184 = vlaneseq
    %v1185 = vshrl.u32 %v1184, 7
    %v1186 = vsub.s32 %v1183, %v1185
    %v1187 = vrot.slane %v1173, %v1186
    %v1188 = vcombine.low %v1180, %v1187
    %v1190 = vunpack.c.l.s4 1966171168
    %v1191 = vunpack.c.0.s8 %v1190
    %v1192 = vlaneseq
    %v1193 = vshrl.u32 %v1192, 7
    %v1194 = vsub.s32 %v1191, %v1193
    %v1195 = vrot.slane %v1188, %v1194
    %v1197 = vsub.f32 %v1040, %v1195
    %v1198 = vmul.f32 %v991, %v1147
    %v1199 = vmul.f32 %v993, %v1151
    %v1200 = vmul.f32 %v1032, %v1155
    %v1201 = vmul.f32 %v1034, %v1159
    %v1203 = vlaneseq
    %v1204 = vshrl.u32 %v1203, 7
    %v1205 = vsub.s32 0, %v1204
    %v1206 = vrot.slane %v1197, %v1205
    %v1207 = vlaneseq
    %v1208 = vshrl.u32 %v1207, 7
    %v1209 = vsub.s32 1, %v1208
    %v1210 = vrot.slane %v1197, %v1209
    %v1211 = vlaneseq
    %v1212 = vshrl.u32 %v1211, 7
    %v1213 = vsub.s32 2, %v1212
    %v1214 = vrot.slane %v1197, %v1213
    %v1215 = vlaneseq
    %v1216 = vshrl.u32 %v1215, 7
    %v1217 = vsub.s32 3, %v1216
    %v1218 = vrot.slane %v1197, %v1217
    %v1223 = vadd.f32 %v1198, %v1206
    %v1224 = vadd.f32 %v1199, %v1210
    %v1225 = vadd.f32 %v1200, %v1214
    %v1226 = vadd.f32 %v1201, %v1218
    %vm1227 = vcmp.gt.f32.partialorder %v1223, 0.0
    %vm1228 = vcmp.gt.f32.partialorder %v1224, 0.0
    %vm1229 = vcmp.gt.f32.partialorder %v1225, 0.0
    %vm1230 = vcmp.gt.f32.partialorder %v1226, 0.0
    %v1231 = vmul.f32 %v1223, 0.2
    %v1232 = vmul.f32 %v1224, 0.2
    %v1233 = vmul.f32 %v1225, 0.2
    %v1234 = vmul.f32 %v1226, 0.2
    %v1235 = vsel %vm1227, %v1223, %v1231
    %v1236 = vsel %vm1228, %v1224, %v1232
    %v1237 = vsel %vm1229, %v1225, %v1233
    %v1238 = vsel %vm1230, %v1226, %v1234
    %v1239 = vpack.c.bf16 %v1235, %v1235
    %v1240 = vpack.c.bf16 %v1236, %v1236
    %v1241 = vpack.c.bf16 %v1237, %v1237
    %v1242 = vpack.c.bf16 %v1238, %v1238
    %v1243 = vld [vmem:[#allocation9] sm:$0xff]
    %v1244 = vld [vmem:[#allocation9 + $0x8] sm:$0xff]
    %v1245 = vld [vmem:[#allocation9 + $0x10] sm:$0xff]
    %v1246 = vld [vmem:[#allocation9 + $0x18] sm:$0xff]
    %v1247 = vld [vmem:[#allocation9 + $0x20] sm:$0xff]
    %v1248 = vld [vmem:[#allocation9 + $0x28] sm:$0xff]
    %v1249 = vld [vmem:[#allocation9 + $0x30] sm:$0xff]
    %v1250 = vld [vmem:[#allocation9 + $0x38] sm:$0xff]
    %v1251 = vld [vmem:[#allocation9 + $0x40] sm:$0xff]
    %v1252 = vld [vmem:[#allocation9 + $0x48] sm:$0xff]
    %v1253 = vld [vmem:[#allocation9 + $0x50] sm:$0xff]
    %v1254 = vld [vmem:[#allocation9 + $0x58] sm:$0xff]
    %v1255 = vld [vmem:[#allocation9 + $0x60] sm:$0xff]
    %v1256 = vld [vmem:[#allocation9 + $0x68] sm:$0xff]
    %v1257 = vld [vmem:[#allocation9 + $0x70] sm:$0xff]
    %v1258 = vld [vmem:[#allocation9 + $0x78] sm:$0xff]
    %v1259 = vld [vmem:[#allocation9 + $0x80] sm:$0xff]
    %v1260 = vld [vmem:[#allocation9 + $0x88] sm:$0xff]
    %v1261 = vld [vmem:[#allocation9 + $0x90] sm:$0xff]
    %v1262 = vld [vmem:[#allocation9 + $0x98] sm:$0xff]
    %v1263 = vld [vmem:[#allocation9 + $0xa0] sm:$0xff]
    %v1264 = vld [vmem:[#allocation9 + $0xa8] sm:$0xff]
    %v1265 = vld [vmem:[#allocation9 + $0xb0] sm:$0xff]
    %v1266 = vld [vmem:[#allocation9 + $0xb8] sm:$0xff]
    %v1267 = vld [vmem:[#allocation9 + $0xc0] sm:$0xff]
    %v1268 = vld [vmem:[#allocation9 + $0xc8] sm:$0xff]
    %v1269 = vld [vmem:[#allocation9 + $0xd0] sm:$0xff]
    %v1270 = vld [vmem:[#allocation9 + $0xd8] sm:$0xff]
    %v1271 = vld [vmem:[#allocation9 + $0xe0] sm:$0xff]
    %v1272 = vld [vmem:[#allocation9 + $0xe8] sm:$0xff]
    %v1273 = vld [vmem:[#allocation9 + $0xf0] sm:$0xff]
    %v1274 = vld [vmem:[#allocation9 + $0xf8] sm:$0xff]
    %v1275 = vld [vmem:[#allocation9 + $0x100] sm:$0xff]
    %v1276 = vld [vmem:[#allocation9 + $0x108] sm:$0xff]
    %v1277 = vld [vmem:[#allocation9 + $0x110] sm:$0xff]
    %v1278 = vld [vmem:[#allocation9 + $0x118] sm:$0xff]
    %v1279 = vld [vmem:[#allocation9 + $0x120] sm:$0xff]
    %v1280 = vld [vmem:[#allocation9 + $0x128] sm:$0xff]
    %v1281 = vld [vmem:[#allocation9 + $0x130] sm:$0xff]
    %v1282 = vld [vmem:[#allocation9 + $0x138] sm:$0xff]
    %v1283 = vld [vmem:[#allocation9 + $0x140] sm:$0xff]
    %v1284 = vld [vmem:[#allocation9 + $0x148] sm:$0xff]
    %v1285 = vld [vmem:[#allocation9 + $0x150] sm:$0xff]
    %v1286 = vld [vmem:[#allocation9 + $0x158] sm:$0xff]
    %v1287 = vld [vmem:[#allocation9 + $0x160] sm:$0xff]
    %v1288 = vld [vmem:[#allocation9 + $0x168] sm:$0xff]
    %v1289 = vld [vmem:[#allocation9 + $0x170] sm:$0xff]
    %v1290 = vld [vmem:[#allocation9 + $0x178] sm:$0xff]
    %v1291 = vld [vmem:[#allocation9 + $0x180] sm:$0xff]
    %v1292 = vld [vmem:[#allocation9 + $0x188] sm:$0xff]
    %v1293 = vld [vmem:[#allocation9 + $0x190] sm:$0xff]
    %v1294 = vld [vmem:[#allocation9 + $0x198] sm:$0xff]
    %v1295 = vld [vmem:[#allocation9 + $0x1a0] sm:$0xff]
    %v1296 = vld [vmem:[#allocation9 + $0x1a8] sm:$0xff]
    %v1297 = vld [vmem:[#allocation9 + $0x1b0] sm:$0xff]
    %v1298 = vld [vmem:[#allocation9 + $0x1b8] sm:$0xff]
    %v1299 = vld [vmem:[#allocation9 + $0x1c0] sm:$0xff]
    %v1300 = vld [vmem:[#allocation9 + $0x1c8] sm:$0xff]
    %v1301 = vld [vmem:[#allocation9 + $0x1d0] sm:$0xff]
    %v1302 = vld [vmem:[#allocation9 + $0x1d8] sm:$0xff]
    %v1303 = vld [vmem:[#allocation9 + $0x1e0] sm:$0xff]
    %v1304 = vld [vmem:[#allocation9 + $0x1e8] sm:$0xff]
    %v1305 = vld [vmem:[#allocation9 + $0x1f0] sm:$0xff]
    %v1306 = vld [vmem:[#allocation9 + $0x1f8] sm:$0xff]
    %v1307 = vld [vmem:[#allocation9 + $0x200] sm:$0xff]
    %v1308 = vld [vmem:[#allocation9 + $0x208] sm:$0xff]
    %v1309 = vld [vmem:[#allocation9 + $0x210] sm:$0xff]
    %v1310 = vld [vmem:[#allocation9 + $0x218] sm:$0xff]
    %v1311 = vld [vmem:[#allocation9 + $0x220] sm:$0xff]
    %v1312 = vld [vmem:[#allocation9 + $0x228] sm:$0xff]
    %v1313 = vld [vmem:[#allocation9 + $0x230] sm:$0xff]
    %v1314 = vld [vmem:[#allocation9 + $0x238] sm:$0xff]
    %v1315 = vld [vmem:[#allocation9 + $0x240] sm:$0xff]
    %v1316 = vld [vmem:[#allocation9 + $0x248] sm:$0xff]
    %v1317 = vld [vmem:[#allocation9 + $0x250] sm:$0xff]
    %v1318 = vld [vmem:[#allocation9 + $0x258] sm:$0xff]
    %v1319 = vld [vmem:[#allocation9 + $0x260] sm:$0xff]
    %v1320 = vld [vmem:[#allocation9 + $0x268] sm:$0xff]
    %v1321 = vld [vmem:[#allocation9 + $0x270] sm:$0xff]
    %v1322 = vld [vmem:[#allocation9 + $0x278] sm:$0xff]
    %v1323 = vld [vmem:[#allocation9 + $0x280] sm:$0xff]
    %v1324 = vld [vmem:[#allocation9 + $0x288] sm:$0xff]
    %v1325 = vld [vmem:[#allocation9 + $0x290] sm:$0xff]
    %v1326 = vld [vmem:[#allocation9 + $0x298] sm:$0xff]
    %v1327 = vld [vmem:[#allocation9 + $0x2a0] sm:$0xff]
    %v1328 = vld [vmem:[#allocation9 + $0x2a8] sm:$0xff]
    %v1329 = vld [vmem:[#allocation9 + $0x2b0] sm:$0xff]
    %v1330 = vld [vmem:[#allocation9 + $0x2b8] sm:$0xff]
    %v1331 = vld [vmem:[#allocation9 + $0x2c0] sm:$0xff]
    %v1332 = vld [vmem:[#allocation9 + $0x2c8] sm:$0xff]
    %v1333 = vld [vmem:[#allocation9 + $0x2d0] sm:$0xff]
    %v1334 = vld [vmem:[#allocation9 + $0x2d8] sm:$0xff]
    %v1335 = vld [vmem:[#allocation9 + $0x2e0] sm:$0xff]
    %v1336 = vld [vmem:[#allocation9 + $0x2e8] sm:$0xff]
    %v1337 = vld [vmem:[#allocation9 + $0x2f0] sm:$0xff]
    %v1338 = vld [vmem:[#allocation9 + $0x2f8] sm:$0xff]
    %v1339 = vld [vmem:[#allocation9 + $0x300] sm:$0xff]
    %v1340 = vld [vmem:[#allocation9 + $0x308] sm:$0xff]
    %v1341 = vld [vmem:[#allocation9 + $0x310] sm:$0xff]
    %v1342 = vld [vmem:[#allocation9 + $0x318] sm:$0xff]
    %v1343 = vld [vmem:[#allocation9 + $0x320] sm:$0xff]
    %v1344 = vld [vmem:[#allocation9 + $0x328] sm:$0xff]
    %v1345 = vld [vmem:[#allocation9 + $0x330] sm:$0xff]
    %v1346 = vld [vmem:[#allocation9 + $0x338] sm:$0xff]
    %v1347 = vld [vmem:[#allocation9 + $0x340] sm:$0xff]
    %v1348 = vld [vmem:[#allocation9 + $0x348] sm:$0xff]
    %v1349 = vld [vmem:[#allocation9 + $0x350] sm:$0xff]
    %v1350 = vld [vmem:[#allocation9 + $0x358] sm:$0xff]
    %v1351 = vld [vmem:[#allocation9 + $0x360] sm:$0xff]
    %v1352 = vld [vmem:[#allocation9 + $0x368] sm:$0xff]
    %v1353 = vld [vmem:[#allocation9 + $0x370] sm:$0xff]
    %v1354 = vld [vmem:[#allocation9 + $0x378] sm:$0xff]
    %v1355 = vld [vmem:[#allocation9 + $0x380] sm:$0xff]
    %v1356 = vld [vmem:[#allocation9 + $0x388] sm:$0xff]
    %v1357 = vld [vmem:[#allocation9 + $0x390] sm:$0xff]
    %v1358 = vld [vmem:[#allocation9 + $0x398] sm:$0xff]
    %v1359 = vld [vmem:[#allocation9 + $0x3a0] sm:$0xff]
    %v1360 = vld [vmem:[#allocation9 + $0x3a8] sm:$0xff]
    %v1361 = vld [vmem:[#allocation9 + $0x3b0] sm:$0xff]
    %v1362 = vld [vmem:[#allocation9 + $0x3b8] sm:$0xff]
    %v1363 = vld [vmem:[#allocation9 + $0x3c0] sm:$0xff]
    %v1364 = vld [vmem:[#allocation9 + $0x3c8] sm:$0xff]
    %v1365 = vld [vmem:[#allocation9 + $0x3d0] sm:$0xff]
    %v1366 = vld [vmem:[#allocation9 + $0x3d8] sm:$0xff]
    %v1367 = vld [vmem:[#allocation9 + $0x3e0] sm:$0xff]
    %v1368 = vld [vmem:[#allocation9 + $0x3e8] sm:$0xff]
    %v1369 = vld [vmem:[#allocation9 + $0x3f0] sm:$0xff]
    %v1370 = vld [vmem:[#allocation9 + $0x3f8] sm:$0xff]
    %v1371 = vld [vmem:[#allocation9 + $0x400] sm:$0xff]
    %v1372 = vld [vmem:[#allocation9 + $0x408] sm:$0xff]
    %v1373 = vld [vmem:[#allocation9 + $0x410] sm:$0xff]
    %v1374 = vld [vmem:[#allocation9 + $0x418] sm:$0xff]
    %v1375 = vld [vmem:[#allocation9 + $0x420] sm:$0xff]
    %v1376 = vld [vmem:[#allocation9 + $0x428] sm:$0xff]
    %v1377 = vld [vmem:[#allocation9 + $0x430] sm:$0xff]
    %v1378 = vld [vmem:[#allocation9 + $0x438] sm:$0xff]
    %v1379 = vld [vmem:[#allocation9 + $0x440] sm:$0xff]
    %v1380 = vld [vmem:[#allocation9 + $0x448] sm:$0xff]
    %v1381 = vld [vmem:[#allocation9 + $0x450] sm:$0xff]
    %v1382 = vld [vmem:[#allocation9 + $0x458] sm:$0xff]
    %v1383 = vld [vmem:[#allocation9 + $0x460] sm:$0xff]
    %v1384 = vld [vmem:[#allocation9 + $0x468] sm:$0xff]
    %v1385 = vld [vmem:[#allocation9 + $0x470] sm:$0xff]
    %v1386 = vld [vmem:[#allocation9 + $0x478] sm:$0xff]
    %v1387 = vld [vmem:[#allocation9 + $0x480] sm:$0xff]
    %v1388 = vld [vmem:[#allocation9 + $0x488] sm:$0xff]
    %v1389 = vld [vmem:[#allocation9 + $0x490] sm:$0xff]
    %v1390 = vld [vmem:[#allocation9 + $0x498] sm:$0xff]
    %v1391 = vld [vmem:[#allocation9 + $0x4a0] sm:$0xff]
    %v1392 = vld [vmem:[#allocation9 + $0x4a8] sm:$0xff]
    %v1393 = vld [vmem:[#allocation9 + $0x4b0] sm:$0xff]
    %v1394 = vld [vmem:[#allocation9 + $0x4b8] sm:$0xff]
    %v1395 = vld [vmem:[#allocation9 + $0x4c0] sm:$0xff]
    %v1396 = vld [vmem:[#allocation9 + $0x4c8] sm:$0xff]
    %v1397 = vld [vmem:[#allocation9 + $0x4d0] sm:$0xff]
    %v1398 = vld [vmem:[#allocation9 + $0x4d8] sm:$0xff]
    %v1399 = vld [vmem:[#allocation9 + $0x4e0] sm:$0xff]
    %v1400 = vld [vmem:[#allocation9 + $0x4e8] sm:$0xff]
    %v1401 = vld [vmem:[#allocation9 + $0x4f0] sm:$0xff]
    %v1402 = vld [vmem:[#allocation9 + $0x4f8] sm:$0xff]
    %v1403 = vld [vmem:[#allocation9 + $0x500] sm:$0xff]
    %v1404 = vld [vmem:[#allocation9 + $0x508] sm:$0xff]
    %v1405 = vld [vmem:[#allocation9 + $0x510] sm:$0xff]
    %v1406 = vld [vmem:[#allocation9 + $0x518] sm:$0xff]
    %v1407 = vld [vmem:[#allocation9 + $0x520] sm:$0xff]
    %v1408 = vld [vmem:[#allocation9 + $0x528] sm:$0xff]
    %v1409 = vld [vmem:[#allocation9 + $0x530] sm:$0xff]
    %v1410 = vld [vmem:[#allocation9 + $0x538] sm:$0xff]
    %v1411 = vld [vmem:[#allocation9 + $0x540] sm:$0xff]
    %v1412 = vld [vmem:[#allocation9 + $0x548] sm:$0xff]
    %v1413 = vld [vmem:[#allocation9 + $0x550] sm:$0xff]
    %v1414 = vld [vmem:[#allocation9 + $0x558] sm:$0xff]
    %v1415 = vld [vmem:[#allocation9 + $0x560] sm:$0xff]
    %v1416 = vld [vmem:[#allocation9 + $0x568] sm:$0xff]
    %v1417 = vld [vmem:[#allocation9 + $0x570] sm:$0xff]
    %v1418 = vld [vmem:[#allocation9 + $0x578] sm:$0xff]
    %v1419 = vld [vmem:[#allocation9 + $0x580] sm:$0xff]
    %v1420 = vld [vmem:[#allocation9 + $0x588] sm:$0xff]
    %v1421 = vld [vmem:[#allocation9 + $0x590] sm:$0xff]
    %v1422 = vld [vmem:[#allocation9 + $0x598] sm:$0xff]
    %v1423 = vld [vmem:[#allocation9 + $0x5a0] sm:$0xff]
    %v1424 = vld [vmem:[#allocation9 + $0x5a8] sm:$0xff]
    %v1425 = vld [vmem:[#allocation9 + $0x5b0] sm:$0xff]
    %v1426 = vld [vmem:[#allocation9 + $0x5b8] sm:$0xff]
    %v1427 = vld [vmem:[#allocation9 + $0x5c0] sm:$0xff]
    %v1428 = vld [vmem:[#allocation9 + $0x5c8] sm:$0xff]
    %v1429 = vld [vmem:[#allocation9 + $0x5d0] sm:$0xff]
    %v1430 = vld [vmem:[#allocation9 + $0x5d8] sm:$0xff]
    %v1431 = vld [vmem:[#allocation9 + $0x5e0] sm:$0xff]
    %v1432 = vld [vmem:[#allocation9 + $0x5e8] sm:$0xff]
    %v1433 = vld [vmem:[#allocation9 + $0x5f0] sm:$0xff]
    %v1434 = vld [vmem:[#allocation9 + $0x5f8] sm:$0xff]
    %v1435 = vld [vmem:[#allocation9 + $0x600] sm:$0xff]
    %v1436 = vld [vmem:[#allocation9 + $0x608] sm:$0xff]
    %v1437 = vld [vmem:[#allocation9 + $0x610] sm:$0xff]
    %v1438 = vld [vmem:[#allocation9 + $0x618] sm:$0xff]
    %v1439 = vld [vmem:[#allocation9 + $0x620] sm:$0xff]
    %v1440 = vld [vmem:[#allocation9 + $0x628] sm:$0xff]
    %v1441 = vld [vmem:[#allocation9 + $0x630] sm:$0xff]
    %v1442 = vld [vmem:[#allocation9 + $0x638] sm:$0xff]
    %v1443 = vld [vmem:[#allocation9 + $0x640] sm:$0xff]
    %v1444 = vld [vmem:[#allocation9 + $0x648] sm:$0xff]
    %v1445 = vld [vmem:[#allocation9 + $0x650] sm:$0xff]
    %v1446 = vld [vmem:[#allocation9 + $0x658] sm:$0xff]
    %v1447 = vld [vmem:[#allocation9 + $0x660] sm:$0xff]
    %v1448 = vld [vmem:[#allocation9 + $0x668] sm:$0xff]
    %v1449 = vld [vmem:[#allocation9 + $0x670] sm:$0xff]
    %v1450 = vld [vmem:[#allocation9 + $0x678] sm:$0xff]
    %v1451 = vld [vmem:[#allocation9 + $0x680] sm:$0xff]
    %v1452 = vld [vmem:[#allocation9 + $0x688] sm:$0xff]
    %v1453 = vld [vmem:[#allocation9 + $0x690] sm:$0xff]
    %v1454 = vld [vmem:[#allocation9 + $0x698] sm:$0xff]
    %v1455 = vld [vmem:[#allocation9 + $0x6a0] sm:$0xff]
    %v1456 = vld [vmem:[#allocation9 + $0x6a8] sm:$0xff]
    %v1457 = vld [vmem:[#allocation9 + $0x6b0] sm:$0xff]
    %v1458 = vld [vmem:[#allocation9 + $0x6b8] sm:$0xff]
    %v1459 = vld [vmem:[#allocation9 + $0x6c0] sm:$0xff]
    %v1460 = vld [vmem:[#allocation9 + $0x6c8] sm:$0xff]
    %v1461 = vld [vmem:[#allocation9 + $0x6d0] sm:$0xff]
    %v1462 = vld [vmem:[#allocation9 + $0x6d8] sm:$0xff]
    %v1463 = vld [vmem:[#allocation9 + $0x6e0] sm:$0xff]
    %v1464 = vld [vmem:[#allocation9 + $0x6e8] sm:$0xff]
    %v1465 = vld [vmem:[#allocation9 + $0x6f0] sm:$0xff]
    %v1466 = vld [vmem:[#allocation9 + $0x6f8] sm:$0xff]
    %v1467 = vld [vmem:[#allocation9 + $0x700] sm:$0xff]
    %v1468 = vld [vmem:[#allocation9 + $0x708] sm:$0xff]
    %v1469 = vld [vmem:[#allocation9 + $0x710] sm:$0xff]
    %v1470 = vld [vmem:[#allocation9 + $0x718] sm:$0xff]
    %v1471 = vld [vmem:[#allocation9 + $0x720] sm:$0xff]
    %v1472 = vld [vmem:[#allocation9 + $0x728] sm:$0xff]
    %v1473 = vld [vmem:[#allocation9 + $0x730] sm:$0xff]
    %v1474 = vld [vmem:[#allocation9 + $0x738] sm:$0xff]
    %v1475 = vld [vmem:[#allocation9 + $0x740] sm:$0xff]
    %v1476 = vld [vmem:[#allocation9 + $0x748] sm:$0xff]
    %v1477 = vld [vmem:[#allocation9 + $0x750] sm:$0xff]
    %v1478 = vld [vmem:[#allocation9 + $0x758] sm:$0xff]
    %v1479 = vld [vmem:[#allocation9 + $0x760] sm:$0xff]
    %v1480 = vld [vmem:[#allocation9 + $0x768] sm:$0xff]
    %v1481 = vld [vmem:[#allocation9 + $0x770] sm:$0xff]
    %v1482 = vld [vmem:[#allocation9 + $0x778] sm:$0xff]
    %v1483 = vld [vmem:[#allocation9 + $0x780] sm:$0xff]
    %v1484 = vld [vmem:[#allocation9 + $0x788] sm:$0xff]
    %v1485 = vld [vmem:[#allocation9 + $0x790] sm:$0xff]
    %v1486 = vld [vmem:[#allocation9 + $0x798] sm:$0xff]
    %v1487 = vld [vmem:[#allocation9 + $0x7a0] sm:$0xff]
    %v1488 = vld [vmem:[#allocation9 + $0x7a8] sm:$0xff]
    %v1489 = vld [vmem:[#allocation9 + $0x7b0] sm:$0xff]
    %v1490 = vld [vmem:[#allocation9 + $0x7b8] sm:$0xff]
    %v1491 = vld [vmem:[#allocation9 + $0x7c0] sm:$0xff]
    %v1492 = vld [vmem:[#allocation9 + $0x7c8] sm:$0xff]
    %v1493 = vld [vmem:[#allocation9 + $0x7d0] sm:$0xff]
    %v1494 = vld [vmem:[#allocation9 + $0x7d8] sm:$0xff]
    %v1495 = vld [vmem:[#allocation9 + $0x7e0] sm:$0xff]
    %v1496 = vld [vmem:[#allocation9 + $0x7e8] sm:$0xff]
    %v1497 = vld [vmem:[#allocation9 + $0x7f0] sm:$0xff]
    %v1498 = vld [vmem:[#allocation9 + $0x7f8] sm:$0xff]
    %v1755 = vunpack.c.l.b16 %v1243
    %v1756 = vunpack.c.h.b16 %v1243
    %v1757 = vunpack.c.l.b16 %v1244
    %v1758 = vunpack.c.h.b16 %v1244
    %v1759 = vunpack.c.l.b16 %v1245
    %v1760 = vunpack.c.h.b16 %v1245
    %v1761 = vunpack.c.l.b16 %v1246
    %v1762 = vunpack.c.h.b16 %v1246
    %v1763 = vunpack.c.l.b16 %v1247
    %v1764 = vunpack.c.h.b16 %v1247
    %v1765 = vunpack.c.l.b16 %v1248
    %v1766 = vunpack.c.h.b16 %v1248
    %v1767 = vunpack.c.l.b16 %v1249
    %v1768 = vunpack.c.h.b16 %v1249
    %v1769 = vunpack.c.l.b16 %v1250
    %v1770 = vunpack.c.h.b16 %v1250
    %v1771 = vunpack.c.l.b16 %v1251
    %v1772 = vunpack.c.h.b16 %v1251
    %v1773 = vunpack.c.l.b16 %v1252
    %v1774 = vunpack.c.h.b16 %v1252
    %v1775 = vunpack.c.l.b16 %v1253
    %v1776 = vunpack.c.h.b16 %v1253
    %v1777 = vunpack.c.l.b16 %v1254
    %v1778 = vunpack.c.h.b16 %v1254
    %v1779 = vunpack.c.l.b16 %v1255
    %v1780 = vunpack.c.h.b16 %v1255
    %v1781 = vunpack.c.l.b16 %v1256
    %v1782 = vunpack.c.h.b16 %v1256
    %v1783 = vunpack.c.l.b16 %v1257
    %v1784 = vunpack.c.h.b16 %v1257
    %v1785 = vunpack.c.l.b16 %v1258
    %v1786 = vunpack.c.h.b16 %v1258
    %v1787 = vunpack.c.l.b16 %v1259
    %v1788 = vunpack.c.h.b16 %v1259
    %v1789 = vunpack.c.l.b16 %v1260
    %v1790 = vunpack.c.h.b16 %v1260
    %v1791 = vunpack.c.l.b16 %v1261
    %v1792 = vunpack.c.h.b16 %v1261
    %v1793 = vunpack.c.l.b16 %v1262
    %v1794 = vunpack.c.h.b16 %v1262
    %v1795 = vunpack.c.l.b16 %v1263
    %v1796 = vunpack.c.h.b16 %v1263
    %v1797 = vunpack.c.l.b16 %v1264
    %v1798 = vunpack.c.h.b16 %v1264
    %v1799 = vunpack.c.l.b16 %v1265
    %v1800 = vunpack.c.h.b16 %v1265
    %v1801 = vunpack.c.l.b16 %v1266
    %v1802 = vunpack.c.h.b16 %v1266
    %v1803 = vunpack.c.l.b16 %v1267
    %v1804 = vunpack.c.h.b16 %v1267
    %v1805 = vunpack.c.l.b16 %v1268
    %v1806 = vunpack.c.h.b16 %v1268
    %v1807 = vunpack.c.l.b16 %v1269
    %v1808 = vunpack.c.h.b16 %v1269
    %v1809 = vunpack.c.l.b16 %v1270
    %v1810 = vunpack.c.h.b16 %v1270
    %v1811 = vunpack.c.l.b16 %v1271
    %v1812 = vunpack.c.h.b16 %v1271
    %v1813 = vunpack.c.l.b16 %v1272
    %v1814 = vunpack.c.h.b16 %v1272
    %v1815 = vunpack.c.l.b16 %v1273
    %v1816 = vunpack.c.h.b16 %v1273
    %v1817 = vunpack.c.l.b16 %v1274
    %v1818 = vunpack.c.h.b16 %v1274
    %v1819 = vunpack.c.l.b16 %v1275
    %v1820 = vunpack.c.h.b16 %v1275
    %v1821 = vunpack.c.l.b16 %v1276
    %v1822 = vunpack.c.h.b16 %v1276
    %v1823 = vunpack.c.l.b16 %v1277
    %v1824 = vunpack.c.h.b16 %v1277
    %v1825 = vunpack.c.l.b16 %v1278
    %v1826 = vunpack.c.h.b16 %v1278
    %v1827 = vunpack.c.l.b16 %v1279
    %v1828 = vunpack.c.h.b16 %v1279
    %v1829 = vunpack.c.l.b16 %v1280
    %v1830 = vunpack.c.h.b16 %v1280
    %v1831 = vunpack.c.l.b16 %v1281
    %v1832 = vunpack.c.h.b16 %v1281
    %v1833 = vunpack.c.l.b16 %v1282
    %v1834 = vunpack.c.h.b16 %v1282
    %v1835 = vunpack.c.l.b16 %v1283
    %v1836 = vunpack.c.h.b16 %v1283
    %v1837 = vunpack.c.l.b16 %v1284
    %v1838 = vunpack.c.h.b16 %v1284
    %v1839 = vunpack.c.l.b16 %v1285
    %v1840 = vunpack.c.h.b16 %v1285
    %v1841 = vunpack.c.l.b16 %v1286
    %v1842 = vunpack.c.h.b16 %v1286
    %v1843 = vunpack.c.l.b16 %v1287
    %v1844 = vunpack.c.h.b16 %v1287
    %v1845 = vunpack.c.l.b16 %v1288
    %v1846 = vunpack.c.h.b16 %v1288
    %v1847 = vunpack.c.l.b16 %v1289
    %v1848 = vunpack.c.h.b16 %v1289
    %v1849 = vunpack.c.l.b16 %v1290
    %v1850 = vunpack.c.h.b16 %v1290
    %v1851 = vunpack.c.l.b16 %v1291
    %v1852 = vunpack.c.h.b16 %v1291
    %v1853 = vunpack.c.l.b16 %v1292
    %v1854 = vunpack.c.h.b16 %v1292
    %v1855 = vunpack.c.l.b16 %v1293
    %v1856 = vunpack.c.h.b16 %v1293
    %v1857 = vunpack.c.l.b16 %v1294
    %v1858 = vunpack.c.h.b16 %v1294
    %v1859 = vunpack.c.l.b16 %v1295
    %v1860 = vunpack.c.h.b16 %v1295
    %v1861 = vunpack.c.l.b16 %v1296
    %v1862 = vunpack.c.h.b16 %v1296
    %v1863 = vunpack.c.l.b16 %v1297
    %v1864 = vunpack.c.h.b16 %v1297
    %v1865 = vunpack.c.l.b16 %v1298
    %v1866 = vunpack.c.h.b16 %v1298
    %v1867 = vunpack.c.l.b16 %v1299
    %v1868 = vunpack.c.h.b16 %v1299
    %v1869 = vunpack.c.l.b16 %v1300
    %v1870 = vunpack.c.h.b16 %v1300
    %v1871 = vunpack.c.l.b16 %v1301
    %v1872 = vunpack.c.h.b16 %v1301
    %v1873 = vunpack.c.l.b16 %v1302
    %v1874 = vunpack.c.h.b16 %v1302
    %v1875 = vunpack.c.l.b16 %v1303
    %v1876 = vunpack.c.h.b16 %v1303
    %v1877 = vunpack.c.l.b16 %v1304
    %v1878 = vunpack.c.h.b16 %v1304
    %v1879 = vunpack.c.l.b16 %v1305
    %v1880 = vunpack.c.h.b16 %v1305
    %v1881 = vunpack.c.l.b16 %v1306
    %v1882 = vunpack.c.h.b16 %v1306
    %v1883 = vunpack.c.l.b16 %v1307
    %v1884 = vunpack.c.h.b16 %v1307
    %v1885 = vunpack.c.l.b16 %v1308
    %v1886 = vunpack.c.h.b16 %v1308
    %v1887 = vunpack.c.l.b16 %v1309
    %v1888 = vunpack.c.h.b16 %v1309
    %v1889 = vunpack.c.l.b16 %v1310
    %v1890 = vunpack.c.h.b16 %v1310
    %v1891 = vunpack.c.l.b16 %v1311
    %v1892 = vunpack.c.h.b16 %v1311
    %v1893 = vunpack.c.l.b16 %v1312
    %v1894 = vunpack.c.h.b16 %v1312
    %v1895 = vunpack.c.l.b16 %v1313
    %v1896 = vunpack.c.h.b16 %v1313
    %v1897 = vunpack.c.l.b16 %v1314
    %v1898 = vunpack.c.h.b16 %v1314
    %v1899 = vunpack.c.l.b16 %v1315
    %v1900 = vunpack.c.h.b16 %v1315
    %v1901 = vunpack.c.l.b16 %v1316
    %v1902 = vunpack.c.h.b16 %v1316
    %v1903 = vunpack.c.l.b16 %v1317
    %v1904 = vunpack.c.h.b16 %v1317
    %v1905 = vunpack.c.l.b16 %v1318
    %v1906 = vunpack.c.h.b16 %v1318
    %v1907 = vunpack.c.l.b16 %v1319
    %v1908 = vunpack.c.h.b16 %v1319
    %v1909 = vunpack.c.l.b16 %v1320
    %v1910 = vunpack.c.h.b16 %v1320
    %v1911 = vunpack.c.l.b16 %v1321
    %v1912 = vunpack.c.h.b16 %v1321
    %v1913 = vunpack.c.l.b16 %v1322
    %v1914 = vunpack.c.h.b16 %v1322
    %v1915 = vunpack.c.l.b16 %v1323
    %v1916 = vunpack.c.h.b16 %v1323
    %v1917 = vunpack.c.l.b16 %v1324
    %v1918 = vunpack.c.h.b16 %v1324
    %v1919 = vunpack.c.l.b16 %v1325
    %v1920 = vunpack.c.h.b16 %v1325
    %v1921 = vunpack.c.l.b16 %v1326
    %v1922 = vunpack.c.h.b16 %v1326
    %v1923 = vunpack.c.l.b16 %v1327
    %v1924 = vunpack.c.h.b16 %v1327
    %v1925 = vunpack.c.l.b16 %v1328
    %v1926 = vunpack.c.h.b16 %v1328
    %v1927 = vunpack.c.l.b16 %v1329
    %v1928 = vunpack.c.h.b16 %v1329
    %v1929 = vunpack.c.l.b16 %v1330
    %v1930 = vunpack.c.h.b16 %v1330
    %v1931 = vunpack.c.l.b16 %v1331
    %v1932 = vunpack.c.h.b16 %v1331
    %v1933 = vunpack.c.l.b16 %v1332
    %v1934 = vunpack.c.h.b16 %v1332
    %v1935 = vunpack.c.l.b16 %v1333
    %v1936 = vunpack.c.h.b16 %v1333
    %v1937 = vunpack.c.l.b16 %v1334
    %v1938 = vunpack.c.h.b16 %v1334
    %v1939 = vunpack.c.l.b16 %v1335
    %v1940 = vunpack.c.h.b16 %v1335
    %v1941 = vunpack.c.l.b16 %v1336
    %v1942 = vunpack.c.h.b16 %v1336
    %v1943 = vunpack.c.l.b16 %v1337
    %v1944 = vunpack.c.h.b16 %v1337
    %v1945 = vunpack.c.l.b16 %v1338
    %v1946 = vunpack.c.h.b16 %v1338
    %v1947 = vunpack.c.l.b16 %v1339
    %v1948 = vunpack.c.h.b16 %v1339
    %v1949 = vunpack.c.l.b16 %v1340
    %v1950 = vunpack.c.h.b16 %v1340
    %v1951 = vunpack.c.l.b16 %v1341
    %v1952 = vunpack.c.h.b16 %v1341
    %v1953 = vunpack.c.l.b16 %v1342
    %v1954 = vunpack.c.h.b16 %v1342
    %v1955 = vunpack.c.l.b16 %v1343
    %v1956 = vunpack.c.h.b16 %v1343
    %v1957 = vunpack.c.l.b16 %v1344
    %v1958 = vunpack.c.h.b16 %v1344
    %v1959 = vunpack.c.l.b16 %v1345
    %v1960 = vunpack.c.h.b16 %v1345
    %v1961 = vunpack.c.l.b16 %v1346
    %v1962 = vunpack.c.h.b16 %v1346
    %v1963 = vunpack.c.l.b16 %v1347
    %v1964 = vunpack.c.h.b16 %v1347
    %v1965 = vunpack.c.l.b16 %v1348
    %v1966 = vunpack.c.h.b16 %v1348
    %v1967 = vunpack.c.l.b16 %v1349
    %v1968 = vunpack.c.h.b16 %v1349
    %v1969 = vunpack.c.l.b16 %v1350
    %v1970 = vunpack.c.h.b16 %v1350
    %v1971 = vunpack.c.l.b16 %v1351
    %v1972 = vunpack.c.h.b16 %v1351
    %v1973 = vunpack.c.l.b16 %v1352
    %v1974 = vunpack.c.h.b16 %v1352
    %v1975 = vunpack.c.l.b16 %v1353
    %v1976 = vunpack.c.h.b16 %v1353
    %v1977 = vunpack.c.l.b16 %v1354
    %v1978 = vunpack.c.h.b16 %v1354
    %v1979 = vunpack.c.l.b16 %v1355
    %v1980 = vunpack.c.h.b16 %v1355
    %v1981 = vunpack.c.l.b16 %v1356
    %v1982 = vunpack.c.h.b16 %v1356
    %v1983 = vunpack.c.l.b16 %v1357
    %v1984 = vunpack.c.h.b16 %v1357
    %v1985 = vunpack.c.l.b16 %v1358
    %v1986 = vunpack.c.h.b16 %v1358
    %v1987 = vunpack.c.l.b16 %v1359
    %v1988 = vunpack.c.h.b16 %v1359
    %v1989 = vunpack.c.l.b16 %v1360
    %v1990 = vunpack.c.h.b16 %v1360
    %v1991 = vunpack.c.l.b16 %v1361
    %v1992 = vunpack.c.h.b16 %v1361
    %v1993 = vunpack.c.l.b16 %v1362
    %v1994 = vunpack.c.h.b16 %v1362
    %v1995 = vunpack.c.l.b16 %v1363
    %v1996 = vunpack.c.h.b16 %v1363
    %v1997 = vunpack.c.l.b16 %v1364
    %v1998 = vunpack.c.h.b16 %v1364
    %v1999 = vunpack.c.l.b16 %v1365
    %v2000 = vunpack.c.h.b16 %v1365
    %v2001 = vunpack.c.l.b16 %v1366
    %v2002 = vunpack.c.h.b16 %v1366
    %v2003 = vunpack.c.l.b16 %v1367
    %v2004 = vunpack.c.h.b16 %v1367
    %v2005 = vunpack.c.l.b16 %v1368
    %v2006 = vunpack.c.h.b16 %v1368
    %v2007 = vunpack.c.l.b16 %v1369
    %v2008 = vunpack.c.h.b16 %v1369
    %v2009 = vunpack.c.l.b16 %v1370
    %v2010 = vunpack.c.h.b16 %v1370
    %v2011 = vunpack.c.l.b16 %v1371
    %v2012 = vunpack.c.h.b16 %v1371
    %v2013 = vunpack.c.l.b16 %v1372
    %v2014 = vunpack.c.h.b16 %v1372
    %v2015 = vunpack.c.l.b16 %v1373
    %v2016 = vunpack.c.h.b16 %v1373
    %v2017 = vunpack.c.l.b16 %v1374
    %v2018 = vunpack.c.h.b16 %v1374
    %v2019 = vunpack.c.l.b16 %v1375
    %v2020 = vunpack.c.h.b16 %v1375
    %v2021 = vunpack.c.l.b16 %v1376
    %v2022 = vunpack.c.h.b16 %v1376
    %v2023 = vunpack.c.l.b16 %v1377
    %v2024 = vunpack.c.h.b16 %v1377
    %v2025 = vunpack.c.l.b16 %v1378
    %v2026 = vunpack.c.h.b16 %v1378
    %v2027 = vunpack.c.l.b16 %v1379
    %v2028 = vunpack.c.h.b16 %v1379
    %v2029 = vunpack.c.l.b16 %v1380
    %v2030 = vunpack.c.h.b16 %v1380
    %v2031 = vunpack.c.l.b16 %v1381
    %v2032 = vunpack.c.h.b16 %v1381
    %v2033 = vunpack.c.l.b16 %v1382
    %v2034 = vunpack.c.h.b16 %v1382
    %v2035 = vunpack.c.l.b16 %v1383
    %v2036 = vunpack.c.h.b16 %v1383
    %v2037 = vunpack.c.l.b16 %v1384
    %v2038 = vunpack.c.h.b16 %v1384
    %v2039 = vunpack.c.l.b16 %v1385
    %v2040 = vunpack.c.h.b16 %v1385
    %v2041 = vunpack.c.l.b16 %v1386
    %v2042 = vunpack.c.h.b16 %v1386
    %v2043 = vunpack.c.l.b16 %v1387
    %v2044 = vunpack.c.h.b16 %v1387
    %v2045 = vunpack.c.l.b16 %v1388
    %v2046 = vunpack.c.h.b16 %v1388
    %v2047 = vunpack.c.l.b16 %v1389
    %v2048 = vunpack.c.h.b16 %v1389
    %v2049 = vunpack.c.l.b16 %v1390
    %v2050 = vunpack.c.h.b16 %v1390
    %v2051 = vunpack.c.l.b16 %v1391
    %v2052 = vunpack.c.h.b16 %v1391
    %v2053 = vunpack.c.l.b16 %v1392
    %v2054 = vunpack.c.h.b16 %v1392
    %v2055 = vunpack.c.l.b16 %v1393
    %v2056 = vunpack.c.h.b16 %v1393
    %v2057 = vunpack.c.l.b16 %v1394
    %v2058 = vunpack.c.h.b16 %v1394
    %v2059 = vunpack.c.l.b16 %v1395
    %v2060 = vunpack.c.h.b16 %v1395
    %v2061 = vunpack.c.l.b16 %v1396
    %v2062 = vunpack.c.h.b16 %v1396
    %v2063 = vunpack.c.l.b16 %v1397
    %v2064 = vunpack.c.h.b16 %v1397
    %v2065 = vunpack.c.l.b16 %v1398
    %v2066 = vunpack.c.h.b16 %v1398
    %v2067 = vunpack.c.l.b16 %v1399
    %v2068 = vunpack.c.h.b16 %v1399
    %v2069 = vunpack.c.l.b16 %v1400
    %v2070 = vunpack.c.h.b16 %v1400
    %v2071 = vunpack.c.l.b16 %v1401
    %v2072 = vunpack.c.h.b16 %v1401
    %v2073 = vunpack.c.l.b16 %v1402
    %v2074 = vunpack.c.h.b16 %v1402
    %v2075 = vunpack.c.l.b16 %v1403
    %v2076 = vunpack.c.h.b16 %v1403
    %v2077 = vunpack.c.l.b16 %v1404
    %v2078 = vunpack.c.h.b16 %v1404
    %v2079 = vunpack.c.l.b16 %v1405
    %v2080 = vunpack.c.h.b16 %v1405
    %v2081 = vunpack.c.l.b16 %v1406
    %v2082 = vunpack.c.h.b16 %v1406
    %v2083 = vunpack.c.l.b16 %v1407
    %v2084 = vunpack.c.h.b16 %v1407
    %v2085 = vunpack.c.l.b16 %v1408
    %v2086 = vunpack.c.h.b16 %v1408
    %v2087 = vunpack.c.l.b16 %v1409
    %v2088 = vunpack.c.h.b16 %v1409
    %v2089 = vunpack.c.l.b16 %v1410
    %v2090 = vunpack.c.h.b16 %v1410
    %v2091 = vunpack.c.l.b16 %v1411
    %v2092 = vunpack.c.h.b16 %v1411
    %v2093 = vunpack.c.l.b16 %v1412
    %v2094 = vunpack.c.h.b16 %v1412
    %v2095 = vunpack.c.l.b16 %v1413
    %v2096 = vunpack.c.h.b16 %v1413
    %v2097 = vunpack.c.l.b16 %v1414
    %v2098 = vunpack.c.h.b16 %v1414
    %v2099 = vunpack.c.l.b16 %v1415
    %v2100 = vunpack.c.h.b16 %v1415
    %v2101 = vunpack.c.l.b16 %v1416
    %v2102 = vunpack.c.h.b16 %v1416
    %v2103 = vunpack.c.l.b16 %v1417
    %v2104 = vunpack.c.h.b16 %v1417
    %v2105 = vunpack.c.l.b16 %v1418
    %v2106 = vunpack.c.h.b16 %v1418
    %v2107 = vunpack.c.l.b16 %v1419
    %v2108 = vunpack.c.h.b16 %v1419
    %v2109 = vunpack.c.l.b16 %v1420
    %v2110 = vunpack.c.h.b16 %v1420
    %v2111 = vunpack.c.l.b16 %v1421
    %v2112 = vunpack.c.h.b16 %v1421
    %v2113 = vunpack.c.l.b16 %v1422
    %v2114 = vunpack.c.h.b16 %v1422
    %v2115 = vunpack.c.l.b16 %v1423
    %v2116 = vunpack.c.h.b16 %v1423
    %v2117 = vunpack.c.l.b16 %v1424
    %v2118 = vunpack.c.h.b16 %v1424
    %v2119 = vunpack.c.l.b16 %v1425
    %v2120 = vunpack.c.h.b16 %v1425
    %v2121 = vunpack.c.l.b16 %v1426
    %v2122 = vunpack.c.h.b16 %v1426
    %v2123 = vunpack.c.l.b16 %v1427
    %v2124 = vunpack.c.h.b16 %v1427
    %v2125 = vunpack.c.l.b16 %v1428
    %v2126 = vunpack.c.h.b16 %v1428
    %v2127 = vunpack.c.l.b16 %v1429
    %v2128 = vunpack.c.h.b16 %v1429
    %v2129 = vunpack.c.l.b16 %v1430
    %v2130 = vunpack.c.h.b16 %v1430
    %v2131 = vunpack.c.l.b16 %v1431
    %v2132 = vunpack.c.h.b16 %v1431
    %v2133 = vunpack.c.l.b16 %v1432
    %v2134 = vunpack.c.h.b16 %v1432
    %v2135 = vunpack.c.l.b16 %v1433
    %v2136 = vunpack.c.h.b16 %v1433
    %v2137 = vunpack.c.l.b16 %v1434
    %v2138 = vunpack.c.h.b16 %v1434
    %v2139 = vunpack.c.l.b16 %v1435
    %v2140 = vunpack.c.h.b16 %v1435
    %v2141 = vunpack.c.l.b16 %v1436
    %v2142 = vunpack.c.h.b16 %v1436
    %v2143 = vunpack.c.l.b16 %v1437
    %v2144 = vunpack.c.h.b16 %v1437
    %v2145 = vunpack.c.l.b16 %v1438
    %v2146 = vunpack.c.h.b16 %v1438
    %v2147 = vunpack.c.l.b16 %v1439
    %v2148 = vunpack.c.h.b16 %v1439
    %v2149 = vunpack.c.l.b16 %v1440
    %v2150 = vunpack.c.h.b16 %v1440
    %v2151 = vunpack.c.l.b16 %v1441
    %v2152 = vunpack.c.h.b16 %v1441
    %v2153 = vunpack.c.l.b16 %v1442
    %v2154 = vunpack.c.h.b16 %v1442
    %v2155 = vunpack.c.l.b16 %v1443
    %v2156 = vunpack.c.h.b16 %v1443
    %v2157 = vunpack.c.l.b16 %v1444
    %v2158 = vunpack.c.h.b16 %v1444
    %v2159 = vunpack.c.l.b16 %v1445
    %v2160 = vunpack.c.h.b16 %v1445
    %v2161 = vunpack.c.l.b16 %v1446
    %v2162 = vunpack.c.h.b16 %v1446
    %v2163 = vunpack.c.l.b16 %v1447
    %v2164 = vunpack.c.h.b16 %v1447
    %v2165 = vunpack.c.l.b16 %v1448
    %v2166 = vunpack.c.h.b16 %v1448
    %v2167 = vunpack.c.l.b16 %v1449
    %v2168 = vunpack.c.h.b16 %v1449
    %v2169 = vunpack.c.l.b16 %v1450
    %v2170 = vunpack.c.h.b16 %v1450
    %v2171 = vunpack.c.l.b16 %v1451
    %v2172 = vunpack.c.h.b16 %v1451
    %v2173 = vunpack.c.l.b16 %v1452
    %v2174 = vunpack.c.h.b16 %v1452
    %v2175 = vunpack.c.l.b16 %v1453
    %v2176 = vunpack.c.h.b16 %v1453
    %v2177 = vunpack.c.l.b16 %v1454
    %v2178 = vunpack.c.h.b16 %v1454
    %v2179 = vunpack.c.l.b16 %v1455
    %v2180 = vunpack.c.h.b16 %v1455
    %v2181 = vunpack.c.l.b16 %v1456
    %v2182 = vunpack.c.h.b16 %v1456
    %v2183 = vunpack.c.l.b16 %v1457
    %v2184 = vunpack.c.h.b16 %v1457
    %v2185 = vunpack.c.l.b16 %v1458
    %v2186 = vunpack.c.h.b16 %v1458
    %v2187 = vunpack.c.l.b16 %v1459
    %v2188 = vunpack.c.h.b16 %v1459
    %v2189 = vunpack.c.l.b16 %v1460
    %v2190 = vunpack.c.h.b16 %v1460
    %v2191 = vunpack.c.l.b16 %v1461
    %v2192 = vunpack.c.h.b16 %v1461
    %v2193 = vunpack.c.l.b16 %v1462
    %v2194 = vunpack.c.h.b16 %v1462
    %v2195 = vunpack.c.l.b16 %v1463
    %v2196 = vunpack.c.h.b16 %v1463
    %v2197 = vunpack.c.l.b16 %v1464
    %v2198 = vunpack.c.h.b16 %v1464
    %v2199 = vunpack.c.l.b16 %v1465
    %v2200 = vunpack.c.h.b16 %v1465
    %v2201 = vunpack.c.l.b16 %v1466
    %v2202 = vunpack.c.h.b16 %v1466
    %v2203 = vunpack.c.l.b16 %v1467
    %v2204 = vunpack.c.h.b16 %v1467
    %v2205 = vunpack.c.l.b16 %v1468
    %v2206 = vunpack.c.h.b16 %v1468
    %v2207 = vunpack.c.l.b16 %v1469
    %v2208 = vunpack.c.h.b16 %v1469
    %v2209 = vunpack.c.l.b16 %v1470
    %v2210 = vunpack.c.h.b16 %v1470
    %v2211 = vunpack.c.l.b16 %v1471
    %v2212 = vunpack.c.h.b16 %v1471
    %v2213 = vunpack.c.l.b16 %v1472
    %v2214 = vunpack.c.h.b16 %v1472
    %v2215 = vunpack.c.l.b16 %v1473
    %v2216 = vunpack.c.h.b16 %v1473
    %v2217 = vunpack.c.l.b16 %v1474
    %v2218 = vunpack.c.h.b16 %v1474
    %v2219 = vunpack.c.l.b16 %v1475
    %v2220 = vunpack.c.h.b16 %v1475
    %v2221 = vunpack.c.l.b16 %v1476
    %v2222 = vunpack.c.h.b16 %v1476
    %v2223 = vunpack.c.l.b16 %v1477
    %v2224 = vunpack.c.h.b16 %v1477
    %v2225 = vunpack.c.l.b16 %v1478
    %v2226 = vunpack.c.h.b16 %v1478
    %v2227 = vunpack.c.l.b16 %v1479
    %v2228 = vunpack.c.h.b16 %v1479
    %v2229 = vunpack.c.l.b16 %v1480
    %v2230 = vunpack.c.h.b16 %v1480
    %v2231 = vunpack.c.l.b16 %v1481
    %v2232 = vunpack.c.h.b16 %v1481
    %v2233 = vunpack.c.l.b16 %v1482
    %v2234 = vunpack.c.h.b16 %v1482
    %v2235 = vunpack.c.l.b16 %v1483
    %v2236 = vunpack.c.h.b16 %v1483
    %v2237 = vunpack.c.l.b16 %v1484
    %v2238 = vunpack.c.h.b16 %v1484
    %v2239 = vunpack.c.l.b16 %v1485
    %v2240 = vunpack.c.h.b16 %v1485
    %v2241 = vunpack.c.l.b16 %v1486
    %v2242 = vunpack.c.h.b16 %v1486
    %v2243 = vunpack.c.l.b16 %v1487
    %v2244 = vunpack.c.h.b16 %v1487
    %v2245 = vunpack.c.l.b16 %v1488
    %v2246 = vunpack.c.h.b16 %v1488
    %v2247 = vunpack.c.l.b16 %v1489
    %v2248 = vunpack.c.h.b16 %v1489
    %v2249 = vunpack.c.l.b16 %v1490
    %v2250 = vunpack.c.h.b16 %v1490
    %v2251 = vunpack.c.l.b16 %v1491
    %v2252 = vunpack.c.h.b16 %v1491
    %v2253 = vunpack.c.l.b16 %v1492
    %v2254 = vunpack.c.h.b16 %v1492
    %v2255 = vunpack.c.l.b16 %v1493
    %v2256 = vunpack.c.h.b16 %v1493
    %v2257 = vunpack.c.l.b16 %v1494
    %v2258 = vunpack.c.h.b16 %v1494
    %v2259 = vunpack.c.l.b16 %v1495
    %v2260 = vunpack.c.h.b16 %v1495
    %v2261 = vunpack.c.l.b16 %v1496
    %v2262 = vunpack.c.h.b16 %v1496
    %v2263 = vunpack.c.l.b16 %v1497
    %v2264 = vunpack.c.h.b16 %v1497
    %v2265 = vunpack.c.l.b16 %v1498
    %v2266 = vunpack.c.h.b16 %v1498
    %v2267 = vpack.c.b16 %v1763, %v1755
    %v2268 = vpack.c.b16 %v1764, %v1756
    %v2269 = vpack.c.b16 %v1765, %v1757
    %v2270 = vpack.c.b16 %v1766, %v1758
    %v2271 = vpack.c.b16 %v1767, %v1759
    %v2272 = vpack.c.b16 %v1768, %v1760
    %v2273 = vpack.c.b16 %v1769, %v1761
    %v2274 = vpack.c.b16 %v1770, %v1762
    %v2275 = vpack.c.b16 %v1779, %v1771
    %v2276 = vpack.c.b16 %v1780, %v1772
    %v2277 = vpack.c.b16 %v1781, %v1773
    %v2278 = vpack.c.b16 %v1782, %v1774
    %v2279 = vpack.c.b16 %v1783, %v1775
    %v2280 = vpack.c.b16 %v1784, %v1776
    %v2281 = vpack.c.b16 %v1785, %v1777
    %v2282 = vpack.c.b16 %v1786, %v1778
    %v2283 = vpack.c.b16 %v1795, %v1787
    %v2284 = vpack.c.b16 %v1796, %v1788
    %v2285 = vpack.c.b16 %v1797, %v1789
    %v2286 = vpack.c.b16 %v1798, %v1790
    %v2287 = vpack.c.b16 %v1799, %v1791
    %v2288 = vpack.c.b16 %v1800, %v1792
    %v2289 = vpack.c.b16 %v1801, %v1793
    %v2290 = vpack.c.b16 %v1802, %v1794
    %v2291 = vpack.c.b16 %v1811, %v1803
    %v2292 = vpack.c.b16 %v1812, %v1804
    %v2293 = vpack.c.b16 %v1813, %v1805
    %v2294 = vpack.c.b16 %v1814, %v1806
    %v2295 = vpack.c.b16 %v1815, %v1807
    %v2296 = vpack.c.b16 %v1816, %v1808
    %v2297 = vpack.c.b16 %v1817, %v1809
    %v2298 = vpack.c.b16 %v1818, %v1810
    %v2299 = vpack.c.b16 %v1827, %v1819
    %v2300 = vpack.c.b16 %v1828, %v1820
    %v2301 = vpack.c.b16 %v1829, %v1821
    %v2302 = vpack.c.b16 %v1830, %v1822
    %v2303 = vpack.c.b16 %v1831, %v1823
    %v2304 = vpack.c.b16 %v1832, %v1824
    %v2305 = vpack.c.b16 %v1833, %v1825
    %v2306 = vpack.c.b16 %v1834, %v1826
    %v2307 = vpack.c.b16 %v1843, %v1835
    %v2308 = vpack.c.b16 %v1844, %v1836
    %v2309 = vpack.c.b16 %v1845, %v1837
    %v2310 = vpack.c.b16 %v1846, %v1838
    %v2311 = vpack.c.b16 %v1847, %v1839
    %v2312 = vpack.c.b16 %v1848, %v1840
    %v2313 = vpack.c.b16 %v1849, %v1841
    %v2314 = vpack.c.b16 %v1850, %v1842
    %v2315 = vpack.c.b16 %v1859, %v1851
    %v2316 = vpack.c.b16 %v1860, %v1852
    %v2317 = vpack.c.b16 %v1861, %v1853
    %v2318 = vpack.c.b16 %v1862, %v1854
    %v2319 = vpack.c.b16 %v1863, %v1855
    %v2320 = vpack.c.b16 %v1864, %v1856
    %v2321 = vpack.c.b16 %v1865, %v1857
    %v2322 = vpack.c.b16 %v1866, %v1858
    %v2323 = vpack.c.b16 %v1875, %v1867
    %v2324 = vpack.c.b16 %v1876, %v1868
    %v2325 = vpack.c.b16 %v1877, %v1869
    %v2326 = vpack.c.b16 %v1878, %v1870
    %v2327 = vpack.c.b16 %v1879, %v1871
    %v2328 = vpack.c.b16 %v1880, %v1872
    %v2329 = vpack.c.b16 %v1881, %v1873
    %v2330 = vpack.c.b16 %v1882, %v1874
    %v2331 = vpack.c.b16 %v1891, %v1883
    %v2332 = vpack.c.b16 %v1892, %v1884
    %v2333 = vpack.c.b16 %v1893, %v1885
    %v2334 = vpack.c.b16 %v1894, %v1886
    %v2335 = vpack.c.b16 %v1895, %v1887
    %v2336 = vpack.c.b16 %v1896, %v1888
    %v2337 = vpack.c.b16 %v1897, %v1889
    %v2338 = vpack.c.b16 %v1898, %v1890
    %v2339 = vpack.c.b16 %v1907, %v1899
    %v2340 = vpack.c.b16 %v1908, %v1900
    %v2341 = vpack.c.b16 %v1909, %v1901
    %v2342 = vpack.c.b16 %v1910, %v1902
    %v2343 = vpack.c.b16 %v1911, %v1903
    %v2344 = vpack.c.b16 %v1912, %v1904
    %v2345 = vpack.c.b16 %v1913, %v1905
    %v2346 = vpack.c.b16 %v1914, %v1906
    %v2347 = vpack.c.b16 %v1923, %v1915
    %v2348 = vpack.c.b16 %v1924, %v1916
    %v2349 = vpack.c.b16 %v1925, %v1917
    %v2350 = vpack.c.b16 %v1926, %v1918
    %v2351 = vpack.c.b16 %v1927, %v1919
    %v2352 = vpack.c.b16 %v1928, %v1920
    %v2353 = vpack.c.b16 %v1929, %v1921
    %v2354 = vpack.c.b16 %v1930, %v1922
    %v2355 = vpack.c.b16 %v1939, %v1931
    %v2356 = vpack.c.b16 %v1940, %v1932
    %v2357 = vpack.c.b16 %v1941, %v1933
    %v2358 = vpack.c.b16 %v1942, %v1934
    %v2359 = vpack.c.b16 %v1943, %v1935
    %v2360 = vpack.c.b16 %v1944, %v1936
    %v2361 = vpack.c.b16 %v1945, %v1937
    %v2362 = vpack.c.b16 %v1946, %v1938
    %v2363 = vpack.c.b16 %v1955, %v1947
    %v2364 = vpack.c.b16 %v1956, %v1948
    %v2365 = vpack.c.b16 %v1957, %v1949
    %v2366 = vpack.c.b16 %v1958, %v1950
    %v2367 = vpack.c.b16 %v1959, %v1951
    %v2368 = vpack.c.b16 %v1960, %v1952
    %v2369 = vpack.c.b16 %v1961, %v1953
    %v2370 = vpack.c.b16 %v1962, %v1954
    %v2371 = vpack.c.b16 %v1971, %v1963
    %v2372 = vpack.c.b16 %v1972, %v1964
    %v2373 = vpack.c.b16 %v1973, %v1965
    %v2374 = vpack.c.b16 %v1974, %v1966
    %v2375 = vpack.c.b16 %v1975, %v1967
    %v2376 = vpack.c.b16 %v1976, %v1968
    %v2377 = vpack.c.b16 %v1977, %v1969
    %v2378 = vpack.c.b16 %v1978, %v1970
    %v2379 = vpack.c.b16 %v1987, %v1979
    %v2380 = vpack.c.b16 %v1988, %v1980
    %v2381 = vpack.c.b16 %v1989, %v1981
    %v2382 = vpack.c.b16 %v1990, %v1982
    %v2383 = vpack.c.b16 %v1991, %v1983
    %v2384 = vpack.c.b16 %v1992, %v1984
    %v2385 = vpack.c.b16 %v1993, %v1985
    %v2386 = vpack.c.b16 %v1994, %v1986
    %v2387 = vpack.c.b16 %v2003, %v1995
    %v2388 = vpack.c.b16 %v2004, %v1996
    %v2389 = vpack.c.b16 %v2005, %v1997
    %v2390 = vpack.c.b16 %v2006, %v1998
    %v2391 = vpack.c.b16 %v2007, %v1999
    %v2392 = vpack.c.b16 %v2008, %v2000
    %v2393 = vpack.c.b16 %v2009, %v2001
    %v2394 = vpack.c.b16 %v2010, %v2002
    %v2395 = vpack.c.b16 %v2019, %v2011
    %v2396 = vpack.c.b16 %v2020, %v2012
    %v2397 = vpack.c.b16 %v2021, %v2013
    %v2398 = vpack.c.b16 %v2022, %v2014
    %v2399 = vpack.c.b16 %v2023, %v2015
    %v2400 = vpack.c.b16 %v2024, %v2016
    %v2401 = vpack.c.b16 %v2025, %v2017
    %v2402 = vpack.c.b16 %v2026, %v2018
    %v2403 = vpack.c.b16 %v2035, %v2027
    %v2404 = vpack.c.b16 %v2036, %v2028
    %v2405 = vpack.c.b16 %v2037, %v2029
    %v2406 = vpack.c.b16 %v2038, %v2030
    %v2407 = vpack.c.b16 %v2039, %v2031
    %v2408 = vpack.c.b16 %v2040, %v2032
    %v2409 = vpack.c.b16 %v2041, %v2033
    %v2410 = vpack.c.b16 %v2042, %v2034
    %v2411 = vpack.c.b16 %v2051, %v2043
    %v2412 = vpack.c.b16 %v2052, %v2044
    %v2413 = vpack.c.b16 %v2053, %v2045
    %v2414 = vpack.c.b16 %v2054, %v2046
    %v2415 = vpack.c.b16 %v2055, %v2047
    %v2416 = vpack.c.b16 %v2056, %v2048
    %v2417 = vpack.c.b16 %v2057, %v2049
    %v2418 = vpack.c.b16 %v2058, %v2050
    %v2419 = vpack.c.b16 %v2067, %v2059
    %v2420 = vpack.c.b16 %v2068, %v2060
    %v2421 = vpack.c.b16 %v2069, %v2061
    %v2422 = vpack.c.b16 %v2070, %v2062
    %v2423 = vpack.c.b16 %v2071, %v2063
    %v2424 = vpack.c.b16 %v2072, %v2064
    %v2425 = vpack.c.b16 %v2073, %v2065
    %v2426 = vpack.c.b16 %v2074, %v2066
    %v2427 = vpack.c.b16 %v2083, %v2075
    %v2428 = vpack.c.b16 %v2084, %v2076
    %v2429 = vpack.c.b16 %v2085, %v2077
    %v2430 = vpack.c.b16 %v2086, %v2078
    %v2431 = vpack.c.b16 %v2087, %v2079
    %v2432 = vpack.c.b16 %v2088, %v2080
    %v2433 = vpack.c.b16 %v2089, %v2081
    %v2434 = vpack.c.b16 %v2090, %v2082
    %v2435 = vpack.c.b16 %v2099, %v2091
    %v2436 = vpack.c.b16 %v2100, %v2092
    %v2437 = vpack.c.b16 %v2101, %v2093
    %v2438 = vpack.c.b16 %v2102, %v2094
    %v2439 = vpack.c.b16 %v2103, %v2095
    %v2440 = vpack.c.b16 %v2104, %v2096
    %v2441 = vpack.c.b16 %v2105, %v2097
    %v2442 = vpack.c.b16 %v2106, %v2098
    %v2443 = vpack.c.b16 %v2115, %v2107
    %v2444 = vpack.c.b16 %v2116, %v2108
    %v2445 = vpack.c.b16 %v2117, %v2109
    %v2446 = vpack.c.b16 %v2118, %v2110
    %v2447 = vpack.c.b16 %v2119, %v2111
    %v2448 = vpack.c.b16 %v2120, %v2112
    %v2449 = vpack.c.b16 %v2121, %v2113
    %v2450 = vpack.c.b16 %v2122, %v2114
    %v2451 = vpack.c.b16 %v2131, %v2123
    %v2452 = vpack.c.b16 %v2132, %v2124
    %v2453 = vpack.c.b16 %v2133, %v2125
    %v2454 = vpack.c.b16 %v2134, %v2126
    %v2455 = vpack.c.b16 %v2135, %v2127
    %v2456 = vpack.c.b16 %v2136, %v2128
    %v2457 = vpack.c.b16 %v2137, %v2129
    %v2458 = vpack.c.b16 %v2138, %v2130
    %v2459 = vpack.c.b16 %v2147, %v2139
    %v2460 = vpack.c.b16 %v2148, %v2140
    %v2461 = vpack.c.b16 %v2149, %v2141
    %v2462 = vpack.c.b16 %v2150, %v2142
    %v2463 = vpack.c.b16 %v2151, %v2143
    %v2464 = vpack.c.b16 %v2152, %v2144
    %v2465 = vpack.c.b16 %v2153, %v2145
    %v2466 = vpack.c.b16 %v2154, %v2146
    %v2467 = vpack.c.b16 %v2163, %v2155
    %v2468 = vpack.c.b16 %v2164, %v2156
    %v2469 = vpack.c.b16 %v2165, %v2157
    %v2470 = vpack.c.b16 %v2166, %v2158
    %v2471 = vpack.c.b16 %v2167, %v2159
    %v2472 = vpack.c.b16 %v2168, %v2160
    %v2473 = vpack.c.b16 %v2169, %v2161
    %v2474 = vpack.c.b16 %v2170, %v2162
    %v2475 = vpack.c.b16 %v2179, %v2171
    %v2476 = vpack.c.b16 %v2180, %v2172
    %v2477 = vpack.c.b16 %v2181, %v2173
    %v2478 = vpack.c.b16 %v2182, %v2174
    %v2479 = vpack.c.b16 %v2183, %v2175
    %v2480 = vpack.c.b16 %v2184, %v2176
    %v2481 = vpack.c.b16 %v2185, %v2177
    %v2482 = vpack.c.b16 %v2186, %v2178
    %v2483 = vpack.c.b16 %v2195, %v2187
    %v2484 = vpack.c.b16 %v2196, %v2188
    %v2485 = vpack.c.b16 %v2197, %v2189
    %v2486 = vpack.c.b16 %v2198, %v2190
    %v2487 = vpack.c.b16 %v2199, %v2191
    %v2488 = vpack.c.b16 %v2200, %v2192
    %v2489 = vpack.c.b16 %v2201, %v2193
    %v2490 = vpack.c.b16 %v2202, %v2194
    %v2491 = vpack.c.b16 %v2211, %v2203
    %v2492 = vpack.c.b16 %v2212, %v2204
    %v2493 = vpack.c.b16 %v2213, %v2205
    %v2494 = vpack.c.b16 %v2214, %v2206
    %v2495 = vpack.c.b16 %v2215, %v2207
    %v2496 = vpack.c.b16 %v2216, %v2208
    %v2497 = vpack.c.b16 %v2217, %v2209
    %v2498 = vpack.c.b16 %v2218, %v2210
    %v2499 = vpack.c.b16 %v2227, %v2219
    %v2500 = vpack.c.b16 %v2228, %v2220
    %v2501 = vpack.c.b16 %v2229, %v2221
    %v2502 = vpack.c.b16 %v2230, %v2222
    %v2503 = vpack.c.b16 %v2231, %v2223
    %v2504 = vpack.c.b16 %v2232, %v2224
    %v2505 = vpack.c.b16 %v2233, %v2225
    %v2506 = vpack.c.b16 %v2234, %v2226
    %v2507 = vpack.c.b16 %v2243, %v2235
    %v2508 = vpack.c.b16 %v2244, %v2236
    %v2509 = vpack.c.b16 %v2245, %v2237
    %v2510 = vpack.c.b16 %v2246, %v2238
    %v2511 = vpack.c.b16 %v2247, %v2239
    %v2512 = vpack.c.b16 %v2248, %v2240
    %v2513 = vpack.c.b16 %v2249, %v2241
    %v2514 = vpack.c.b16 %v2250, %v2242
    %v2515 = vpack.c.b16 %v2259, %v2251
    %v2516 = vpack.c.b16 %v2260, %v2252
    %v2517 = vpack.c.b16 %v2261, %v2253
    %v2518 = vpack.c.b16 %v2262, %v2254
    %v2519 = vpack.c.b16 %v2263, %v2255
    %v2520 = vpack.c.b16 %v2264, %v2256
    %v2521 = vpack.c.b16 %v2265, %v2257
    %v2522 = vpack.c.b16 %v2266, %v2258
    %2779 = vmatprep.subr.bf16.mxu0 %v2324
    %2780 = vmatpush1.bf16.msra.mxu0 %v2323
    %2781 = vmatprep.subr.bf16.mxu0 %v2316
    %2782 = vmatpush1.bf16.msra.mxu0 %v2315
    %2783 = vmatprep.subr.bf16.mxu0 %v2308
    %2784 = vmatpush1.bf16.msra.mxu0 %v2307
    %2785 = vmatprep.subr.bf16.mxu0 %v2300
    %2786 = vmatpush1.bf16.msra.mxu0 %v2299
    %2787 = vmatprep.subr.bf16.mxu0 %v2292
    %2788 = vmatpush1.bf16.msra.mxu0 %v2291
    %2789 = vmatprep.subr.bf16.mxu0 %v2284
    %2790 = vmatpush1.bf16.msra.mxu0 %v2283
    %2791 = vmatprep.subr.bf16.mxu0 %v2276
    %2792 = vmatpush1.bf16.msra.mxu0 %v2275
    %2793 = vmatprep.subr.bf16.mxu0 %v2268
    %2794 = vmatpush1.bf16.msra.mxu0 %v2267
    %2795 = vmatprep.subr.bf16.mxu0 %v2388
    %2796 = vmatpush2.bf16.msra.mxu0 %v2387
    %2797 = vmatprep.subr.bf16.mxu0 %v2380
    %2798 = vmatpush2.bf16.msra.mxu0 %v2379
    %2799 = vmatprep.subr.bf16.mxu0 %v2372
    %2800 = vmatpush2.bf16.msra.mxu0 %v2371
    %2801 = vmatprep.subr.bf16.mxu0 %v2364
    %2802 = vmatpush2.bf16.msra.mxu0 %v2363
    %2803 = vmatprep.subr.bf16.mxu0 %v2356
    %2804 = vmatpush2.bf16.msra.mxu0 %v2355
    %2805 = vmatprep.subr.bf16.mxu0 %v2348
    %2806 = vmatpush2.bf16.msra.mxu0 %v2347
    %2807 = vmatprep.subr.bf16.mxu0 %v2340
    %2808 = vmatpush2.bf16.msra.mxu0 %v2339
    %2809 = vmatprep.subr.bf16.mxu0 %v2332
    %2810 = vmatpush2.bf16.msra.mxu0 %v2331
    %2811 = vmatprep.mubr.bf16.mxu0 %v1240
    %2812 = vmatmul.mubr.bf16.gmra.mxu0 %v1239
    %v2813 = vpop.f32.mrf.mxu0
    %v2814 = vadd.f32 0.0, %v2813
    %v2815 = vpop.f32.mrf.mxu0
    %v2816 = vadd.f32 0.0, %v2815
    %v2817 = vpop.f32.mrf.mxu0
    %v2818 = vpop.f32.mrf.mxu0
    %2819 = vdwg.mxu0
    %2820 = vmatprep.subr.bf16.mxu0 %v2452
    %2821 = vmatpush1.bf16.msra.mxu0 %v2451
    %2822 = vmatprep.subr.bf16.mxu0 %v2444
    %2823 = vmatpush1.bf16.msra.mxu0 %v2443
    %2824 = vmatprep.subr.bf16.mxu0 %v2436
    %2825 = vmatpush1.bf16.msra.mxu0 %v2435
    %2826 = vmatprep.subr.bf16.mxu0 %v2428
    %2827 = vmatpush1.bf16.msra.mxu0 %v2427
    %2828 = vmatprep.subr.bf16.mxu0 %v2420
    %2829 = vmatpush1.bf16.msra.mxu0 %v2419
    %2830 = vmatprep.subr.bf16.mxu0 %v2412
    %2831 = vmatpush1.bf16.msra.mxu0 %v2411
    %2832 = vmatprep.subr.bf16.mxu0 %v2404
    %2833 = vmatpush1.bf16.msra.mxu0 %v2403
    %2834 = vmatprep.subr.bf16.mxu0 %v2396
    %2835 = vmatpush1.bf16.msra.mxu0 %v2395
    %2836 = vmatprep.subr.bf16.mxu0 %v2516
    %2837 = vmatpush2.bf16.msra.mxu0 %v2515
    %2838 = vmatprep.subr.bf16.mxu0 %v2508
    %2839 = vmatpush2.bf16.msra.mxu0 %v2507
    %2840 = vmatprep.subr.bf16.mxu0 %v2500
    %2841 = vmatpush2.bf16.msra.mxu0 %v2499
    %2842 = vmatprep.subr.bf16.mxu0 %v2492
    %2843 = vmatpush2.bf16.msra.mxu0 %v2491
    %2844 = vmatprep.subr.bf16.mxu0 %v2484
    %2845 = vmatpush2.bf16.msra.mxu0 %v2483
    %2846 = vmatprep.subr.bf16.mxu0 %v2476
    %2847 = vmatpush2.bf16.msra.mxu0 %v2475
    %2848 = vmatprep.subr.bf16.mxu0 %v2468
    %2849 = vmatpush2.bf16.msra.mxu0 %v2467
    %2850 = vmatprep.subr.bf16.mxu0 %v2460
    %2851 = vmatpush2.bf16.msra.mxu0 %v2459
    %2852 = vmatprep.mubr.bf16.mxu0 %v1242
    %2853 = vmatmul.mubr.bf16.gmra.mxu0 %v1241
    %v2854 = vpop.f32.mrf.mxu0
    %v2855 = vadd.f32 %v2814, %v2854
    %v2856 = vpop.f32.mrf.mxu0
    %v2857 = vadd.f32 %v2816, %v2856
    %v2858 = vpop.f32.mrf.mxu0
    %v2859 = vpop.f32.mrf.mxu0
    %2860 = vdwg.mxu0
    %2861 = vmatprep.subr.bf16.mxu0 %v2326
    %2862 = vmatpush1.bf16.msra.mxu0 %v2325
    %2863 = vmatprep.subr.bf16.mxu0 %v2318
    %2864 = vmatpush1.bf16.msra.mxu0 %v2317
    %2865 = vmatprep.subr.bf16.mxu0 %v2310
    %2866 = vmatpush1.bf16.msra.mxu0 %v2309
    %2867 = vmatprep.subr.bf16.mxu0 %v2302
    %2868 = vmatpush1.bf16.msra.mxu0 %v2301
    %2869 = vmatprep.subr.bf16.mxu0 %v2294
    %2870 = vmatpush1.bf16.msra.mxu0 %v2293
    %2871 = vmatprep.subr.bf16.mxu0 %v2286
    %2872 = vmatpush1.bf16.msra.mxu0 %v2285
    %2873 = vmatprep.subr.bf16.mxu0 %v2278
    %2874 = vmatpush1.bf16.msra.mxu0 %v2277
    %2875 = vmatprep.subr.bf16.mxu0 %v2270
    %2876 = vmatpush1.bf16.msra.mxu0 %v2269
    %2877 = vmatprep.subr.bf16.mxu0 %v2390
    %2878 = vmatpush2.bf16.msra.mxu0 %v2389
    %2879 = vmatprep.subr.bf16.mxu0 %v2382
    %2880 = vmatpush2.bf16.msra.mxu0 %v2381
    %2881 = vmatprep.subr.bf16.mxu0 %v2374
    %2882 = vmatpush2.bf16.msra.mxu0 %v2373
    %2883 = vmatprep.subr.bf16.mxu0 %v2366
    %2884 = vmatpush2.bf16.msra.mxu0 %v2365
    %2885 = vmatprep.subr.bf16.mxu0 %v2358
    %2886 = vmatpush2.bf16.msra.mxu0 %v2357
    %2887 = vmatprep.subr.bf16.mxu0 %v2350
    %2888 = vmatpush2.bf16.msra.mxu0 %v2349
    %2889 = vmatprep.subr.bf16.mxu0 %v2342
    %2890 = vmatpush2.bf16.msra.mxu0 %v2341
    %2891 = vmatprep.subr.bf16.mxu0 %v2334
    %2892 = vmatpush2.bf16.msra.mxu0 %v2333
    %2893 = vmatprep.mubr.bf16.mxu0 %v1240
    %2894 = vmatmul.mubr.bf16.gmra.mxu0 %v1239
    %v2895 = vpop.f32.mrf.mxu0
    %v2896 = vadd.f32 0.0, %v2895
    %v2897 = vpop.f32.mrf.mxu0
    %v2898 = vadd.f32 0.0, %v2897
    %v2899 = vpop.f32.mrf.mxu0
    %v2900 = vpop.f32.mrf.mxu0
    %2901 = vdwg.mxu0
    %2902 = vmatprep.subr.bf16.mxu0 %v2454
    %2903 = vmatpush1.bf16.msra.mxu0 %v2453
    %2904 = vmatprep.subr.bf16.mxu0 %v2446
    %2905 = vmatpush1.bf16.msra.mxu0 %v2445
    %2906 = vmatprep.subr.bf16.mxu0 %v2438
    %2907 = vmatpush1.bf16.msra.mxu0 %v2437
    %2908 = vmatprep.subr.bf16.mxu0 %v2430
    %2909 = vmatpush1.bf16.msra.mxu0 %v2429
    %2910 = vmatprep.subr.bf16.mxu0 %v2422
    %2911 = vmatpush1.bf16.msra.mxu0 %v2421
    %2912 = vmatprep.subr.bf16.mxu0 %v2414
    %2913 = vmatpush1.bf16.msra.mxu0 %v2413
    %2914 = vmatprep.subr.bf16.mxu0 %v2406
    %2915 = vmatpush1.bf16.msra.mxu0 %v2405
    %2916 = vmatprep.subr.bf16.mxu0 %v2398
    %2917 = vmatpush1.bf16.msra.mxu0 %v2397
    %2918 = vmatprep.subr.bf16.mxu0 %v2518
    %2919 = vmatpush2.bf16.msra.mxu0 %v2517
    %2920 = vmatprep.subr.bf16.mxu0 %v2510
    %2921 = vmatpush2.bf16.msra.mxu0 %v2509
    %2922 = vmatprep.subr.bf16.mxu0 %v2502
    %2923 = vmatpush2.bf16.msra.mxu0 %v2501
    %2924 = vmatprep.subr.bf16.mxu0 %v2494
    %2925 = vmatpush2.bf16.msra.mxu0 %v2493
    %2926 = vmatprep.subr.bf16.mxu0 %v2486
    %2927 = vmatpush2.bf16.msra.mxu0 %v2485
    %2928 = vmatprep.subr.bf16.mxu0 %v2478
    %2929 = vmatpush2.bf16.msra.mxu0 %v2477
    %2930 = vmatprep.subr.bf16.mxu0 %v2470
    %2931 = vmatpush2.bf16.msra.mxu0 %v2469
    %2932 = vmatprep.subr.bf16.mxu0 %v2462
    %2933 = vmatpush2.bf16.msra.mxu0 %v2461
    %2934 = vmatprep.mubr.bf16.mxu0 %v1242
    %2935 = vmatmul.mubr.bf16.gmra.mxu0 %v1241
    %v2936 = vpop.f32.mrf.mxu0
    %v2937 = vadd.f32 %v2896, %v2936
    %v2938 = vpop.f32.mrf.mxu0
    %v2939 = vadd.f32 %v2898, %v2938
    %v2940 = vpop.f32.mrf.mxu0
    %v2941 = vpop.f32.mrf.mxu0
    %2942 = vdwg.mxu0
    %2943 = vmatprep.subr.bf16.mxu0 %v2328
    %2944 = vmatpush1.bf16.msra.mxu0 %v2327
    %2945 = vmatprep.subr.bf16.mxu0 %v2320
    %2946 = vmatpush1.bf16.msra.mxu0 %v2319
    %2947 = vmatprep.subr.bf16.mxu0 %v2312
    %2948 = vmatpush1.bf16.msra.mxu0 %v2311
    %2949 = vmatprep.subr.bf16.mxu0 %v2304
    %2950 = vmatpush1.bf16.msra.mxu0 %v2303
    %2951 = vmatprep.subr.bf16.mxu0 %v2296
    %2952 = vmatpush1.bf16.msra.mxu0 %v2295
    %2953 = vmatprep.subr.bf16.mxu0 %v2288
    %2954 = vmatpush1.bf16.msra.mxu0 %v2287
    %2955 = vmatprep.subr.bf16.mxu0 %v2280
    %2956 = vmatpush1.bf16.msra.mxu0 %v2279
    %2957 = vmatprep.subr.bf16.mxu0 %v2272
    %2958 = vmatpush1.bf16.msra.mxu0 %v2271
    %2959 = vmatprep.subr.bf16.mxu0 %v2392
    %2960 = vmatpush2.bf16.msra.mxu0 %v2391
    %2961 = vmatprep.subr.bf16.mxu0 %v2384
    %2962 = vmatpush2.bf16.msra.mxu0 %v2383
    %2963 = vmatprep.subr.bf16.mxu0 %v2376
    %2964 = vmatpush2.bf16.msra.mxu0 %v2375
    %2965 = vmatprep.subr.bf16.mxu0 %v2368
    %2966 = vmatpush2.bf16.msra.mxu0 %v2367
    %2967 = vmatprep.subr.bf16.mxu0 %v2360
    %2968 = vmatpush2.bf16.msra.mxu0 %v2359
    %2969 = vmatprep.subr.bf16.mxu0 %v2352
    %2970 = vmatpush2.bf16.msra.mxu0 %v2351
    %2971 = vmatprep.subr.bf16.mxu0 %v2344
    %2972 = vmatpush2.bf16.msra.mxu0 %v2343
    %2973 = vmatprep.subr.bf16.mxu0 %v2336
    %2974 = vmatpush2.bf16.msra.mxu0 %v2335
    %2975 = vmatprep.mubr.bf16.mxu0 %v1240
    %2976 = vmatmul.mubr.bf16.gmra.mxu0 %v1239
    %v2977 = vpop.f32.mrf.mxu0
    %v2978 = vadd.f32 0.0, %v2977
    %v2979 = vpop.f32.mrf.mxu0
    %v2980 = vadd.f32 0.0, %v2979
    %v2981 = vpop.f32.mrf.mxu0
    %v2982 = vpop.f32.mrf.mxu0
    %2983 = vdwg.mxu0
    %2984 = vmatprep.subr.bf16.mxu0 %v2456
    %2985 = vmatpush1.bf16.msra.mxu0 %v2455
    %2986 = vmatprep.subr.bf16.mxu0 %v2448
    %2987 = vmatpush1.bf16.msra.mxu0 %v2447
    %2988 = vmatprep.subr.bf16.mxu0 %v2440
    %2989 = vmatpush1.bf16.msra.mxu0 %v2439
    %2990 = vmatprep.subr.bf16.mxu0 %v2432
    %2991 = vmatpush1.bf16.msra.mxu0 %v2431
    %2992 = vmatprep.subr.bf16.mxu0 %v2424
    %2993 = vmatpush1.bf16.msra.mxu0 %v2423
    %2994 = vmatprep.subr.bf16.mxu0 %v2416
    %2995 = vmatpush1.bf16.msra.mxu0 %v2415
    %2996 = vmatprep.subr.bf16.mxu0 %v2408
    %2997 = vmatpush1.bf16.msra.mxu0 %v2407
    %2998 = vmatprep.subr.bf16.mxu0 %v2400
    %2999 = vmatpush1.bf16.msra.mxu0 %v2399
    %3000 = vmatprep.subr.bf16.mxu0 %v2520
    %3001 = vmatpush2.bf16.msra.mxu0 %v2519
    %3002 = vmatprep.subr.bf16.mxu0 %v2512
    %3003 = vmatpush2.bf16.msra.mxu0 %v2511
    %3004 = vmatprep.subr.bf16.mxu0 %v2504
    %3005 = vmatpush2.bf16.msra.mxu0 %v2503
    %3006 = vmatprep.subr.bf16.mxu0 %v2496
    %3007 = vmatpush2.bf16.msra.mxu0 %v2495
    %3008 = vmatprep.subr.bf16.mxu0 %v2488
    %3009 = vmatpush2.bf16.msra.mxu0 %v2487
    %3010 = vmatprep.subr.bf16.mxu0 %v2480
    %3011 = vmatpush2.bf16.msra.mxu0 %v2479
    %3012 = vmatprep.subr.bf16.mxu0 %v2472
    %3013 = vmatpush2.bf16.msra.mxu0 %v2471
    %3014 = vmatprep.subr.bf16.mxu0 %v2464
    %3015 = vmatpush2.bf16.msra.mxu0 %v2463
    %3016 = vmatprep.mubr.bf16.mxu0 %v1242
    %3017 = vmatmul.mubr.bf16.gmra.mxu0 %v1241
    %v3018 = vpop.f32.mrf.mxu0
    %v3019 = vadd.f32 %v2978, %v3018
    %v3020 = vpop.f32.mrf.mxu0
    %v3021 = vadd.f32 %v2980, %v3020
    %v3022 = vpop.f32.mrf.mxu0
    %v3023 = vpop.f32.mrf.mxu0
    %3024 = vdwg.mxu0
    %3025 = vmatprep.subr.bf16.mxu0 %v2330
    %3026 = vmatpush1.bf16.msra.mxu0 %v2329
    %3027 = vmatprep.subr.bf16.mxu0 %v2322
    %3028 = vmatpush1.bf16.msra.mxu0 %v2321
    %3029 = vmatprep.subr.bf16.mxu0 %v2314
    %3030 = vmatpush1.bf16.msra.mxu0 %v2313
    %3031 = vmatprep.subr.bf16.mxu0 %v2306
    %3032 = vmatpush1.bf16.msra.mxu0 %v2305
    %3033 = vmatprep.subr.bf16.mxu0 %v2298
    %3034 = vmatpush1.bf16.msra.mxu0 %v2297
    %3035 = vmatprep.subr.bf16.mxu0 %v2290
    %3036 = vmatpush1.bf16.msra.mxu0 %v2289
    %3037 = vmatprep.subr.bf16.mxu0 %v2282
    %3038 = vmatpush1.bf16.msra.mxu0 %v2281
    %3039 = vmatprep.subr.bf16.mxu0 %v2274
    %3040 = vmatpush1.bf16.msra.mxu0 %v2273
    %3041 = vmatprep.subr.bf16.mxu0 %v2394
    %3042 = vmatpush2.bf16.msra.mxu0 %v2393
    %3043 = vmatprep.subr.bf16.mxu0 %v2386
    %3044 = vmatpush2.bf16.msra.mxu0 %v2385
    %3045 = vmatprep.subr.bf16.mxu0 %v2378
    %3046 = vmatpush2.bf16.msra.mxu0 %v2377
    %3047 = vmatprep.subr.bf16.mxu0 %v2370
    %3048 = vmatpush2.bf16.msra.mxu0 %v2369
    %3049 = vmatprep.subr.bf16.mxu0 %v2362
    %3050 = vmatpush2.bf16.msra.mxu0 %v2361
    %3051 = vmatprep.subr.bf16.mxu0 %v2354
    %3052 = vmatpush2.bf16.msra.mxu0 %v2353
    %3053 = vmatprep.subr.bf16.mxu0 %v2346
    %3054 = vmatpush2.bf16.msra.mxu0 %v2345
    %3055 = vmatprep.subr.bf16.mxu0 %v2338
    %3056 = vmatpush2.bf16.msra.mxu0 %v2337
    %3057 = vmatprep.mubr.bf16.mxu0 %v1240
    %3058 = vmatmul.mubr.bf16.gmra.mxu0 %v1239
    %v3059 = vpop.f32.mrf.mxu0
    %v3060 = vadd.f32 0.0, %v3059
    %v3061 = vpop.f32.mrf.mxu0
    %v3062 = vadd.f32 0.0, %v3061
    %v3063 = vpop.f32.mrf.mxu0
    %v3064 = vpop.f32.mrf.mxu0
    %3065 = vdwg.mxu0
    %3066 = vmatprep.subr.bf16.mxu0 %v2458
    %3067 = vmatpush1.bf16.msra.mxu0 %v2457
    %3068 = vmatprep.subr.bf16.mxu0 %v2450
    %3069 = vmatpush1.bf16.msra.mxu0 %v2449
    %3070 = vmatprep.subr.bf16.mxu0 %v2442
    %3071 = vmatpush1.bf16.msra.mxu0 %v2441
    %3072 = vmatprep.subr.bf16.mxu0 %v2434
    %3073 = vmatpush1.bf16.msra.mxu0 %v2433
    %3074 = vmatprep.subr.bf16.mxu0 %v2426
    %3075 = vmatpush1.bf16.msra.mxu0 %v2425
    %3076 = vmatprep.subr.bf16.mxu0 %v2418
    %3077 = vmatpush1.bf16.msra.mxu0 %v2417
    %3078 = vmatprep.subr.bf16.mxu0 %v2410
    %3079 = vmatpush1.bf16.msra.mxu0 %v2409
    %3080 = vmatprep.subr.bf16.mxu0 %v2402
    %3081 = vmatpush1.bf16.msra.mxu0 %v2401
    %3082 = vmatprep.subr.bf16.mxu0 %v2522
    %3083 = vmatpush2.bf16.msra.mxu0 %v2521
    %3084 = vmatprep.subr.bf16.mxu0 %v2514
    %3085 = vmatpush2.bf16.msra.mxu0 %v2513
    %3086 = vmatprep.subr.bf16.mxu0 %v2506
    %3087 = vmatpush2.bf16.msra.mxu0 %v2505
    %3088 = vmatprep.subr.bf16.mxu0 %v2498
    %3089 = vmatpush2.bf16.msra.mxu0 %v2497
    %3090 = vmatprep.subr.bf16.mxu0 %v2490
    %3091 = vmatpush2.bf16.msra.mxu0 %v2489
    %3092 = vmatprep.subr.bf16.mxu0 %v2482
    %3093 = vmatpush2.bf16.msra.mxu0 %v2481
    %3094 = vmatprep.subr.bf16.mxu0 %v2474
    %3095 = vmatpush2.bf16.msra.mxu0 %v2473
    %3096 = vmatprep.subr.bf16.mxu0 %v2466
    %3097 = vmatpush2.bf16.msra.mxu0 %v2465
    %3098 = vmatprep.mubr.bf16.mxu0 %v1242
    %3099 = vmatmul.mubr.bf16.gmra.mxu0 %v1241
    %v3100 = vpop.f32.mrf.mxu0
    %v3101 = vadd.f32 %v3060, %v3100
    %v3102 = vpop.f32.mrf.mxu0
    %v3103 = vadd.f32 %v3062, %v3102
    %v3104 = vpop.f32.mrf.mxu0
    %v3105 = vpop.f32.mrf.mxu0
    %3106 = vdwg.mxu0
    %v3107 = vld [vmem:[%s11] ss:$2 sm:$0xff]
    %s3108 = scalar_lea.vmem %s11, 1
    %v3109 = vld [vmem:[%s3108] ss:$2 sm:$0xff]
    %v3110 = vrot.slane %v2855, 4
    %v3111 = vadd.f32 %v2855, %v3110
    %v3112 = vrot.slane %v3111, 2
    %v3113 = vadd.f32 %v3111, %v3112
    %v3114 = vrot.slane %v3113, 1
    %v3115 = vadd.f32 %v3113, %v3114
    %v3116 = vrot.slane %v2857, 4
    %v3117 = vadd.f32 %v2857, %v3116
    %v3118 = vrot.slane %v3117, 2
    %v3119 = vadd.f32 %v3117, %v3118
    %v3120 = vrot.slane %v3119, 1
    %v3121 = vadd.f32 %v3119, %v3120
    %v3122 = vrot.slane %v2937, 4
    %v3123 = vadd.f32 %v2937, %v3122
    %v3124 = vrot.slane %v3123, 2
    %v3125 = vadd.f32 %v3123, %v3124
    %v3126 = vrot.slane %v3125, 1
    %v3127 = vadd.f32 %v3125, %v3126
    %v3128 = vrot.slane %v2939, 4
    %v3129 = vadd.f32 %v2939, %v3128
    %v3130 = vrot.slane %v3129, 2
    %v3131 = vadd.f32 %v3129, %v3130
    %v3132 = vrot.slane %v3131, 1
    %v3133 = vadd.f32 %v3131, %v3132
    %v3134 = vrot.slane %v3019, 4
    %v3135 = vadd.f32 %v3019, %v3134
    %v3136 = vrot.slane %v3135, 2
    %v3137 = vadd.f32 %v3135, %v3136
    %v3138 = vrot.slane %v3137, 1
    %v3139 = vadd.f32 %v3137, %v3138
    %v3140 = vrot.slane %v3021, 4
    %v3141 = vadd.f32 %v3021, %v3140
    %v3142 = vrot.slane %v3141, 2
    %v3143 = vadd.f32 %v3141, %v3142
    %v3144 = vrot.slane %v3143, 1
    %v3145 = vadd.f32 %v3143, %v3144
    %v3146 = vrot.slane %v3101, 4
    %v3147 = vadd.f32 %v3101, %v3146
    %v3148 = vrot.slane %v3147, 2
    %v3149 = vadd.f32 %v3147, %v3148
    %v3150 = vrot.slane %v3149, 1
    %v3151 = vadd.f32 %v3149, %v3150
    %v3152 = vrot.slane %v3103, 4
    %v3153 = vadd.f32 %v3103, %v3152
    %v3154 = vrot.slane %v3153, 2
    %v3155 = vadd.f32 %v3153, %v3154
    %v3156 = vrot.slane %v3155, 1
    %v3157 = vadd.f32 %v3155, %v3156
    %v3158 = vmul.f32 %v3115, %v473
    %v3159 = vmul.f32 %v3121, %v473
    %v3160 = vmul.f32 %v3127, %v473
    %v3161 = vmul.f32 %v3133, %v473
    %v3162 = vmul.f32 %v3139, %v473
    %v3163 = vmul.f32 %v3145, %v473
    %v3164 = vmul.f32 %v3151, %v473
    %v3165 = vmul.f32 %v3157, %v473
    %v3166 = vsub.f32 %v2855, %v3158
    %v3167 = vsub.f32 %v2857, %v3159
    %v3168 = vsub.f32 %v2937, %v3160
    %v3169 = vsub.f32 %v2939, %v3161
    %v3170 = vsub.f32 %v3019, %v3162
    %v3171 = vsub.f32 %v3021, %v3163
    %v3172 = vsub.f32 %v3101, %v3164
    %v3173 = vsub.f32 %v3103, %v3165
    %v3174 = vmul.f32 %v3166, %v3166
    %v3175 = vmul.f32 %v3167, %v3167
    %v3176 = vmul.f32 %v3168, %v3168
    %v3177 = vmul.f32 %v3169, %v3169
    %v3178 = vmul.f32 %v3170, %v3170
    %v3179 = vmul.f32 %v3171, %v3171
    %v3180 = vmul.f32 %v3172, %v3172
    %v3181 = vmul.f32 %v3173, %v3173
    %v3182 = vrot.slane %v3174, 4
    %v3183 = vadd.f32 %v3174, %v3182
    %v3184 = vrot.slane %v3183, 2
    %v3185 = vadd.f32 %v3183, %v3184
    %v3186 = vrot.slane %v3185, 1
    %v3187 = vadd.f32 %v3185, %v3186
    %v3188 = vrot.slane %v3175, 4
    %v3189 = vadd.f32 %v3175, %v3188
    %v3190 = vrot.slane %v3189, 2
    %v3191 = vadd.f32 %v3189, %v3190
    %v3192 = vrot.slane %v3191, 1
    %v3193 = vadd.f32 %v3191, %v3192
    %v3194 = vrot.slane %v3176, 4
    %v3195 = vadd.f32 %v3176, %v3194
    %v3196 = vrot.slane %v3195, 2
    %v3197 = vadd.f32 %v3195, %v3196
    %v3198 = vrot.slane %v3197, 1
    %v3199 = vadd.f32 %v3197, %v3198
    %v3200 = vrot.slane %v3177, 4
    %v3201 = vadd.f32 %v3177, %v3200
    %v3202 = vrot.slane %v3201, 2
    %v3203 = vadd.f32 %v3201, %v3202
    %v3204 = vrot.slane %v3203, 1
    %v3205 = vadd.f32 %v3203, %v3204
    %v3206 = vrot.slane %v3178, 4
    %v3207 = vadd.f32 %v3178, %v3206
    %v3208 = vrot.slane %v3207, 2
    %v3209 = vadd.f32 %v3207, %v3208
    %v3210 = vrot.slane %v3209, 1
    %v3211 = vadd.f32 %v3209, %v3210
    %v3212 = vrot.slane %v3179, 4
    %v3213 = vadd.f32 %v3179, %v3212
    %v3214 = vrot.slane %v3213, 2
    %v3215 = vadd.f32 %v3213, %v3214
    %v3216 = vrot.slane %v3215, 1
    %v3217 = vadd.f32 %v3215, %v3216
    %v3218 = vrot.slane %v3180, 4
    %v3219 = vadd.f32 %v3180, %v3218
    %v3220 = vrot.slane %v3219, 2
    %v3221 = vadd.f32 %v3219, %v3220
    %v3222 = vrot.slane %v3221, 1
    %v3223 = vadd.f32 %v3221, %v3222
    %v3224 = vrot.slane %v3181, 4
    %v3225 = vadd.f32 %v3181, %v3224
    %v3226 = vrot.slane %v3225, 2
    %v3227 = vadd.f32 %v3225, %v3226
    %v3228 = vrot.slane %v3227, 1
    %v3229 = vadd.f32 %v3227, %v3228
    %v3230 = vmul.f32 %v3187, %v473
    %v3231 = vmul.f32 %v3193, %v473
    %v3232 = vmul.f32 %v3199, %v473
    %v3233 = vmul.f32 %v3205, %v473
    %v3234 = vmul.f32 %v3211, %v473
    %v3235 = vmul.f32 %v3217, %v473
    %v3236 = vmul.f32 %v3223, %v473
    %v3237 = vmul.f32 %v3229, %v473
    %v3238 = vadd.f32 %v3230, 0.8
    %v3239 = vadd.f32 %v3231, 0.8
    %v3240 = vadd.f32 %v3232, 0.8
    %v3241 = vadd.f32 %v3233, 0.8
    %v3242 = vadd.f32 %v3234, 0.8
    %v3243 = vadd.f32 %v3235, 0.8
    %v3244 = vadd.f32 %v3236, 0.8
    %v3245 = vadd.f32 %v3237, 0.8
    %v3246 = vrsqrt.pop %v3238
    %v3247 = vrsqrt.pop %v3239
    %v3248 = vrsqrt.pop %v3240
    %v3249 = vrsqrt.pop %v3241
    %v3250 = vrsqrt.pop %v3242
    %v3251 = vrsqrt.pop %v3243
    %v3252 = vrsqrt.pop %v3244
    %v3253 = vrsqrt.pop %v3245
    %v3262 = vcombine.low %v3246, %v3247
    %v3263 = vcombine.low %v3248, %v3249
    %v3264 = vcombine.low %v3250, %v3251
    %v3265 = vcombine.low %v3252, %v3253
    %v3267 = vunpack.c.l.s4 1966171168
    %v3268 = vunpack.c.0.s8 %v3267
    %v3269 = vlaneseq
    %v3270 = vshrl.u32 %v3269, 7
    %v3271 = vsub.s32 %v3268, %v3270
    %v3272 = vrot.slane %v3262, %v3271
    %v3274 = vunpack.c.l.s4 1966171168
    %v3275 = vunpack.c.0.s8 %v3274
    %v3276 = vlaneseq
    %v3277 = vshrl.u32 %v3276, 7
    %v3278 = vsub.s32 %v3275, %v3277
    %v3279 = vrot.slane %v3263, %v3278
    %v3281 = vunpack.c.l.s4 1966171168
    %v3282 = vunpack.c.0.s8 %v3281
    %v3283 = vlaneseq
    %v3284 = vshrl.u32 %v3283, 7
    %v3285 = vsub.s32 %v3282, %v3284
    %v3286 = vrot.slane %v3264, %v3285
    %v3288 = vunpack.c.l.s4 1966171168
    %v3289 = vunpack.c.0.s8 %v3288
    %v3290 = vlaneseq
    %v3291 = vshrl.u32 %v3290, 7
    %v3292 = vsub.s32 %v3289, %v3291
    %v3293 = vrot.slane %v3265, %v3292
    %v3294 = vcombine.low %v3272, %v3279
    %v3295 = vcombine.low %v3286, %v3293
    %v3297 = vunpack.c.l.s4 1966171168
    %v3298 = vunpack.c.0.s8 %v3297
    %v3299 = vlaneseq
    %v3300 = vshrl.u32 %v3299, 7
    %v3301 = vsub.s32 %v3298, %v3300
    %v3302 = vrot.slane %v3294, %v3301
    %v3304 = vunpack.c.l.s4 1966171168
    %v3305 = vunpack.c.0.s8 %v3304
    %v3306 = vlaneseq
    %v3307 = vshrl.u32 %v3306, 7
    %v3308 = vsub.s32 %v3305, %v3307
    %v3309 = vrot.slane %v3295, %v3308
    %v3310 = vcombine.low %v3302, %v3309
    %v3312 = vmul.f32 %v3107, %v3310
    %v3314 = vlaneseq
    %v3315 = vshrl.u32 %v3314, 7
    %v3316 = vsub.s32 0, %v3315
    %v3317 = vrot.slane %v3312, %v3316
    %v3318 = vlaneseq
    %v3319 = vshrl.u32 %v3318, 7
    %v3320 = vsub.s32 1, %v3319
    %v3321 = vrot.slane %v3312, %v3320
    %v3322 = vlaneseq
    %v3323 = vshrl.u32 %v3322, 7
    %v3324 = vsub.s32 2, %v3323
    %v3325 = vrot.slane %v3312, %v3324
    %v3326 = vlaneseq
    %v3327 = vshrl.u32 %v3326, 7
    %v3328 = vsub.s32 3, %v3327
    %v3329 = vrot.slane %v3312, %v3328
    %v3330 = vlaneseq
    %v3331 = vshrl.u32 %v3330, 7
    %v3332 = vsub.s32 4, %v3331
    %v3333 = vrot.slane %v3312, %v3332
    %v3334 = vlaneseq
    %v3335 = vshrl.u32 %v3334, 7
    %v3336 = vsub.s32 5, %v3335
    %v3337 = vrot.slane %v3312, %v3336
    %v3338 = vlaneseq
    %v3339 = vshrl.u32 %v3338, 7
    %v3340 = vsub.s32 6, %v3339
    %v3341 = vrot.slane %v3312, %v3340
    %v3342 = vlaneseq
    %v3343 = vshrl.u32 %v3342, 7
    %v3344 = vsub.s32 7, %v3343
    %v3345 = vrot.slane %v3312, %v3344
    %v3354 = vmul.f32 %v3158, %v3317
    %v3355 = vmul.f32 %v3159, %v3321
    %v3356 = vmul.f32 %v3160, %v3325
    %v3357 = vmul.f32 %v3161, %v3329
    %v3358 = vmul.f32 %v3162, %v3333
    %v3359 = vmul.f32 %v3163, %v3337
    %v3360 = vmul.f32 %v3164, %v3341
    %v3361 = vmul.f32 %v3165, %v3345
    %v3370 = vcombine.low %v3354, %v3355
    %v3371 = vcombine.low %v3356, %v3357
    %v3372 = vcombine.low %v3358, %v3359
    %v3373 = vcombine.low %v3360, %v3361
    %v3375 = vunpack.c.l.s4 1966171168
    %v3376 = vunpack.c.0.s8 %v3375
    %v3377 = vlaneseq
    %v3378 = vshrl.u32 %v3377, 7
    %v3379 = vsub.s32 %v3376, %v3378
    %v3380 = vrot.slane %v3370, %v3379
    %v3382 = vunpack.c.l.s4 1966171168
    %v3383 = vunpack.c.0.s8 %v3382
    %v3384 = vlaneseq
    %v3385 = vshrl.u32 %v3384, 7
    %v3386 = vsub.s32 %v3383, %v3385
    %v3387 = vrot.slane %v3371, %v3386
    %v3389 = vunpack.c.l.s4 1966171168
    %v3390 = vunpack.c.0.s8 %v3389
    %v3391 = vlaneseq
    %v3392 = vshrl.u32 %v3391, 7
    %v3393 = vsub.s32 %v3390, %v3392
    %v3394 = vrot.slane %v3372, %v3393
    %v3396 = vunpack.c.l.s4 1966171168
    %v3397 = vunpack.c.0.s8 %v3396
    %v3398 = vlaneseq
    %v3399 = vshrl.u32 %v3398, 7
    %v3400 = vsub.s32 %v3397, %v3399
    %v3401 = vrot.slane %v3373, %v3400
    %v3402 = vcombine.low %v3380, %v3387
    %v3403 = vcombine.low %v3394, %v3401
    %v3405 = vunpack.c.l.s4 1966171168
    %v3406 = vunpack.c.0.s8 %v3405
    %v3407 = vlaneseq
    %v3408 = vshrl.u32 %v3407, 7
    %v3409 = vsub.s32 %v3406, %v3408
    %v3410 = vrot.slane %v3402, %v3409
    %v3412 = vunpack.c.l.s4 1966171168
    %v3413 = vunpack.c.0.s8 %v3412
    %v3414 = vlaneseq
    %v3415 = vshrl.u32 %v3414, 7
    %v3416 = vsub.s32 %v3413, %v3415
    %v3417 = vrot.slane %v3403, %v3416
    %v3418 = vcombine.low %v3410, %v3417
    %v3420 = vsub.f32 %v3109, %v3418
    %v3421 = vmul.f32 %v2855, %v3317
    %v3422 = vmul.f32 %v2857, %v3321
    %v3423 = vmul.f32 %v2937, %v3325
    %v3424 = vmul.f32 %v2939, %v3329
    %v3425 = vmul.f32 %v3019, %v3333
    %v3426 = vmul.f32 %v3021, %v3337
    %v3427 = vmul.f32 %v3101, %v3341
    %v3428 = vmul.f32 %v3103, %v3345
    %v3430 = vlaneseq
    %v3431 = vshrl.u32 %v3430, 7
    %v3432 = vsub.s32 0, %v3431
    %v3433 = vrot.slane %v3420, %v3432
    %v3434 = vlaneseq
    %v3435 = vshrl.u32 %v3434, 7
    %v3436 = vsub.s32 1, %v3435
    %v3437 = vrot.slane %v3420, %v3436
    %v3438 = vlaneseq
    %v3439 = vshrl.u32 %v3438, 7
    %v3440 = vsub.s32 2, %v3439
    %v3441 = vrot.slane %v3420, %v3440
    %v3442 = vlaneseq
    %v3443 = vshrl.u32 %v3442, 7
    %v3444 = vsub.s32 3, %v3443
    %v3445 = vrot.slane %v3420, %v3444
    %v3446 = vlaneseq
    %v3447 = vshrl.u32 %v3446, 7
    %v3448 = vsub.s32 4, %v3447
    %v3449 = vrot.slane %v3420, %v3448
    %v3450 = vlaneseq
    %v3451 = vshrl.u32 %v3450, 7
    %v3452 = vsub.s32 5, %v3451
    %v3453 = vrot.slane %v3420, %v3452
    %v3454 = vlaneseq
    %v3455 = vshrl.u32 %v3454, 7
    %v3456 = vsub.s32 6, %v3455
    %v3457 = vrot.slane %v3420, %v3456
    %v3458 = vlaneseq
    %v3459 = vshrl.u32 %v3458, 7
    %v3460 = vsub.s32 7, %v3459
    %v3461 = vrot.slane %v3420, %v3460
    %v3470 = vadd.f32 %v3421, %v3433
    %v3471 = vadd.f32 %v3422, %v3437
    %v3472 = vadd.f32 %v3423, %v3441
    %v3473 = vadd.f32 %v3424, %v3445
    %v3474 = vadd.f32 %v3425, %v3449
    %v3475 = vadd.f32 %v3426, %v3453
    %v3476 = vadd.f32 %v3427, %v3457
    %v3477 = vadd.f32 %v3428, %v3461
    %vm3478 = vcmp.gt.f32.partialorder %v3470, 0.0
    %vm3479 = vcmp.gt.f32.partialorder %v3471, 0.0
    %vm3480 = vcmp.gt.f32.partialorder %v3472, 0.0
    %vm3481 = vcmp.gt.f32.partialorder %v3473, 0.0
    %vm3482 = vcmp.gt.f32.partialorder %v3474, 0.0
    %vm3483 = vcmp.gt.f32.partialorder %v3475, 0.0
    %vm3484 = vcmp.gt.f32.partialorder %v3476, 0.0
    %vm3485 = vcmp.gt.f32.partialorder %v3477, 0.0
    %v3486 = vmul.f32 %v3470, 0.2
    %v3487 = vmul.f32 %v3471, 0.2
    %v3488 = vmul.f32 %v3472, 0.2
    %v3489 = vmul.f32 %v3473, 0.2
    %v3490 = vmul.f32 %v3474, 0.2
    %v3491 = vmul.f32 %v3475, 0.2
    %v3492 = vmul.f32 %v3476, 0.2
    %v3493 = vmul.f32 %v3477, 0.2
    %v3494 = vsel %vm3478, %v3470, %v3486
    %v3495 = vsel %vm3479, %v3471, %v3487
    %v3496 = vsel %vm3480, %v3472, %v3488
    %v3497 = vsel %vm3481, %v3473, %v3489
    %v3498 = vsel %vm3482, %v3474, %v3490
    %v3499 = vsel %vm3483, %v3475, %v3491
    %v3500 = vsel %vm3484, %v3476, %v3492
    %v3501 = vsel %vm3485, %v3477, %v3493
    %v3502 = vpack.c.bf16 %v3494, %v3494
    %v3503 = vpack.c.bf16 %v3495, %v3495
    %v3504 = vpack.c.bf16 %v3496, %v3496
    %v3505 = vpack.c.bf16 %v3497, %v3497
    %v3506 = vpack.c.bf16 %v3498, %v3498
    %v3507 = vpack.c.bf16 %v3499, %v3499
    %v3508 = vpack.c.bf16 %v3500, %v3500
    %v3509 = vpack.c.bf16 %v3501, %v3501
    %v3510 = vld [vmem:[%s12] sm:$0xf]
    %v3511 = vld [vmem:[%s12 + $0x4] sm:$0xf]
    %v3512 = vld [vmem:[%s12 + $0x8] sm:$0xf]
    %v3513 = vld [vmem:[%s12 + $0xc] sm:$0xf]
    %v3514 = vld [vmem:[%s12 + $0x10] sm:$0xf]
    %v3515 = vld [vmem:[%s12 + $0x14] sm:$0xf]
    %v3516 = vld [vmem:[%s12 + $0x18] sm:$0xf]
    %v3517 = vld [vmem:[%s12 + $0x1c] sm:$0xf]
    %v3518 = vld [vmem:[%s12 + $0x20] sm:$0xf]
    %v3519 = vld [vmem:[%s12 + $0x24] sm:$0xf]
    %v3520 = vld [vmem:[%s12 + $0x28] sm:$0xf]
    %v3521 = vld [vmem:[%s12 + $0x2c] sm:$0xf]
    %v3522 = vld [vmem:[%s12 + $0x30] sm:$0xf]
    %v3523 = vld [vmem:[%s12 + $0x34] sm:$0xf]
    %v3524 = vld [vmem:[%s12 + $0x38] sm:$0xf]
    %v3525 = vld [vmem:[%s12 + $0x3c] sm:$0xf]
    %v3526 = vld [vmem:[%s12 + $0x40] sm:$0xf]
    %v3527 = vld [vmem:[%s12 + $0x44] sm:$0xf]
    %v3528 = vld [vmem:[%s12 + $0x48] sm:$0xf]
    %v3529 = vld [vmem:[%s12 + $0x4c] sm:$0xf]
    %v3530 = vld [vmem:[%s12 + $0x50] sm:$0xf]
    %v3531 = vld [vmem:[%s12 + $0x54] sm:$0xf]
    %v3532 = vld [vmem:[%s12 + $0x58] sm:$0xf]
    %v3533 = vld [vmem:[%s12 + $0x5c] sm:$0xf]
    %v3534 = vld [vmem:[%s12 + $0x60] sm:$0xf]
    %v3535 = vld [vmem:[%s12 + $0x64] sm:$0xf]
    %v3536 = vld [vmem:[%s12 + $0x68] sm:$0xf]
    %v3537 = vld [vmem:[%s12 + $0x6c] sm:$0xf]
    %v3538 = vld [vmem:[%s12 + $0x70] sm:$0xf]
    %v3539 = vld [vmem:[%s12 + $0x74] sm:$0xf]
    %v3540 = vld [vmem:[%s12 + $0x78] sm:$0xf]
    %v3541 = vld [vmem:[%s12 + $0x7c] sm:$0xf]
    %v3542 = vld [vmem:[%s12 + $0x80] sm:$0xf]
    %v3543 = vld [vmem:[%s12 + $0x84] sm:$0xf]
    %v3544 = vld [vmem:[%s12 + $0x88] sm:$0xf]
    %v3545 = vld [vmem:[%s12 + $0x8c] sm:$0xf]
    %v3546 = vld [vmem:[%s12 + $0x90] sm:$0xf]
    %v3547 = vld [vmem:[%s12 + $0x94] sm:$0xf]
    %v3548 = vld [vmem:[%s12 + $0x98] sm:$0xf]
    %v3549 = vld [vmem:[%s12 + $0x9c] sm:$0xf]
    %v3550 = vld [vmem:[%s12 + $0xa0] sm:$0xf]
    %v3551 = vld [vmem:[%s12 + $0xa4] sm:$0xf]
    %v3552 = vld [vmem:[%s12 + $0xa8] sm:$0xf]
    %v3553 = vld [vmem:[%s12 + $0xac] sm:$0xf]
    %v3554 = vld [vmem:[%s12 + $0xb0] sm:$0xf]
    %v3555 = vld [vmem:[%s12 + $0xb4] sm:$0xf]
    %v3556 = vld [vmem:[%s12 + $0xb8] sm:$0xf]
    %v3557 = vld [vmem:[%s12 + $0xbc] sm:$0xf]
    %v3558 = vld [vmem:[%s12 + $0xc0] sm:$0xf]
    %v3559 = vld [vmem:[%s12 + $0xc4] sm:$0xf]
    %v3560 = vld [vmem:[%s12 + $0xc8] sm:$0xf]
    %v3561 = vld [vmem:[%s12 + $0xcc] sm:$0xf]
    %v3562 = vld [vmem:[%s12 + $0xd0] sm:$0xf]
    %v3563 = vld [vmem:[%s12 + $0xd4] sm:$0xf]
    %v3564 = vld [vmem:[%s12 + $0xd8] sm:$0xf]
    %v3565 = vld [vmem:[%s12 + $0xdc] sm:$0xf]
    %v3566 = vld [vmem:[%s12 + $0xe0] sm:$0xf]
    %v3567 = vld [vmem:[%s12 + $0xe4] sm:$0xf]
    %v3568 = vld [vmem:[%s12 + $0xe8] sm:$0xf]
    %v3569 = vld [vmem:[%s12 + $0xec] sm:$0xf]
    %v3570 = vld [vmem:[%s12 + $0xf0] sm:$0xf]
    %v3571 = vld [vmem:[%s12 + $0xf4] sm:$0xf]
    %v3572 = vld [vmem:[%s12 + $0xf8] sm:$0xf]
    %v3573 = vld [vmem:[%s12 + $0xfc] sm:$0xf]
    %v3574 = vld [vmem:[%s12 + $0x100] sm:$0xf]
    %v3575 = vld [vmem:[%s12 + $0x104] sm:$0xf]
    %v3576 = vld [vmem:[%s12 + $0x108] sm:$0xf]
    %v3577 = vld [vmem:[%s12 + $0x10c] sm:$0xf]
    %v3578 = vld [vmem:[%s12 + $0x110] sm:$0xf]
    %v3579 = vld [vmem:[%s12 + $0x114] sm:$0xf]
    %v3580 = vld [vmem:[%s12 + $0x118] sm:$0xf]
    %v3581 = vld [vmem:[%s12 + $0x11c] sm:$0xf]
    %v3582 = vld [vmem:[%s12 + $0x120] sm:$0xf]
    %v3583 = vld [vmem:[%s12 + $0x124] sm:$0xf]
    %v3584 = vld [vmem:[%s12 + $0x128] sm:$0xf]
    %v3585 = vld [vmem:[%s12 + $0x12c] sm:$0xf]
    %v3586 = vld [vmem:[%s12 + $0x130] sm:$0xf]
    %v3587 = vld [vmem:[%s12 + $0x134] sm:$0xf]
    %v3588 = vld [vmem:[%s12 + $0x138] sm:$0xf]
    %v3589 = vld [vmem:[%s12 + $0x13c] sm:$0xf]
    %v3590 = vld [vmem:[%s12 + $0x140] sm:$0xf]
    %v3591 = vld [vmem:[%s12 + $0x144] sm:$0xf]
    %v3592 = vld [vmem:[%s12 + $0x148] sm:$0xf]
    %v3593 = vld [vmem:[%s12 + $0x14c] sm:$0xf]
    %v3594 = vld [vmem:[%s12 + $0x150] sm:$0xf]
    %v3595 = vld [vmem:[%s12 + $0x154] sm:$0xf]
    %v3596 = vld [vmem:[%s12 + $0x158] sm:$0xf]
    %v3597 = vld [vmem:[%s12 + $0x15c] sm:$0xf]
    %v3598 = vld [vmem:[%s12 + $0x160] sm:$0xf]
    %v3599 = vld [vmem:[%s12 + $0x164] sm:$0xf]
    %v3600 = vld [vmem:[%s12 + $0x168] sm:$0xf]
    %v3601 = vld [vmem:[%s12 + $0x16c] sm:$0xf]
    %v3602 = vld [vmem:[%s12 + $0x170] sm:$0xf]
    %v3603 = vld [vmem:[%s12 + $0x174] sm:$0xf]
    %v3604 = vld [vmem:[%s12 + $0x178] sm:$0xf]
    %v3605 = vld [vmem:[%s12 + $0x17c] sm:$0xf]
    %v3606 = vld [vmem:[%s12 + $0x180] sm:$0xf]
    %v3607 = vld [vmem:[%s12 + $0x184] sm:$0xf]
    %v3608 = vld [vmem:[%s12 + $0x188] sm:$0xf]
    %v3609 = vld [vmem:[%s12 + $0x18c] sm:$0xf]
    %v3610 = vld [vmem:[%s12 + $0x190] sm:$0xf]
    %v3611 = vld [vmem:[%s12 + $0x194] sm:$0xf]
    %v3612 = vld [vmem:[%s12 + $0x198] sm:$0xf]
    %v3613 = vld [vmem:[%s12 + $0x19c] sm:$0xf]
    %v3614 = vld [vmem:[%s12 + $0x1a0] sm:$0xf]
    %v3615 = vld [vmem:[%s12 + $0x1a4] sm:$0xf]
    %v3616 = vld [vmem:[%s12 + $0x1a8] sm:$0xf]
    %v3617 = vld [vmem:[%s12 + $0x1ac] sm:$0xf]
    %v3618 = vld [vmem:[%s12 + $0x1b0] sm:$0xf]
    %v3619 = vld [vmem:[%s12 + $0x1b4] sm:$0xf]
    %v3620 = vld [vmem:[%s12 + $0x1b8] sm:$0xf]
    %v3621 = vld [vmem:[%s12 + $0x1bc] sm:$0xf]
    %v3622 = vld [vmem:[%s12 + $0x1c0] sm:$0xf]
    %v3623 = vld [vmem:[%s12 + $0x1c4] sm:$0xf]
    %v3624 = vld [vmem:[%s12 + $0x1c8] sm:$0xf]
    %v3625 = vld [vmem:[%s12 + $0x1cc] sm:$0xf]
    %v3626 = vld [vmem:[%s12 + $0x1d0] sm:$0xf]
    %v3627 = vld [vmem:[%s12 + $0x1d4] sm:$0xf]
    %v3628 = vld [vmem:[%s12 + $0x1d8] sm:$0xf]
    %v3629 = vld [vmem:[%s12 + $0x1dc] sm:$0xf]
    %v3630 = vld [vmem:[%s12 + $0x1e0] sm:$0xf]
    %v3631 = vld [vmem:[%s12 + $0x1e4] sm:$0xf]
    %v3632 = vld [vmem:[%s12 + $0x1e8] sm:$0xf]
    %v3633 = vld [vmem:[%s12 + $0x1ec] sm:$0xf]
    %v3634 = vld [vmem:[%s12 + $0x1f0] sm:$0xf]
    %v3635 = vld [vmem:[%s12 + $0x1f4] sm:$0xf]
    %v3636 = vld [vmem:[%s12 + $0x1f8] sm:$0xf]
    %v3637 = vld [vmem:[%s12 + $0x1fc] sm:$0xf]
    %v3638 = vld [vmem:[#allocation10] sm:$0x1]
    %v3640 = vlaneseq
    %v3641 = vshrl.u32 %v3640, 7
    %v3642 = vsub.s32 0, %v3641
    %v3643 = vrot.slane %v3638, %v3642
    %v3773 = vunpack.c.l.b16 %v3510
    %v3774 = vunpack.c.l.b16 %v3511
    %v3775 = vunpack.c.l.b16 %v3512
    %v3776 = vunpack.c.l.b16 %v3513
    %v3777 = vunpack.c.l.b16 %v3514
    %v3778 = vunpack.c.l.b16 %v3515
    %v3779 = vunpack.c.l.b16 %v3516
    %v3780 = vunpack.c.l.b16 %v3517
    %v3781 = vunpack.c.l.b16 %v3518
    %v3782 = vunpack.c.l.b16 %v3519
    %v3783 = vunpack.c.l.b16 %v3520
    %v3784 = vunpack.c.l.b16 %v3521
    %v3785 = vunpack.c.l.b16 %v3522
    %v3786 = vunpack.c.l.b16 %v3523
    %v3787 = vunpack.c.l.b16 %v3524
    %v3788 = vunpack.c.l.b16 %v3525
    %v3789 = vunpack.c.l.b16 %v3526
    %v3790 = vunpack.c.l.b16 %v3527
    %v3791 = vunpack.c.l.b16 %v3528
    %v3792 = vunpack.c.l.b16 %v3529
    %v3793 = vunpack.c.l.b16 %v3530
    %v3794 = vunpack.c.l.b16 %v3531
    %v3795 = vunpack.c.l.b16 %v3532
    %v3796 = vunpack.c.l.b16 %v3533
    %v3797 = vunpack.c.l.b16 %v3534
    %v3798 = vunpack.c.l.b16 %v3535
    %v3799 = vunpack.c.l.b16 %v3536
    %v3800 = vunpack.c.l.b16 %v3537
    %v3801 = vunpack.c.l.b16 %v3538
    %v3802 = vunpack.c.l.b16 %v3539
    %v3803 = vunpack.c.l.b16 %v3540
    %v3804 = vunpack.c.l.b16 %v3541
    %v3805 = vunpack.c.l.b16 %v3542
    %v3806 = vunpack.c.l.b16 %v3543
    %v3807 = vunpack.c.l.b16 %v3544
    %v3808 = vunpack.c.l.b16 %v3545
    %v3809 = vunpack.c.l.b16 %v3546
    %v3810 = vunpack.c.l.b16 %v3547
    %v3811 = vunpack.c.l.b16 %v3548
    %v3812 = vunpack.c.l.b16 %v3549
    %v3813 = vunpack.c.l.b16 %v3550
    %v3814 = vunpack.c.l.b16 %v3551
    %v3815 = vunpack.c.l.b16 %v3552
    %v3816 = vunpack.c.l.b16 %v3553
    %v3817 = vunpack.c.l.b16 %v3554
    %v3818 = vunpack.c.l.b16 %v3555
    %v3819 = vunpack.c.l.b16 %v3556
    %v3820 = vunpack.c.l.b16 %v3557
    %v3821 = vunpack.c.l.b16 %v3558
    %v3822 = vunpack.c.l.b16 %v3559
    %v3823 = vunpack.c.l.b16 %v3560
    %v3824 = vunpack.c.l.b16 %v3561
    %v3825 = vunpack.c.l.b16 %v3562
    %v3826 = vunpack.c.l.b16 %v3563
    %v3827 = vunpack.c.l.b16 %v3564
    %v3828 = vunpack.c.l.b16 %v3565
    %v3829 = vunpack.c.l.b16 %v3566
    %v3830 = vunpack.c.l.b16 %v3567
    %v3831 = vunpack.c.l.b16 %v3568
    %v3832 = vunpack.c.l.b16 %v3569
    %v3833 = vunpack.c.l.b16 %v3570
    %v3834 = vunpack.c.l.b16 %v3571
    %v3835 = vunpack.c.l.b16 %v3572
    %v3836 = vunpack.c.l.b16 %v3573
    %v3837 = vunpack.c.l.b16 %v3574
    %v3838 = vunpack.c.l.b16 %v3575
    %v3839 = vunpack.c.l.b16 %v3576
    %v3840 = vunpack.c.l.b16 %v3577
    %v3841 = vunpack.c.l.b16 %v3578
    %v3842 = vunpack.c.l.b16 %v3579
    %v3843 = vunpack.c.l.b16 %v3580
    %v3844 = vunpack.c.l.b16 %v3581
    %v3845 = vunpack.c.l.b16 %v3582
    %v3846 = vunpack.c.l.b16 %v3583
    %v3847 = vunpack.c.l.b16 %v3584
    %v3848 = vunpack.c.l.b16 %v3585
    %v3849 = vunpack.c.l.b16 %v3586
    %v3850 = vunpack.c.l.b16 %v3587
    %v3851 = vunpack.c.l.b16 %v3588
    %v3852 = vunpack.c.l.b16 %v3589
    %v3853 = vunpack.c.l.b16 %v3590
    %v3854 = vunpack.c.l.b16 %v3591
    %v3855 = vunpack.c.l.b16 %v3592
    %v3856 = vunpack.c.l.b16 %v3593
    %v3857 = vunpack.c.l.b16 %v3594
    %v3858 = vunpack.c.l.b16 %v3595
    %v3859 = vunpack.c.l.b16 %v3596
    %v3860 = vunpack.c.l.b16 %v3597
    %v3861 = vunpack.c.l.b16 %v3598
    %v3862 = vunpack.c.l.b16 %v3599
    %v3863 = vunpack.c.l.b16 %v3600
    %v3864 = vunpack.c.l.b16 %v3601
    %v3865 = vunpack.c.l.b16 %v3602
    %v3866 = vunpack.c.l.b16 %v3603
    %v3867 = vunpack.c.l.b16 %v3604
    %v3868 = vunpack.c.l.b16 %v3605
    %v3869 = vunpack.c.l.b16 %v3606
    %v3870 = vunpack.c.l.b16 %v3607
    %v3871 = vunpack.c.l.b16 %v3608
    %v3872 = vunpack.c.l.b16 %v3609
    %v3873 = vunpack.c.l.b16 %v3610
    %v3874 = vunpack.c.l.b16 %v3611
    %v3875 = vunpack.c.l.b16 %v3612
    %v3876 = vunpack.c.l.b16 %v3613
    %v3877 = vunpack.c.l.b16 %v3614
    %v3878 = vunpack.c.l.b16 %v3615
    %v3879 = vunpack.c.l.b16 %v3616
    %v3880 = vunpack.c.l.b16 %v3617
    %v3881 = vunpack.c.l.b16 %v3618
    %v3882 = vunpack.c.l.b16 %v3619
    %v3883 = vunpack.c.l.b16 %v3620
    %v3884 = vunpack.c.l.b16 %v3621
    %v3885 = vunpack.c.l.b16 %v3622
    %v3886 = vunpack.c.l.b16 %v3623
    %v3887 = vunpack.c.l.b16 %v3624
    %v3888 = vunpack.c.l.b16 %v3625
    %v3889 = vunpack.c.l.b16 %v3626
    %v3890 = vunpack.c.l.b16 %v3627
    %v3891 = vunpack.c.l.b16 %v3628
    %v3892 = vunpack.c.l.b16 %v3629
    %v3893 = vunpack.c.l.b16 %v3630
    %v3894 = vunpack.c.l.b16 %v3631
    %v3895 = vunpack.c.l.b16 %v3632
    %v3896 = vunpack.c.l.b16 %v3633
    %v3897 = vunpack.c.l.b16 %v3634
    %v3898 = vunpack.c.l.b16 %v3635
    %v3899 = vunpack.c.l.b16 %v3636
    %v3900 = vunpack.c.l.b16 %v3637
    %v3901 = vpack.c.b16 %v3774, %v3773
    %v3902 = vpack.c.b16 %v3776, %v3775
    %v3903 = vpack.c.b16 %v3778, %v3777
    %v3904 = vpack.c.b16 %v3780, %v3779
    %v3905 = vpack.c.b16 %v3782, %v3781
    %v3906 = vpack.c.b16 %v3784, %v3783
    %v3907 = vpack.c.b16 %v3786, %v3785
    %v3908 = vpack.c.b16 %v3788, %v3787
    %v3909 = vpack.c.b16 %v3790, %v3789
    %v3910 = vpack.c.b16 %v3792, %v3791
    %v3911 = vpack.c.b16 %v3794, %v3793
    %v3912 = vpack.c.b16 %v3796, %v3795
    %v3913 = vpack.c.b16 %v3798, %v3797
    %v3914 = vpack.c.b16 %v3800, %v3799
    %v3915 = vpack.c.b16 %v3802, %v3801
    %v3916 = vpack.c.b16 %v3804, %v3803
    %v3917 = vpack.c.b16 %v3806, %v3805
    %v3918 = vpack.c.b16 %v3808, %v3807
    %v3919 = vpack.c.b16 %v3810, %v3809
    %v3920 = vpack.c.b16 %v3812, %v3811
    %v3921 = vpack.c.b16 %v3814, %v3813
    %v3922 = vpack.c.b16 %v3816, %v3815
    %v3923 = vpack.c.b16 %v3818, %v3817
    %v3924 = vpack.c.b16 %v3820, %v3819
    %v3925 = vpack.c.b16 %v3822, %v3821
    %v3926 = vpack.c.b16 %v3824, %v3823
    %v3927 = vpack.c.b16 %v3826, %v3825
    %v3928 = vpack.c.b16 %v3828, %v3827
    %v3929 = vpack.c.b16 %v3830, %v3829
    %v3930 = vpack.c.b16 %v3832, %v3831
    %v3931 = vpack.c.b16 %v3834, %v3833
    %v3932 = vpack.c.b16 %v3836, %v3835
    %v3933 = vpack.c.b16 %v3838, %v3837
    %v3934 = vpack.c.b16 %v3840, %v3839
    %v3935 = vpack.c.b16 %v3842, %v3841
    %v3936 = vpack.c.b16 %v3844, %v3843
    %v3937 = vpack.c.b16 %v3846, %v3845
    %v3938 = vpack.c.b16 %v3848, %v3847
    %v3939 = vpack.c.b16 %v3850, %v3849
    %v3940 = vpack.c.b16 %v3852, %v3851
    %v3941 = vpack.c.b16 %v3854, %v3853
    %v3942 = vpack.c.b16 %v3856, %v3855
    %v3943 = vpack.c.b16 %v3858, %v3857
    %v3944 = vpack.c.b16 %v3860, %v3859
    %v3945 = vpack.c.b16 %v3862, %v3861
    %v3946 = vpack.c.b16 %v3864, %v3863
    %v3947 = vpack.c.b16 %v3866, %v3865
    %v3948 = vpack.c.b16 %v3868, %v3867
    %v3949 = vpack.c.b16 %v3870, %v3869
    %v3950 = vpack.c.b16 %v3872, %v3871
    %v3951 = vpack.c.b16 %v3874, %v3873
    %v3952 = vpack.c.b16 %v3876, %v3875
    %v3953 = vpack.c.b16 %v3878, %v3877
    %v3954 = vpack.c.b16 %v3880, %v3879
    %v3955 = vpack.c.b16 %v3882, %v3881
    %v3956 = vpack.c.b16 %v3884, %v3883
    %v3957 = vpack.c.b16 %v3886, %v3885
    %v3958 = vpack.c.b16 %v3888, %v3887
    %v3959 = vpack.c.b16 %v3890, %v3889
    %v3960 = vpack.c.b16 %v3892, %v3891
    %v3961 = vpack.c.b16 %v3894, %v3893
    %v3962 = vpack.c.b16 %v3896, %v3895
    %v3963 = vpack.c.b16 %v3898, %v3897
    %v3964 = vpack.c.b16 %v3900, %v3899
    %4029 = vmatprep.subr.bf16.mxu0 0
    %4030 = vmatpush1.bf16.msra.mxu0 %v3908
    %4031 = vmatprep.subr.bf16.mxu0 0
    %4032 = vmatpush1.bf16.msra.mxu0 %v3907
    %4033 = vmatprep.subr.bf16.mxu0 0
    %4034 = vmatpush1.bf16.msra.mxu0 %v3906
    %4035 = vmatprep.subr.bf16.mxu0 0
    %4036 = vmatpush1.bf16.msra.mxu0 %v3905
    %4037 = vmatprep.subr.bf16.mxu0 0
    %4038 = vmatpush1.bf16.msra.mxu0 %v3904
    %4039 = vmatprep.subr.bf16.mxu0 0
    %4040 = vmatpush1.bf16.msra.mxu0 %v3903
    %4041 = vmatprep.subr.bf16.mxu0 0
    %4042 = vmatpush1.bf16.msra.mxu0 %v3902
    %4043 = vmatprep.subr.bf16.mxu0 0
    %4044 = vmatpush1.bf16.msra.mxu0 %v3901
    %4045 = vmatprep.subr.bf16.mxu0 0
    %4046 = vmatpush2.bf16.msra.mxu0 %v3916
    %4047 = vmatprep.subr.bf16.mxu0 0
    %4048 = vmatpush2.bf16.msra.mxu0 %v3915
    %4049 = vmatprep.subr.bf16.mxu0 0
    %4050 = vmatpush2.bf16.msra.mxu0 %v3914
    %4051 = vmatprep.subr.bf16.mxu0 0
    %4052 = vmatpush2.bf16.msra.mxu0 %v3913
    %4053 = vmatprep.subr.bf16.mxu0 0
    %4054 = vmatpush2.bf16.msra.mxu0 %v3912
    %4055 = vmatprep.subr.bf16.mxu0 0
    %4056 = vmatpush2.bf16.msra.mxu0 %v3911
    %4057 = vmatprep.subr.bf16.mxu0 0
    %4058 = vmatpush2.bf16.msra.mxu0 %v3910
    %4059 = vmatprep.subr.bf16.mxu0 0
    %4060 = vmatpush2.bf16.msra.mxu0 %v3909
    %4061 = vmatprep.mubr.bf16.mxu0 %v3503
    %4062 = vmatmul.mubr.bf16.gmra.mxu0 %v3502
    %v4063 = vpop.f32.mrf.mxu0
    %v4064 = vadd.f32 %v3643, %v4063
    %v4065 = vpop.f32.mrf.mxu0
    %v4066 = vpop.f32.mrf.mxu0
    %v4067 = vpop.f32.mrf.mxu0
    %4068 = vdwg.mxu0
    %4069 = vmatprep.subr.bf16.mxu0 0
    %4070 = vmatpush1.bf16.msra.mxu0 %v3924
    %4071 = vmatprep.subr.bf16.mxu0 0
    %4072 = vmatpush1.bf16.msra.mxu0 %v3923
    %4073 = vmatprep.subr.bf16.mxu0 0
    %4074 = vmatpush1.bf16.msra.mxu0 %v3922
    %4075 = vmatprep.subr.bf16.mxu0 0
    %4076 = vmatpush1.bf16.msra.mxu0 %v3921
    %4077 = vmatprep.subr.bf16.mxu0 0
    %4078 = vmatpush1.bf16.msra.mxu0 %v3920
    %4079 = vmatprep.subr.bf16.mxu0 0
    %4080 = vmatpush1.bf16.msra.mxu0 %v3919
    %4081 = vmatprep.subr.bf16.mxu0 0
    %4082 = vmatpush1.bf16.msra.mxu0 %v3918
    %4083 = vmatprep.subr.bf16.mxu0 0
    %4084 = vmatpush1.bf16.msra.mxu0 %v3917
    %4085 = vmatprep.subr.bf16.mxu0 0
    %4086 = vmatpush2.bf16.msra.mxu0 %v3932
    %4087 = vmatprep.subr.bf16.mxu0 0
    %4088 = vmatpush2.bf16.msra.mxu0 %v3931
    %4089 = vmatprep.subr.bf16.mxu0 0
    %4090 = vmatpush2.bf16.msra.mxu0 %v3930
    %4091 = vmatprep.subr.bf16.mxu0 0
    %4092 = vmatpush2.bf16.msra.mxu0 %v3929
    %4093 = vmatprep.subr.bf16.mxu0 0
    %4094 = vmatpush2.bf16.msra.mxu0 %v3928
    %4095 = vmatprep.subr.bf16.mxu0 0
    %4096 = vmatpush2.bf16.msra.mxu0 %v3927
    %4097 = vmatprep.subr.bf16.mxu0 0
    %4098 = vmatpush2.bf16.msra.mxu0 %v3926
    %4099 = vmatprep.subr.bf16.mxu0 0
    %4100 = vmatpush2.bf16.msra.mxu0 %v3925
    %4101 = vmatprep.mubr.bf16.mxu0 %v3505
    %4102 = vmatmul.mubr.bf16.gmra.mxu0 %v3504
    %v4103 = vpop.f32.mrf.mxu0
    %v4104 = vadd.f32 %v4064, %v4103
    %v4105 = vpop.f32.mrf.mxu0
    %v4106 = vpop.f32.mrf.mxu0
    %v4107 = vpop.f32.mrf.mxu0
    %4108 = vdwg.mxu0
    %4109 = vmatprep.subr.bf16.mxu0 0
    %4110 = vmatpush1.bf16.msra.mxu0 %v3940
    %4111 = vmatprep.subr.bf16.mxu0 0
    %4112 = vmatpush1.bf16.msra.mxu0 %v3939
    %4113 = vmatprep.subr.bf16.mxu0 0
    %4114 = vmatpush1.bf16.msra.mxu0 %v3938
    %4115 = vmatprep.subr.bf16.mxu0 0
    %4116 = vmatpush1.bf16.msra.mxu0 %v3937
    %4117 = vmatprep.subr.bf16.mxu0 0
    %4118 = vmatpush1.bf16.msra.mxu0 %v3936
    %4119 = vmatprep.subr.bf16.mxu0 0
    %4120 = vmatpush1.bf16.msra.mxu0 %v3935
    %4121 = vmatprep.subr.bf16.mxu0 0
    %4122 = vmatpush1.bf16.msra.mxu0 %v3934
    %4123 = vmatprep.subr.bf16.mxu0 0
    %4124 = vmatpush1.bf16.msra.mxu0 %v3933
    %4125 = vmatprep.subr.bf16.mxu0 0
    %4126 = vmatpush2.bf16.msra.mxu0 %v3948
    %4127 = vmatprep.subr.bf16.mxu0 0
    %4128 = vmatpush2.bf16.msra.mxu0 %v3947
    %4129 = vmatprep.subr.bf16.mxu0 0
    %4130 = vmatpush2.bf16.msra.mxu0 %v3946
    %4131 = vmatprep.subr.bf16.mxu0 0
    %4132 = vmatpush2.bf16.msra.mxu0 %v3945
    %4133 = vmatprep.subr.bf16.mxu0 0
    %4134 = vmatpush2.bf16.msra.mxu0 %v3944
    %4135 = vmatprep.subr.bf16.mxu0 0
    %4136 = vmatpush2.bf16.msra.mxu0 %v3943
    %4137 = vmatprep.subr.bf16.mxu0 0
    %4138 = vmatpush2.bf16.msra.mxu0 %v3942
    %4139 = vmatprep.subr.bf16.mxu0 0
    %4140 = vmatpush2.bf16.msra.mxu0 %v3941
    %4141 = vmatprep.mubr.bf16.mxu0 %v3507
    %4142 = vmatmul.mubr.bf16.gmra.mxu0 %v3506
    %v4143 = vpop.f32.mrf.mxu0
    %v4144 = vadd.f32 %v4104, %v4143
    %v4145 = vpop.f32.mrf.mxu0
    %v4146 = vpop.f32.mrf.mxu0
    %v4147 = vpop.f32.mrf.mxu0
    %4148 = vdwg.mxu0
    %4149 = vmatprep.subr.bf16.mxu0 0
    %4150 = vmatpush1.bf16.msra.mxu0 %v3956
    %4151 = vmatprep.subr.bf16.mxu0 0
    %4152 = vmatpush1.bf16.msra.mxu0 %v3955
    %4153 = vmatprep.subr.bf16.mxu0 0
    %4154 = vmatpush1.bf16.msra.mxu0 %v3954
    %4155 = vmatprep.subr.bf16.mxu0 0
    %4156 = vmatpush1.bf16.msra.mxu0 %v3953
    %4157 = vmatprep.subr.bf16.mxu0 0
    %4158 = vmatpush1.bf16.msra.mxu0 %v3952
    %4159 = vmatprep.subr.bf16.mxu0 0
    %4160 = vmatpush1.bf16.msra.mxu0 %v3951
    %4161 = vmatprep.subr.bf16.mxu0 0
    %4162 = vmatpush1.bf16.msra.mxu0 %v3950
    %4163 = vmatprep.subr.bf16.mxu0 0
    %4164 = vmatpush1.bf16.msra.mxu0 %v3949
    %4165 = vmatprep.subr.bf16.mxu0 0
    %4166 = vmatpush2.bf16.msra.mxu0 %v3964
    %4167 = vmatprep.subr.bf16.mxu0 0
    %4168 = vmatpush2.bf16.msra.mxu0 %v3963
    %4169 = vmatprep.subr.bf16.mxu0 0
    %4170 = vmatpush2.bf16.msra.mxu0 %v3962
    %4171 = vmatprep.subr.bf16.mxu0 0
    %4172 = vmatpush2.bf16.msra.mxu0 %v3961
    %4173 = vmatprep.subr.bf16.mxu0 0
    %4174 = vmatpush2.bf16.msra.mxu0 %v3960
    %4175 = vmatprep.subr.bf16.mxu0 0
    %4176 = vmatpush2.bf16.msra.mxu0 %v3959
    %4177 = vmatprep.subr.bf16.mxu0 0
    %4178 = vmatpush2.bf16.msra.mxu0 %v3958
    %4179 = vmatprep.subr.bf16.mxu0 0
    %4180 = vmatpush2.bf16.msra.mxu0 %v3957
    %4181 = vmatprep.mubr.bf16.mxu0 %v3509
    %4182 = vmatmul.mubr.bf16.gmra.mxu0 %v3508
    %v4183 = vpop.f32.mrf.mxu0
    %v4184 = vadd.f32 %v4144, %v4183
    %v4185 = vpop.f32.mrf.mxu0
    %v4186 = vpop.f32.mrf.mxu0
    %v4187 = vpop.f32.mrf.mxu0
    %4188 = vdwg.mxu0
    %v4189 = vtanh.pop %v4184
    %vm4190 = vcmask 15360
    %4191 = vst.msk [vmem:[%s14] sm:$0xff] %vm4190, %v4189
    // Predicated region
    $region82: #{generator_forward.1} parent=1 // pred_check
      _
    $region83: #{generator_forward.1} parent=1 // pred_check_branch
      %4193 = sbr.rel (0) target = $region85
    $region84: #{generator_forward.1} parent=1 // pred_region
      _
    $region85: #{generator_forward.1} parent=1 // pred_fallthru
      _
    // Predicated region
    $region86: #{generator_forward.1} parent=1 // pred_check
      _
    $region87: #{generator_forward.1} parent=1 // pred_check_branch
      %4195 = sbr.rel (0) target = $region89
    $region88: #{generator_forward.1} parent=1 // pred_region
      _
    $region89: #{generator_forward.1} parent=1 // pred_fallthru
      _
    %4196 = vsyncpa [#allocation3], 1
    %4197 = vsyncpa [#allocation5], 1
    %4198 = vsyncpa [#allocation8], 1
    %4199 = vsyncpa [#allocation11], 1

</llo_original>
